<compile_context>
chip_gen: v6e
topology: v6e:2x2x1
jax: 0.10.0
libtpu: 0.0.40
codegen_flags: <defaults>
</compile_context>

<pallas_src>
import functools

import jax
import jax.numpy as jnp
import numpy as np
from jax.experimental import pallas as pl
from jax.experimental.pallas import tpu as pltpu

C_IN = 16
C_OUT = 16
KH = KW = 7
PAD = 3


def fused_conv_kernel(xrow_ref, bigw_ref, bias_ref, x3_ref, out_ref, *, N, H):
    """v6 = relu(conv1(x1) + (b1 + x2) + x3), all operands lane-dense."""
    bias = bias_ref[...]                                    # (1, W*Cout), includes +x2
    wc = bias.shape[-1]
    for n in range(N):                                      # static unroll, N tiny
        acc = jnp.zeros((H, wc), jnp.float32)
        for kh in range(KH):                                # 7 MXU matmuls / image
            slab = xrow_ref[n, kh:kh + H, :]                # (H, Wp*Cin)
            acc = acc + jnp.dot(slab, bigw_ref[kh],
                                preferred_element_type=jnp.float32)
        v2 = acc + bias                                     # conv1(x1) + b1 + x2
        out_ref[n] = jnp.maximum(v2 + x3_ref[n], 0.0).astype(out_ref.dtype)


def _fused_call(xrow, bigw, bias_row, x3row):
    N, Hp, WpC = xrow.shape
    _, H, WC = x3row.shape
    kernel = functools.partial(fused_conv_kernel, N=N, H=H)
    return pl.pallas_call(
        kernel,
        out_shape=jax.ShapeDtypeStruct((N, H, WC), jnp.float32),
        grid=(1,),                                          # single grid step
        in_specs=[
            pl.BlockSpec((N, Hp, WpC), lambda i: (0, 0, 0)),        # padded x1 rows
            pl.BlockSpec(bigw.shape, lambda i: (0, 0, 0)),          # Toeplitz weights
            pl.BlockSpec((1, WC), lambda i: (0, 0)),                # bias(+x2) row
            pl.BlockSpec((N, H, WC), lambda i: (0, 0, 0)),          # x3 rows
        ],
        out_specs=pl.BlockSpec((N, H, WC), lambda i: (0, 0, 0)),
        compiler_params=pltpu.CompilerParams(
            dimension_semantics=("arbitrary",)),
    )(xrow, bigw, bias_row, x3row)


@jax.jit
def model_forward(x1_nchw, x2, x3_nchw, w1_oihw, b1, w2_oihw, b2):
    # w2 / b2 belong to the dead conv2 path (its result never reaches the
    # output) and are intentionally unused.
    del w2_oihw, b2

    x1 = jnp.transpose(x1_nchw, (0, 2, 3, 1)).astype(jnp.float32)   # NCHW -> NHWC
    x3 = jnp.transpose(x3_nchw, (0, 2, 3, 1)).astype(jnp.float32)
    N, H, W, _ = x1.shape
    Hp, Wp = H + 2 * PAD, W + 2 * PAD

    # conv1 weight OIHW -> HWIO -> per-kh block-Toeplitz slabs (Wp*Cin, W*Cout):
    #   big[kh][(wp, ci), (w, co)] = w1[kh, wp - w, ci, co] if 0 <= wp - w < KW
    w1 = jnp.transpose(w1_oihw, (2, 3, 1, 0)).astype(jnp.float32)   # (KH,KW,Ci,Co)
    kw_off = jnp.arange(Wp)[:, None] - jnp.arange(W)[None, :]       # (Wp, W)
    valid = (kw_off >= 0) & (kw_off < KW)
    big = w1[:, jnp.clip(kw_off, 0, KW - 1)]                        # (KH,Wp,W,Ci,Co)
    big = jnp.where(valid[None, :, :, None, None], big, 0.0)
    big = big.transpose(0, 1, 3, 2, 4).reshape(KH, Wp * C_IN, W * C_OUT)

    # Fold the scalar x2 into the bias; one value per (w, cout) lane column.
    # TODO(synk): only scalar x2 is supported (the spec passes x2 = 1); a
    # tensor-valued x2 would need to be added inside the kernel instead.
    x2_scalar = jnp.asarray(x2, jnp.float32)
    assert x2_scalar.ndim == 0
    bias_row = jnp.tile(b1.astype(jnp.float32) + x2_scalar, W).reshape(1, W * C_OUT)

    # Lane-dense layouts: padded x1 as (N, Hp, Wp*C), x3 as (N, H, W*C).
    xrow = jnp.pad(x1, ((0, 0), (PAD, PAD), (PAD, PAD), (0, 0))
                   ).reshape(N, Hp, Wp * C_IN)
    x3row = x3.reshape(N, H, W * C_IN)

    v6 = _fused_call(xrow, big, bias_row, x3row)            # (N, H, W*Cout)
    return jnp.transpose(v6.reshape(N, H, W, C_OUT), (0, 3, 1, 2))  # -> NCHW


def _ref_forward(x1, x2, x3, w1, b1):
    dn = ("NCHW", "OIHW", "NCHW")
    v1 = jax.lax.conv_general_dilated(
        x1, w1, window_strides=(1, 1), padding=((PAD, PAD), (PAD, PAD)),
        dimension_numbers=dn) + b1[None, :, None, None]
    v2 = v1 + x2
    return jnp.maximum(x3 + v2, 0.0)


if __name__ == "__main__":
    key = jax.random.PRNGKey(0)
    k1, k2, k3, k4, k5, k6 = jax.random.split(key, 6)

    # Small shapes consistent with the module (channels fixed at 16 by conv defs).
    N, H, W = 2, 16, 16
    x1 = jax.random.normal(k1, (N, C_IN, H, W), jnp.float32)
    x2 = 1
    x3 = jax.random.normal(k2, (N, C_IN, H, W), jnp.float32)

    # Deterministic parameter init (PyTorch-default-like uniform bound).
    fan_in = C_IN * KH * KW
    bound = 1.0 / np.sqrt(fan_in)
    w1 = jax.random.uniform(k3, (C_OUT, C_IN, KH, KW), jnp.float32, -bound, bound)
    b1 = jax.random.uniform(k4, (C_OUT,), jnp.float32, -bound, bound)
    w2 = jax.random.uniform(k5, (C_OUT, C_IN, KH, KW), jnp.float32, -bound, bound)
    b2 = jax.random.uniform(k6, (C_OUT,), jnp.float32, -bound, bound)

    out = jax.block_until_ready(model_forward(x1, x2, x3, w1, b1, w2, b2))
    ref = jax.block_until_ready(_ref_forward(x1, float(x2), x3, w1, b1))

    assert out.shape == (N, C_OUT, H, W) and out.dtype == jnp.float32
    np.testing.assert_allclose(np.asarray(out), np.asarray(ref),
                               rtol=1e-4, atol=1e-4)

    print("KERNEL_OK")
</pallas_src>

<mosaic_0001>
module attributes {stable_mosaic.version = 11 : i64} {
  func.func @fused_conv_kernel(%arg0: i32, %arg1: memref<2x22x352xf32, #tpu.memory_space<vmem>>, %arg2: memref<7x352x256xf32, #tpu.memory_space<vmem>>, %arg3: memref<1x256xf32, #tpu.memory_space<vmem>>, %arg4: memref<2x16x256xf32, #tpu.memory_space<vmem>>, %arg5: memref<2x16x256xf32, #tpu.memory_space<vmem>>) attributes {dimension_semantics = [#tpu.dimension_semantics<arbitrary>], iteration_bounds = array<i64: 1>, scalar_prefetch = 0 : i64, scratch_operands = 0 : i64, tpu.core_type = #tpu.core_type<tc>, window_params = [{pipeline_mode = #tpu.pipeline_mode<synchronous>, transform_indices = @transform_0, window_bounds = array<i64: 2, 22, 352>}, {pipeline_mode = #tpu.pipeline_mode<synchronous>, transform_indices = @transform_1, window_bounds = array<i64: 7, 352, 256>}, {pipeline_mode = #tpu.pipeline_mode<synchronous>, transform_indices = @transform_2, window_bounds = array<i64: 1, 256>}, {pipeline_mode = #tpu.pipeline_mode<synchronous>, transform_indices = @transform_3, window_bounds = array<i64: 2, 16, 256>}, {pipeline_mode = #tpu.pipeline_mode<synchronous>, transform_indices = @transform_4, window_bounds = array<i64: 2, 16, 256>}]} {
    %c0 = arith.constant 0 : index
    %c0_0 = arith.constant 0 : index
    %0 = vector.load %arg3[%c0, %c0_0] : memref<1x256xf32, #tpu.memory_space<vmem>>, vector<1x256xf32>
    %cst = arith.constant 0.000000e+00 : f32
    %1 = vector.broadcast %cst : f32 to vector<16x256xf32>
    %c0_1 = arith.constant 0 : index
    %c0_2 = arith.constant 0 : index
    %c0_3 = arith.constant 0 : index
    %2 = vector.load %arg1[%c0_1, %c0_2, %c0_3] : memref<2x22x352xf32, #tpu.memory_space<vmem>>, vector<1x16x352xf32>
    %3 = vector.shape_cast %2 : vector<1x16x352xf32> to vector<16x352xf32>
    %c0_4 = arith.constant 0 : index
    %c0_5 = arith.constant 0 : index
    %c0_6 = arith.constant 0 : index
    %4 = vector.load %arg2[%c0_4, %c0_5, %c0_6] : memref<7x352x256xf32, #tpu.memory_space<vmem>>, vector<1x352x256xf32>
    %5 = vector.shape_cast %4 : vector<1x352x256xf32> to vector<352x256xf32>
    %cst_7 = arith.constant dense<0.000000e+00> : vector<16x256xf32>
    %6 = tpu.matmul %3, %5, %cst_7 {dimension_numbers = #tpu.dot_dimension_numbers<[1], [0], [0], [1], [0, 0, 1, 1], [], []>} : vector<16x352xf32>, vector<352x256xf32>, vector<16x256xf32> -> vector<16x256xf32>
    %7 = arith.addf %1, %6 : vector<16x256xf32>
    %c0_8 = arith.constant 0 : index
    %c1 = arith.constant 1 : index
    %c0_9 = arith.constant 0 : index
    %8 = vector.load %arg1[%c0_8, %c1, %c0_9] : memref<2x22x352xf32, #tpu.memory_space<vmem>>, vector<1x16x352xf32>
    %9 = vector.shape_cast %8 : vector<1x16x352xf32> to vector<16x352xf32>
    %c1_10 = arith.constant 1 : index
    %c0_11 = arith.constant 0 : index
    %c0_12 = arith.constant 0 : index
    %10 = vector.load %arg2[%c1_10, %c0_11, %c0_12] : memref<7x352x256xf32, #tpu.memory_space<vmem>>, vector<1x352x256xf32>
    %11 = vector.shape_cast %10 : vector<1x352x256xf32> to vector<352x256xf32>
    %cst_13 = arith.constant dense<0.000000e+00> : vector<16x256xf32>
    %12 = tpu.matmul %9, %11, %cst_13 {dimension_numbers = #tpu.dot_dimension_numbers<[1], [0], [0], [1], [0, 0, 1, 1], [], []>} : vector<16x352xf32>, vector<352x256xf32>, vector<16x256xf32> -> vector<16x256xf32>
    %13 = arith.addf %7, %12 : vector<16x256xf32>
    %c0_14 = arith.constant 0 : index
    %c2 = arith.constant 2 : index
    %c0_15 = arith.constant 0 : index
    %14 = vector.load %arg1[%c0_14, %c2, %c0_15] : memref<2x22x352xf32, #tpu.memory_space<vmem>>, vector<1x16x352xf32>
    %15 = vector.shape_cast %14 : vector<1x16x352xf32> to vector<16x352xf32>
    %c2_16 = arith.constant 2 : index
    %c0_17 = arith.constant 0 : index
    %c0_18 = arith.constant 0 : index
    %16 = vector.load %arg2[%c2_16, %c0_17, %c0_18] : memref<7x352x256xf32, #tpu.memory_space<vmem>>, vector<1x352x256xf32>
    %17 = vector.shape_cast %16 : vector<1x352x256xf32> to vector<352x256xf32>
    %cst_19 = arith.constant dense<0.000000e+00> : vector<16x256xf32>
    %18 = tpu.matmul %15, %17, %cst_19 {dimension_numbers = #tpu.dot_dimension_numbers<[1], [0], [0], [1], [0, 0, 1, 1], [], []>} : vector<16x352xf32>, vector<352x256xf32>, vector<16x256xf32> -> vector<16x256xf32>
    %19 = arith.addf %13, %18 : vector<16x256xf32>
    %c0_20 = arith.constant 0 : index
    %c3 = arith.constant 3 : index
    %c0_21 = arith.constant 0 : index
    %20 = vector.load %arg1[%c0_20, %c3, %c0_21] : memref<2x22x352xf32, #tpu.memory_space<vmem>>, vector<1x16x352xf32>
    %21 = vector.shape_cast %20 : vector<1x16x352xf32> to vector<16x352xf32>
    %c3_22 = arith.constant 3 : index
    %c0_23 = arith.constant 0 : index
    %c0_24 = arith.constant 0 : index
    %22 = vector.load %arg2[%c3_22, %c0_23, %c0_24] : memref<7x352x256xf32, #tpu.memory_space<vmem>>, vector<1x352x256xf32>
    %23 = vector.shape_cast %22 : vector<1x352x256xf32> to vector<352x256xf32>
    %cst_25 = arith.constant dense<0.000000e+00> : vector<16x256xf32>
    %24 = tpu.matmul %21, %23, %cst_25 {dimension_numbers = #tpu.dot_dimension_numbers<[1], [0], [0], [1], [0, 0, 1, 1], [], []>} : vector<16x352xf32>, vector<352x256xf32>, vector<16x256xf32> -> vector<16x256xf32>
    %25 = arith.addf %19, %24 : vector<16x256xf32>
    %c0_26 = arith.constant 0 : index
    %c4 = arith.constant 4 : index
    %c0_27 = arith.constant 0 : index
    %26 = vector.load %arg1[%c0_26, %c4, %c0_27] : memref<2x22x352xf32, #tpu.memory_space<vmem>>, vector<1x16x352xf32>
    %27 = vector.shape_cast %26 : vector<1x16x352xf32> to vector<16x352xf32>
    %c4_28 = arith.constant 4 : index
    %c0_29 = arith.constant 0 : index
    %c0_30 = arith.constant 0 : index
    %28 = vector.load %arg2[%c4_28, %c0_29, %c0_30] : memref<7x352x256xf32, #tpu.memory_space<vmem>>, vector<1x352x256xf32>
    %29 = vector.shape_cast %28 : vector<1x352x256xf32> to vector<352x256xf32>
    %cst_31 = arith.constant dense<0.000000e+00> : vector<16x256xf32>
    %30 = tpu.matmul %27, %29, %cst_31 {dimension_numbers = #tpu.dot_dimension_numbers<[1], [0], [0], [1], [0, 0, 1, 1], [], []>} : vector<16x352xf32>, vector<352x256xf32>, vector<16x256xf32> -> vector<16x256xf32>
    %31 = arith.addf %25, %30 : vector<16x256xf32>
    %c0_32 = arith.constant 0 : index
    %c5 = arith.constant 5 : index
    %c0_33 = arith.constant 0 : index
    %32 = vector.load %arg1[%c0_32, %c5, %c0_33] : memref<2x22x352xf32, #tpu.memory_space<vmem>>, vector<1x16x352xf32>
    %33 = vector.shape_cast %32 : vector<1x16x352xf32> to vector<16x352xf32>
    %c5_34 = arith.constant 5 : index
    %c0_35 = arith.constant 0 : index
    %c0_36 = arith.constant 0 : index
    %34 = vector.load %arg2[%c5_34, %c0_35, %c0_36] : memref<7x352x256xf32, #tpu.memory_space<vmem>>, vector<1x352x256xf32>
    %35 = vector.shape_cast %34 : vector<1x352x256xf32> to vector<352x256xf32>
    %cst_37 = arith.constant dense<0.000000e+00> : vector<16x256xf32>
    %36 = tpu.matmul %33, %35, %cst_37 {dimension_numbers = #tpu.dot_dimension_numbers<[1], [0], [0], [1], [0, 0, 1, 1], [], []>} : vector<16x352xf32>, vector<352x256xf32>, vector<16x256xf32> -> vector<16x256xf32>
    %37 = arith.addf %31, %36 : vector<16x256xf32>
    %c0_38 = arith.constant 0 : index
    %c6 = arith.constant 6 : index
    %c0_39 = arith.constant 0 : index
    %38 = vector.load %arg1[%c0_38, %c6, %c0_39] : memref<2x22x352xf32, #tpu.memory_space<vmem>>, vector<1x16x352xf32>
    %39 = vector.shape_cast %38 : vector<1x16x352xf32> to vector<16x352xf32>
    %c6_40 = arith.constant 6 : index
    %c0_41 = arith.constant 0 : index
    %c0_42 = arith.constant 0 : index
    %40 = vector.load %arg2[%c6_40, %c0_41, %c0_42] : memref<7x352x256xf32, #tpu.memory_space<vmem>>, vector<1x352x256xf32>
    %41 = vector.shape_cast %40 : vector<1x352x256xf32> to vector<352x256xf32>
    %cst_43 = arith.constant dense<0.000000e+00> : vector<16x256xf32>
    %42 = tpu.matmul %39, %41, %cst_43 {dimension_numbers = #tpu.dot_dimension_numbers<[1], [0], [0], [1], [0, 0, 1, 1], [], []>} : vector<16x352xf32>, vector<352x256xf32>, vector<16x256xf32> -> vector<16x256xf32>
    %43 = arith.addf %37, %42 : vector<16x256xf32>
    %44 = vector.broadcast %0 : vector<1x256xf32> to vector<16x256xf32>
    %45 = arith.addf %43, %44 : vector<16x256xf32>
    %c0_44 = arith.constant 0 : index
    %c0_45 = arith.constant 0 : index
    %c0_46 = arith.constant 0 : index
    %46 = vector.load %arg4[%c0_44, %c0_45, %c0_46] : memref<2x16x256xf32, #tpu.memory_space<vmem>>, vector<1x16x256xf32>
    %47 = vector.shape_cast %46 : vector<1x16x256xf32> to vector<16x256xf32>
    %48 = arith.addf %45, %47 : vector<16x256xf32>
    %cst_47 = arith.constant 0.000000e+00 : f32
    %49 = vector.broadcast %cst_47 : f32 to vector<16x256xf32>
    %50 = arith.maximumf %48, %49 : vector<16x256xf32>
    %c0_48 = arith.constant 0 : index
    %c0_49 = arith.constant 0 : index
    %c0_50 = arith.constant 0 : index
    %51 = vector.load %arg5[%c0_48, %c0_49, %c0_50] : memref<2x16x256xf32, #tpu.memory_space<vmem>>, vector<1x16x256xf32>
    %52 = vector.shape_cast %51 : vector<1x16x256xf32> to vector<16x256xf32>
    %53 = vector.shape_cast %50 : vector<16x256xf32> to vector<1x16x256xf32>
    tpu.vector_store %arg5[%c0_48, %c0_49, %c0_50], %53 {strides = array<i32>} : memref<2x16x256xf32, #tpu.memory_space<vmem>>, vector<1x16x256xf32>,
    %cst_51 = arith.constant 0.000000e+00 : f32
    %54 = vector.broadcast %cst_51 : f32 to vector<16x256xf32>
    %c1_52 = arith.constant 1 : index
    %c0_53 = arith.constant 0 : index
    %c0_54 = arith.constant 0 : index
    %55 = vector.load %arg1[%c1_52, %c0_53, %c0_54] : memref<2x22x352xf32, #tpu.memory_space<vmem>>, vector<1x16x352xf32>
    %56 = vector.shape_cast %55 : vector<1x16x352xf32> to vector<16x352xf32>
    %c0_55 = arith.constant 0 : index
    %c0_56 = arith.constant 0 : index
    %c0_57 = arith.constant 0 : index
    %57 = vector.load %arg2[%c0_55, %c0_56, %c0_57] : memref<7x352x256xf32, #tpu.memory_space<vmem>>, vector<1x352x256xf32>
    %58 = vector.shape_cast %57 : vector<1x352x256xf32> to vector<352x256xf32>
    %cst_58 = arith.constant dense<0.000000e+00> : vector<16x256xf32>
    %59 = tpu.matmul %56, %58, %cst_58 {dimension_numbers = #tpu.dot_dimension_numbers<[1], [0], [0], [1], [0, 0, 1, 1], [], []>} : vector<16x352xf32>, vector<352x256xf32>, vector<16x256xf32> -> vector<16x256xf32>
    %60 = arith.addf %54, %59 : vector<16x256xf32>
    %c1_59 = arith.constant 1 : index
    %c1_60 = arith.constant 1 : index
    %c0_61 = arith.constant 0 : index
    %61 = vector.load %arg1[%c1_59, %c1_60, %c0_61] : memref<2x22x352xf32, #tpu.memory_space<vmem>>, vector<1x16x352xf32>
    %62 = vector.shape_cast %61 : vector<1x16x352xf32> to vector<16x352xf32>
    %c1_62 = arith.constant 1 : index
    %c0_63 = arith.constant 0 : index
    %c0_64 = arith.constant 0 : index
    %63 = vector.load %arg2[%c1_62, %c0_63, %c0_64] : memref<7x352x256xf32, #tpu.memory_space<vmem>>, vector<1x352x256xf32>
    %64 = vector.shape_cast %63 : vector<1x352x256xf32> to vector<352x256xf32>
    %cst_65 = arith.constant dense<0.000000e+00> : vector<16x256xf32>
    %65 = tpu.matmul %62, %64, %cst_65 {dimension_numbers = #tpu.dot_dimension_numbers<[1], [0], [0], [1], [0, 0, 1, 1], [], []>} : vector<16x352xf32>, vector<352x256xf32>, vector<16x256xf32> -> vector<16x256xf32>
    %66 = arith.addf %60, %65 : vector<16x256xf32>
    %c1_66 = arith.constant 1 : index
    %c2_67 = arith.constant 2 : index
    %c0_68 = arith.constant 0 : index
    %67 = vector.load %arg1[%c1_66, %c2_67, %c0_68] : memref<2x22x352xf32, #tpu.memory_space<vmem>>, vector<1x16x352xf32>
    %68 = vector.shape_cast %67 : vector<1x16x352xf32> to vector<16x352xf32>
    %c2_69 = arith.constant 2 : index
    %c0_70 = arith.constant 0 : index
    %c0_71 = arith.constant 0 : index
    %69 = vector.load %arg2[%c2_69, %c0_70, %c0_71] : memref<7x352x256xf32, #tpu.memory_space<vmem>>, vector<1x352x256xf32>
    %70 = vector.shape_cast %69 : vector<1x352x256xf32> to vector<352x256xf32>
    %cst_72 = arith.constant dense<0.000000e+00> : vector<16x256xf32>
    %71 = tpu.matmul %68, %70, %cst_72 {dimension_numbers = #tpu.dot_dimension_numbers<[1], [0], [0], [1], [0, 0, 1, 1], [], []>} : vector<16x352xf32>, vector<352x256xf32>, vector<16x256xf32> -> vector<16x256xf32>
    %72 = arith.addf %66, %71 : vector<16x256xf32>
    %c1_73 = arith.constant 1 : index
    %c3_74 = arith.constant 3 : index
    %c0_75 = arith.constant 0 : index
    %73 = vector.load %arg1[%c1_73, %c3_74, %c0_75] : memref<2x22x352xf32, #tpu.memory_space<vmem>>, vector<1x16x352xf32>
    %74 = vector.shape_cast %73 : vector<1x16x352xf32> to vector<16x352xf32>
    %c3_76 = arith.constant 3 : index
    %c0_77 = arith.constant 0 : index
    %c0_78 = arith.constant 0 : index
    %75 = vector.load %arg2[%c3_76, %c0_77, %c0_78] : memref<7x352x256xf32, #tpu.memory_space<vmem>>, vector<1x352x256xf32>
    %76 = vector.shape_cast %75 : vector<1x352x256xf32> to vector<352x256xf32>
    %cst_79 = arith.constant dense<0.000000e+00> : vector<16x256xf32>
    %77 = tpu.matmul %74, %76, %cst_79 {dimension_numbers = #tpu.dot_dimension_numbers<[1], [0], [0], [1], [0, 0, 1, 1], [], []>} : vector<16x352xf32>, vector<352x256xf32>, vector<16x256xf32> -> vector<16x256xf32>
    %78 = arith.addf %72, %77 : vector<16x256xf32>
    %c1_80 = arith.constant 1 : index
    %c4_81 = arith.constant 4 : index
    %c0_82 = arith.constant 0 : index
    %79 = vector.load %arg1[%c1_80, %c4_81, %c0_82] : memref<2x22x352xf32, #tpu.memory_space<vmem>>, vector<1x16x352xf32>
    %80 = vector.shape_cast %79 : vector<1x16x352xf32> to vector<16x352xf32>
    %c4_83 = arith.constant 4 : index
    %c0_84 = arith.constant 0 : index
    %c0_85 = arith.constant 0 : index
    %81 = vector.load %arg2[%c4_83, %c0_84, %c0_85] : memref<7x352x256xf32, #tpu.memory_space<vmem>>, vector<1x352x256xf32>
    %82 = vector.shape_cast %81 : vector<1x352x256xf32> to vector<352x256xf32>
    %cst_86 = arith.constant dense<0.000000e+00> : vector<16x256xf32>
    %83 = tpu.matmul %80, %82, %cst_86 {dimension_numbers = #tpu.dot_dimension_numbers<[1], [0], [0], [1], [0, 0, 1, 1], [], []>} : vector<16x352xf32>, vector<352x256xf32>, vector<16x256xf32> -> vector<16x256xf32>
    %84 = arith.addf %78, %83 : vector<16x256xf32>
    %c1_87 = arith.constant 1 : index
    %c5_88 = arith.constant 5 : index
    %c0_89 = arith.constant 0 : index
    %85 = vector.load %arg1[%c1_87, %c5_88, %c0_89] : memref<2x22x352xf32, #tpu.memory_space<vmem>>, vector<1x16x352xf32>
    %86 = vector.shape_cast %85 : vector<1x16x352xf32> to vector<16x352xf32>
    %c5_90 = arith.constant 5 : index
    %c0_91 = arith.constant 0 : index
    %c0_92 = arith.constant 0 : index
    %87 = vector.load %arg2[%c5_90, %c0_91, %c0_92] : memref<7x352x256xf32, #tpu.memory_space<vmem>>, vector<1x352x256xf32>
    %88 = vector.shape_cast %87 : vector<1x352x256xf32> to vector<352x256xf32>
    %cst_93 = arith.constant dense<0.000000e+00> : vector<16x256xf32>
    %89 = tpu.matmul %86, %88, %cst_93 {dimension_numbers = #tpu.dot_dimension_numbers<[1], [0], [0], [1], [0, 0, 1, 1], [], []>} : vector<16x352xf32>, vector<352x256xf32>, vector<16x256xf32> -> vector<16x256xf32>
    %90 = arith.addf %84, %89 : vector<16x256xf32>
    %c1_94 = arith.constant 1 : index
    %c6_95 = arith.constant 6 : index
    %c0_96 = arith.constant 0 : index
    %91 = vector.load %arg1[%c1_94, %c6_95, %c0_96] : memref<2x22x352xf32, #tpu.memory_space<vmem>>, vector<1x16x352xf32>
    %92 = vector.shape_cast %91 : vector<1x16x352xf32> to vector<16x352xf32>
    %c6_97 = arith.constant 6 : index
    %c0_98 = arith.constant 0 : index
    %c0_99 = arith.constant 0 : index
    %93 = vector.load %arg2[%c6_97, %c0_98, %c0_99] : memref<7x352x256xf32, #tpu.memory_space<vmem>>, vector<1x352x256xf32>
    %94 = vector.shape_cast %93 : vector<1x352x256xf32> to vector<352x256xf32>
    %cst_100 = arith.constant dense<0.000000e+00> : vector<16x256xf32>
    %95 = tpu.matmul %92, %94, %cst_100 {dimension_numbers = #tpu.dot_dimension_numbers<[1], [0], [0], [1], [0, 0, 1, 1], [], []>} : vector<16x352xf32>, vector<352x256xf32>, vector<16x256xf32> -> vector<16x256xf32>
    %96 = arith.addf %90, %95 : vector<16x256xf32>
    %97 = vector.broadcast %0 : vector<1x256xf32> to vector<16x256xf32>
    %98 = arith.addf %96, %97 : vector<16x256xf32>
    %c1_101 = arith.constant 1 : index
    %c0_102 = arith.constant 0 : index
    %c0_103 = arith.constant 0 : index
    %99 = vector.load %arg4[%c1_101, %c0_102, %c0_103] : memref<2x16x256xf32, #tpu.memory_space<vmem>>, vector<1x16x256xf32>
    %100 = vector.shape_cast %99 : vector<1x16x256xf32> to vector<16x256xf32>
    %101 = arith.addf %98, %100 : vector<16x256xf32>
    %cst_104 = arith.constant 0.000000e+00 : f32
    %102 = vector.broadcast %cst_104 : f32 to vector<16x256xf32>
    %103 = arith.maximumf %101, %102 : vector<16x256xf32>
    %c1_105 = arith.constant 1 : index
    %c0_106 = arith.constant 0 : index
    %c0_107 = arith.constant 0 : index
    %104 = vector.load %arg5[%c1_105, %c0_106, %c0_107] : memref<2x16x256xf32, #tpu.memory_space<vmem>>, vector<1x16x256xf32>
    %105 = vector.shape_cast %104 : vector<1x16x256xf32> to vector<16x256xf32>
    %106 = vector.shape_cast %103 : vector<16x256xf32> to vector<1x16x256xf32>
    tpu.vector_store %arg5[%c1_105, %c0_106, %c0_107], %106 {strides = array<i32>} : memref<2x16x256xf32, #tpu.memory_space<vmem>>, vector<1x16x256xf32>,
    return
  }
  func.func @transform_0(%arg0: i32) -> (i32, i32, i32) {
    %c0_i32 = arith.constant 0 : i32
    %c0_i32_0 = arith.constant 0 : i32
    %c0_i32_1 = arith.constant 0 : i32
    %c0_i32_2 = arith.constant 0 : i32
    return %c0_i32, %c0_i32_0, %c0_i32_1 : i32, i32, i32
  }
  func.func @transform_1(%arg0: i32) -> (i32, i32, i32) {
    %c0_i32 = arith.constant 0 : i32
    %c0_i32_0 = arith.constant 0 : i32
    %c0_i32_1 = arith.constant 0 : i32
    %c0_i32_2 = arith.constant 0 : i32
    return %c0_i32, %c0_i32_0, %c0_i32_1 : i32, i32, i32
  }
  func.func @transform_2(%arg0: i32) -> (i32, i32) {
    %c0_i32 = arith.constant 0 : i32
    %c0_i32_0 = arith.constant 0 : i32
    %c0_i32_1 = arith.constant 0 : i32
    return %c0_i32, %c0_i32_0 : i32, i32
  }
  func.func @transform_3(%arg0: i32) -> (i32, i32, i32) {
    %c0_i32 = arith.constant 0 : i32
    %c0_i32_0 = arith.constant 0 : i32
    %c0_i32_1 = arith.constant 0 : i32
    %c0_i32_2 = arith.constant 0 : i32
    return %c0_i32, %c0_i32_0, %c0_i32_1 : i32, i32, i32
  }
  func.func @transform_4(%arg0: i32) -> (i32, i32, i32) {
    %c0_i32 = arith.constant 0 : i32
    %c0_i32_0 = arith.constant 0 : i32
    %c0_i32_1 = arith.constant 0 : i32
    %c0_i32_2 = arith.constant 0 : i32
    return %c0_i32, %c0_i32_0, %c0_i32_1 : i32, i32, i32
  }
}

</mosaic_0001>

<llo_original>
// kernel: tile.8
$region0: #{tile.8}
  #allocation0 [shape = 's32[1]{0}', space=sflag, size = 0x4, scoped, tag = 'scoped memory for tile.8']
  %s0 = inlined_call_operand.vmem [shape: f32[16], index: 0, kind: input, shape index: {}]
  %s1 = inlined_call_operand.vmem [shape: f32[16,16], index: 1, kind: output, shape index: {}]
  // Predicated region
  $region2: #{tile.8} parent=0 // pred_check
    _
  $region3: #{tile.8} parent=0 // pred_check_branch
    %3 = sbr.rel (0) target = $region5
  $region4: #{tile.8} parent=0 // pred_region
    _
  $region5: #{tile.8} parent=0 // pred_fallthru
    _
  %v4 = vld [vmem:[%s0] ss:$0 sm:$0xff]
  %5 = vst [vmem:[%s1] sm:$0xff] %v4
  %s6 = scalar_lea.vmem %s1, 8
  %7 = vst [vmem:[%s6] sm:$0xff] %v4

// kernel: tile.9
$region0: #{tile.9}
  %s0 = inlined_call_operand.vmem [shape: f32[16,16], index: 0, kind: input, shape index: {}]
  %s1 = inlined_call_operand.vmem [shape: f32[1,256], index: 1, kind: output, shape index: {}]
  $region1: #{tile.9} parent=0
    #allocation0 [shape = 'u8[8192]{0}', space=vmem, size = 0x2000, scoped, tag = 'scoped mem for output reshape']
    %s2 = smov 3
    %v3 = vld [vmem:[%s0] ss:$8 sm:%s2]
    %vm4 = vcmask 130048
    %5 = vst.msk [vmem:[#allocation0] ss:$8 sm:$0x3] %vm4, %v3
    %s6 = scalar_lea.vmem %s0, 7
    %s7 = smov 3
    %v8 = vld [vmem:[%s6] ss:$8 sm:%s7]
    %9 = vrot.lane.b32.xlu0 %v8, 112
    %v10 = vpop.permute.xlu0 %9
    %vm11 = vcmask 1048448
    %12 = vst.msk [vmem:[#allocation0] ss:$8 sm:$0x3] %vm11, %v10
    %s13 = scalar_lea.vmem %s0, 6
    %s14 = smov 3
    %v15 = vld [vmem:[%s13] ss:$8 sm:%s14]
    %16 = vrot.lane.b32.xlu0 %v15, 96
    %v17 = vpop.permute.xlu0 %16
    %vm18 = vcmask 917248
    %19 = vst.msk [vmem:[#allocation0] ss:$8 sm:$0x3] %vm18, %v17
    %s20 = scalar_lea.vmem %s0, 5
    %s21 = smov 3
    %v22 = vld [vmem:[%s20] ss:$8 sm:%s21]
    %23 = vrot.lane.b32.xlu0 %v22, 80
    %v24 = vpop.permute.xlu0 %23
    %vm25 = vcmask 786048
    %26 = vst.msk [vmem:[#allocation0] ss:$8 sm:$0x3] %vm25, %v24
    %s27 = scalar_lea.vmem %s0, 4
    %s28 = smov 3
    %v29 = vld [vmem:[%s27] ss:$8 sm:%s28]
    %30 = vrot.lane.b32.xlu0 %v29, 64
    %v31 = vpop.permute.xlu0 %30
    %vm32 = vcmask 654848
    %33 = vst.msk [vmem:[#allocation0] ss:$8 sm:$0x3] %vm32, %v31
    %s34 = scalar_lea.vmem %s0, 3
    %s35 = smov 3
    %v36 = vld [vmem:[%s34] ss:$8 sm:%s35]
    %37 = vrot.lane.b32.xlu0 %v36, 48
    %v38 = vpop.permute.xlu0 %37
    %vm39 = vcmask 523648
    %40 = vst.msk [vmem:[#allocation0] ss:$8 sm:$0x3] %vm39, %v38
    %s41 = scalar_lea.vmem %s0, 2
    %s42 = smov 3
    %v43 = vld [vmem:[%s41] ss:$8 sm:%s42]
    %44 = vrot.lane.b32.xlu0 %v43, 32
    %v45 = vpop.permute.xlu0 %44
    %vm46 = vcmask 392448
    %47 = vst.msk [vmem:[#allocation0] ss:$8 sm:$0x3] %vm46, %v45
    %s48 = scalar_lea.vmem %s0, 1
    %s49 = smov 3
    %v50 = vld [vmem:[%s48] ss:$8 sm:%s49]
    %51 = vrot.lane.b32.xlu0 %v50, 16
    %v52 = vpop.permute.xlu0 %51
    %vm53 = vcmask 261248
    %54 = vst.msk [vmem:[#allocation0] ss:$8 sm:$0x3] %vm53, %v52
    %s56 = sshll.u32 1, 1
    %s57 = ssub.s32 %s56, 1
    %v59 = vld [vmem:[#allocation0] sm:%s57]
    %s60 = sshll.u32 1, 1
    %s61 = ssub.s32 %s60, 1
    %62 = vst [vmem:[%s1] sm:%s61] %v59
    %s63 = scalar_lea.vmem [#allocation0], 8
    %v64 = vld [vmem:[%s63] sm:%s57]
    %s65 = sshll.u32 1, 1
    %s66 = ssub.s32 %s65, 1
    %s67 = scalar_lea.vmem %s1, 1
    %68 = vst [vmem:[%s67] sm:%s66] %v64

// kernel: model_forward.1
$region0: #{model_forward.1}
  #allocation0 [shape = 'u32[]', space=smem, size = 0x4, offset = 0x4, fixed_abs, tag = 'smem constant byte address 0x4 - core index']
  #allocation1 [shape = 'u32[144,128]{1,0:T(1,128)}', space=vmem, size = 0x12000, scoped, tag = 'internal scratch']
  %s0 = inlined_call_operand.vmem [shape: f32[2,22,352], index: 0, kind: input, shape index: {}]
  %s1 = inlined_call_operand.vmem [shape: f32[7,352,256], index: 1, kind: input, shape index: {}]
  %s2 = inlined_call_operand.vmem [shape: f32[1,256], index: 2, kind: input, shape index: {}]
  %s3 = inlined_call_operand.vmem [shape: f32[2,16,256], index: 3, kind: input, shape index: {}]
  %s4 = inlined_call_operand.vmem [shape: f32[2,16,256], index: 4, kind: output, shape index: {}]
  %s5 = sld [smem:[#allocation0]]
  $region26: #{model_forward.1} parent=0
    _
  %s7 = ssub.s32 1, %s5
  %s8 = scalar_select 0, %s7, %s5
  // Predicated region
  $region2: #{model_forward.1} parent=0 // pred_check
    _
  $region3: #{model_forward.1} parent=0 // pred_check_branch
    %10 = sbr.rel (0) target = $region5
  $region4: #{model_forward.1} parent=0 // pred_region
    _
  $region5: #{model_forward.1} parent=0 // pred_fallthru
    _
  // Predicated region
  $region6: #{model_forward.1} parent=0 // pred_check
    _
  $region7: #{model_forward.1} parent=0 // pred_check_branch
    %12 = sbr.rel (0) target = $region9
  $region8: #{model_forward.1} parent=0 // pred_region
    _
  $region9: #{model_forward.1} parent=0 // pred_fallthru
    _
  // Predicated region
  $region10: #{model_forward.1} parent=0 // pred_check
    _
  $region11: #{model_forward.1} parent=0 // pred_check_branch
    %14 = sbr.rel (0) target = $region13
  $region12: #{model_forward.1} parent=0 // pred_region
    _
  $region13: #{model_forward.1} parent=0 // pred_fallthru
    _
  // Predicated region
  $region14: #{model_forward.1} parent=0 // pred_check
    _
  $region15: #{model_forward.1} parent=0 // pred_check_branch
    %16 = sbr.rel (0) target = $region17
  $region16: #{model_forward.1} parent=0 // pred_region
    _
  $region17: #{model_forward.1} parent=0 // pred_fallthru
    _
  %v17 = vld [vmem:[%s2] sm:$0x3]
  %v18 = vld [vmem:[%s0] sm:$0xff]
  %v19 = vld [vmem:[%s0 + $0x8] sm:$0xff]
  %v20 = vld [vmem:[%s0 + $0x10] sm:$0xff]
  %v21 = vld [vmem:[%s0 + $0x18] sm:$0xff]
  %v22 = vld [vmem:[%s0 + $0x20] sm:$0xff]
  %v23 = vld [vmem:[%s0 + $0x28] sm:$0xff]
  %v24 = vld [vmem:[%s1] sm:$0xff]
  %v25 = vld [vmem:[%s1 + $0x8] sm:$0xff]
  %v26 = vld [vmem:[%s1 + $0x10] sm:$0xff]
  %v27 = vld [vmem:[%s1 + $0x18] sm:$0xff]
  %v28 = vld [vmem:[%s1 + $0x20] sm:$0xff]
  %v29 = vld [vmem:[%s1 + $0x28] sm:$0xff]
  %v30 = vld [vmem:[%s1 + $0x30] sm:$0xff]
  %v31 = vld [vmem:[%s1 + $0x38] sm:$0xff]
  %v32 = vld [vmem:[%s1 + $0x40] sm:$0xff]
  %v33 = vld [vmem:[%s1 + $0x48] sm:$0xff]
  %v34 = vld [vmem:[%s1 + $0x50] sm:$0xff]
  %v35 = vld [vmem:[%s1 + $0x58] sm:$0xff]
  %v36 = vld [vmem:[%s1 + $0x60] sm:$0xff]
  %v37 = vld [vmem:[%s1 + $0x68] sm:$0xff]
  %v38 = vld [vmem:[%s1 + $0x70] sm:$0xff]
  %v39 = vld [vmem:[%s1 + $0x78] sm:$0xff]
  %v40 = vld [vmem:[%s1 + $0x80] sm:$0xff]
  %v41 = vld [vmem:[%s1 + $0x88] sm:$0xff]
  %v42 = vld [vmem:[%s1 + $0x90] sm:$0xff]
  %v43 = vld [vmem:[%s1 + $0x98] sm:$0xff]
  %v44 = vld [vmem:[%s1 + $0xa0] sm:$0xff]
  %v45 = vld [vmem:[%s1 + $0xa8] sm:$0xff]
  %v46 = vld [vmem:[%s1 + $0xb0] sm:$0xff]
  %v47 = vld [vmem:[%s1 + $0xb8] sm:$0xff]
  %v48 = vld [vmem:[%s1 + $0xc0] sm:$0xff]
  %v49 = vld [vmem:[%s1 + $0xc8] sm:$0xff]
  %v50 = vld [vmem:[%s1 + $0xd0] sm:$0xff]
  %v51 = vld [vmem:[%s1 + $0xd8] sm:$0xff]
  %v52 = vld [vmem:[%s1 + $0xe0] sm:$0xff]
  %v53 = vld [vmem:[%s1 + $0xe8] sm:$0xff]
  %v54 = vld [vmem:[%s1 + $0xf0] sm:$0xff]
  %v55 = vld [vmem:[%s1 + $0xf8] sm:$0xff]
  %v56 = vld [vmem:[%s1 + $0x100] sm:$0xff]
  %v57 = vld [vmem:[%s1 + $0x108] sm:$0xff]
  %v58 = vld [vmem:[%s1 + $0x110] sm:$0xff]
  %v59 = vld [vmem:[%s1 + $0x118] sm:$0xff]
  %v60 = vld [vmem:[%s1 + $0x120] sm:$0xff]
  %v61 = vld [vmem:[%s1 + $0x128] sm:$0xff]
  %v62 = vld [vmem:[%s1 + $0x130] sm:$0xff]
  %v63 = vld [vmem:[%s1 + $0x138] sm:$0xff]
  %v64 = vld [vmem:[%s1 + $0x140] sm:$0xff]
  %v65 = vld [vmem:[%s1 + $0x148] sm:$0xff]
  %v66 = vld [vmem:[%s1 + $0x150] sm:$0xff]
  %v67 = vld [vmem:[%s1 + $0x158] sm:$0xff]
  %v68 = vld [vmem:[%s1 + $0x160] sm:$0xff]
  %v69 = vld [vmem:[%s1 + $0x168] sm:$0xff]
  %v70 = vld [vmem:[%s1 + $0x170] sm:$0xff]
  %v71 = vld [vmem:[%s1 + $0x178] sm:$0xff]
  %v72 = vld [vmem:[%s1 + $0x180] sm:$0xff]
  %v73 = vld [vmem:[%s1 + $0x188] sm:$0xff]
  %v74 = vld [vmem:[%s1 + $0x190] sm:$0xff]
  %v75 = vld [vmem:[%s1 + $0x198] sm:$0xff]
  %v76 = vld [vmem:[%s1 + $0x1a0] sm:$0xff]
  %v77 = vld [vmem:[%s1 + $0x1a8] sm:$0xff]
  %v78 = vld [vmem:[%s1 + $0x1b0] sm:$0xff]
  %v79 = vld [vmem:[%s1 + $0x1b8] sm:$0xff]
  %v80 = vld [vmem:[%s1 + $0x1c0] sm:$0xff]
  %v81 = vld [vmem:[%s1 + $0x1c8] sm:$0xff]
  %v82 = vld [vmem:[%s1 + $0x1d0] sm:$0xff]
  %v83 = vld [vmem:[%s1 + $0x1d8] sm:$0xff]
  %v84 = vld [vmem:[%s1 + $0x1e0] sm:$0xff]
  %v85 = vld [vmem:[%s1 + $0x1e8] sm:$0xff]
  %v86 = vld [vmem:[%s1 + $0x1f0] sm:$0xff]
  %v87 = vld [vmem:[%s1 + $0x1f8] sm:$0xff]
  %v88 = vld [vmem:[%s1 + $0x200] sm:$0xff]
  %v89 = vld [vmem:[%s1 + $0x208] sm:$0xff]
  %v90 = vld [vmem:[%s1 + $0x210] sm:$0xff]
  %v91 = vld [vmem:[%s1 + $0x218] sm:$0xff]
  %v92 = vld [vmem:[%s1 + $0x220] sm:$0xff]
  %v93 = vld [vmem:[%s1 + $0x228] sm:$0xff]
  %v94 = vld [vmem:[%s1 + $0x230] sm:$0xff]
  %v95 = vld [vmem:[%s1 + $0x238] sm:$0xff]
  %v96 = vld [vmem:[%s1 + $0x240] sm:$0xff]
  %v97 = vld [vmem:[%s1 + $0x248] sm:$0xff]
  %v98 = vld [vmem:[%s1 + $0x250] sm:$0xff]
  %v99 = vld [vmem:[%s1 + $0x258] sm:$0xff]
  %v100 = vld [vmem:[%s1 + $0x260] sm:$0xff]
  %v101 = vld [vmem:[%s1 + $0x268] sm:$0xff]
  %v102 = vld [vmem:[%s1 + $0x270] sm:$0xff]
  %v103 = vld [vmem:[%s1 + $0x278] sm:$0xff]
  %v104 = vld [vmem:[%s1 + $0x280] sm:$0xff]
  %v105 = vld [vmem:[%s1 + $0x288] sm:$0xff]
  %v106 = vld [vmem:[%s1 + $0x290] sm:$0xff]
  %v107 = vld [vmem:[%s1 + $0x298] sm:$0xff]
  %v108 = vld [vmem:[%s1 + $0x2a0] sm:$0xff]
  %v109 = vld [vmem:[%s1 + $0x2a8] sm:$0xff]
  %v110 = vld [vmem:[%s1 + $0x2b0] sm:$0xff]
  %v111 = vld [vmem:[%s1 + $0x2b8] sm:$0xff]
  %v112 = vld [vmem:[%s0] sm:$0xfe]
  %v113 = vld [vmem:[%s0 + $0x8] sm:$0xfe]
  %v114 = vld [vmem:[%s0 + $0x10] sm:$0xfe]
  %v115 = vld [vmem:[%s0 + $0x30] sm:$0x1]
  %v116 = vld [vmem:[%s0 + $0x38] sm:$0x1]
  %v117 = vld [vmem:[%s0 + $0x40] sm:$0x1]
  %s118 = scalar_lea.vmem %s1, 704
  %v119 = vld [vmem:[%s118] sm:$0xff]
  %v120 = vld [vmem:[%s118 + $0x8] sm:$0xff]
  %v121 = vld [vmem:[%s118 + $0x10] sm:$0xff]
  %v122 = vld [vmem:[%s118 + $0x18] sm:$0xff]
  %v123 = vld [vmem:[%s118 + $0x20] sm:$0xff]
  %v124 = vld [vmem:[%s118 + $0x28] sm:$0xff]
  %v125 = vld [vmem:[%s118 + $0x30] sm:$0xff]
  %v126 = vld [vmem:[%s118 + $0x38] sm:$0xff]
  %v127 = vld [vmem:[%s118 + $0x40] sm:$0xff]
  %v128 = vld [vmem:[%s118 + $0x48] sm:$0xff]
  %v129 = vld [vmem:[%s118 + $0x50] sm:$0xff]
  %v130 = vld [vmem:[%s118 + $0x58] sm:$0xff]
  %v131 = vld [vmem:[%s118 + $0x60] sm:$0xff]
  %v132 = vld [vmem:[%s118 + $0x68] sm:$0xff]
  %v133 = vld [vmem:[%s118 + $0x70] sm:$0xff]
  %v134 = vld [vmem:[%s118 + $0x78] sm:$0xff]
  %v135 = vld [vmem:[%s118 + $0x80] sm:$0xff]
  %v136 = vld [vmem:[%s118 + $0x88] sm:$0xff]
  %v137 = vld [vmem:[%s118 + $0x90] sm:$0xff]
  %v138 = vld [vmem:[%s118 + $0x98] sm:$0xff]
  %v139 = vld [vmem:[%s118 + $0xa0] sm:$0xff]
  %v140 = vld [vmem:[%s118 + $0xa8] sm:$0xff]
  %v141 = vld [vmem:[%s118 + $0xb0] sm:$0xff]
  %v142 = vld [vmem:[%s118 + $0xb8] sm:$0xff]
  %v143 = vld [vmem:[%s118 + $0xc0] sm:$0xff]
  %v144 = vld [vmem:[%s118 + $0xc8] sm:$0xff]
  %v145 = vld [vmem:[%s118 + $0xd0] sm:$0xff]
  %v146 = vld [vmem:[%s118 + $0xd8] sm:$0xff]
  %v147 = vld [vmem:[%s118 + $0xe0] sm:$0xff]
  %v148 = vld [vmem:[%s118 + $0xe8] sm:$0xff]
  %v149 = vld [vmem:[%s118 + $0xf0] sm:$0xff]
  %v150 = vld [vmem:[%s118 + $0xf8] sm:$0xff]
  %v151 = vld [vmem:[%s118 + $0x100] sm:$0xff]
  %v152 = vld [vmem:[%s118 + $0x108] sm:$0xff]
  %v153 = vld [vmem:[%s118 + $0x110] sm:$0xff]
  %v154 = vld [vmem:[%s118 + $0x118] sm:$0xff]
  %v155 = vld [vmem:[%s118 + $0x120] sm:$0xff]
  %v156 = vld [vmem:[%s118 + $0x128] sm:$0xff]
  %v157 = vld [vmem:[%s118 + $0x130] sm:$0xff]
  %v158 = vld [vmem:[%s118 + $0x138] sm:$0xff]
  %v159 = vld [vmem:[%s118 + $0x140] sm:$0xff]
  %v160 = vld [vmem:[%s118 + $0x148] sm:$0xff]
  %v161 = vld [vmem:[%s118 + $0x150] sm:$0xff]
  %v162 = vld [vmem:[%s118 + $0x158] sm:$0xff]
  %v163 = vld [vmem:[%s118 + $0x160] sm:$0xff]
  %v164 = vld [vmem:[%s118 + $0x168] sm:$0xff]
  %v165 = vld [vmem:[%s118 + $0x170] sm:$0xff]
  %v166 = vld [vmem:[%s118 + $0x178] sm:$0xff]
  %v167 = vld [vmem:[%s118 + $0x180] sm:$0xff]
  %v168 = vld [vmem:[%s118 + $0x188] sm:$0xff]
  %v169 = vld [vmem:[%s118 + $0x190] sm:$0xff]
  %v170 = vld [vmem:[%s118 + $0x198] sm:$0xff]
  %v171 = vld [vmem:[%s118 + $0x1a0] sm:$0xff]
  %v172 = vld [vmem:[%s118 + $0x1a8] sm:$0xff]
  %v173 = vld [vmem:[%s118 + $0x1b0] sm:$0xff]
  %v174 = vld [vmem:[%s118 + $0x1b8] sm:$0xff]
  %v175 = vld [vmem:[%s118 + $0x1c0] sm:$0xff]
  %v176 = vld [vmem:[%s118 + $0x1c8] sm:$0xff]
  %v177 = vld [vmem:[%s118 + $0x1d0] sm:$0xff]
  %v178 = vld [vmem:[%s118 + $0x1d8] sm:$0xff]
  %v179 = vld [vmem:[%s118 + $0x1e0] sm:$0xff]
  %v180 = vld [vmem:[%s118 + $0x1e8] sm:$0xff]
  %v181 = vld [vmem:[%s118 + $0x1f0] sm:$0xff]
  %v182 = vld [vmem:[%s118 + $0x1f8] sm:$0xff]
  %v183 = vld [vmem:[%s118 + $0x200] sm:$0xff]
  %v184 = vld [vmem:[%s118 + $0x208] sm:$0xff]
  %v185 = vld [vmem:[%s118 + $0x210] sm:$0xff]
  %v186 = vld [vmem:[%s118 + $0x218] sm:$0xff]
  %v187 = vld [vmem:[%s118 + $0x220] sm:$0xff]
  %v188 = vld [vmem:[%s118 + $0x228] sm:$0xff]
  %v189 = vld [vmem:[%s118 + $0x230] sm:$0xff]
  %v190 = vld [vmem:[%s118 + $0x238] sm:$0xff]
  %v191 = vld [vmem:[%s118 + $0x240] sm:$0xff]
  %v192 = vld [vmem:[%s118 + $0x248] sm:$0xff]
  %v193 = vld [vmem:[%s118 + $0x250] sm:$0xff]
  %v194 = vld [vmem:[%s118 + $0x258] sm:$0xff]
  %v195 = vld [vmem:[%s118 + $0x260] sm:$0xff]
  %v196 = vld [vmem:[%s118 + $0x268] sm:$0xff]
  %v197 = vld [vmem:[%s118 + $0x270] sm:$0xff]
  %v198 = vld [vmem:[%s118 + $0x278] sm:$0xff]
  %v199 = vld [vmem:[%s118 + $0x280] sm:$0xff]
  %v200 = vld [vmem:[%s118 + $0x288] sm:$0xff]
  %v201 = vld [vmem:[%s118 + $0x290] sm:$0xff]
  %v202 = vld [vmem:[%s118 + $0x298] sm:$0xff]
  %v203 = vld [vmem:[%s118 + $0x2a0] sm:$0xff]
  %v204 = vld [vmem:[%s118 + $0x2a8] sm:$0xff]
  %v205 = vld [vmem:[%s118 + $0x2b0] sm:$0xff]
  %v206 = vld [vmem:[%s118 + $0x2b8] sm:$0xff]
  %vm216 = vcmask 1046528
  %v217 = vrot.slane %v112, 1
  %v218 = vrot.slane %v21, 1
  %v219 = vsel %vm216, %v217, %v218
  %v220 = vrot.slane %v113, 1
  %v221 = vrot.slane %v22, 1
  %v222 = vsel %vm216, %v220, %v221
  %v223 = vrot.slane %v114, 1
  %v224 = vrot.slane %v23, 1
  %v225 = vsel %vm216, %v223, %v224
  %v226 = vrot.slane %v115, 1
  %v227 = vsel %vm216, %v218, %v226
  %v228 = vrot.slane %v116, 1
  %v229 = vsel %vm216, %v221, %v228
  %v230 = vrot.slane %v117, 1
  %v231 = vsel %vm216, %v224, %v230
  %vm236 = vcmask 785408
  %v237 = vsel %vm236, %v225, 0
  %v239 = vsel %vm236, %v231, 0
  %241 = vmatprep.subr.mxu0 %v150
  %242 = vmatpush1.msra.mxu0 %v149
  %243 = vmatprep.subr.mxu0 %v148
  %244 = vmatpush1.msra.mxu0 %v147
  %245 = vmatprep.subr.mxu0 %v146
  %246 = vmatpush1.msra.mxu0 %v145
  %247 = vmatprep.subr.mxu0 %v144
  %248 = vmatpush1.msra.mxu0 %v143
  %249 = vmatprep.subr.mxu0 %v142
  %250 = vmatpush1.msra.mxu0 %v141
  %251 = vmatprep.subr.mxu0 %v140
  %252 = vmatpush1.msra.mxu0 %v139
  %253 = vmatprep.subr.mxu0 %v138
  %254 = vmatpush1.msra.mxu0 %v137
  %255 = vmatprep.subr.mxu0 %v136
  %256 = vmatpush1.msra.mxu0 %v135
  %257 = vmatprep.subr.mxu0 %v134
  %258 = vmatpush1.msra.mxu0 %v133
  %259 = vmatprep.subr.mxu0 %v132
  %260 = vmatpush1.msra.mxu0 %v131
  %261 = vmatprep.subr.mxu0 %v130
  %262 = vmatpush1.msra.mxu0 %v129
  %263 = vmatprep.subr.mxu0 %v128
  %264 = vmatpush1.msra.mxu0 %v127
  %265 = vmatprep.subr.mxu0 %v126
  %266 = vmatpush1.msra.mxu0 %v125
  %267 = vmatprep.subr.mxu0 %v124
  %268 = vmatpush1.msra.mxu0 %v123
  %269 = vmatprep.subr.mxu0 %v122
  %270 = vmatpush1.msra.mxu0 %v121
  %271 = vmatprep.subr.mxu0 %v120
  %272 = vmatpush1.msra.mxu0 %v119
  %273 = vmatprep.subr.mxu0 %v182
  %274 = vmatpush2.msra.mxu0 %v181
  %275 = vmatprep.subr.mxu0 %v180
  %276 = vmatpush2.msra.mxu0 %v179
  %277 = vmatprep.subr.mxu0 %v178
  %278 = vmatpush2.msra.mxu0 %v177
  %279 = vmatprep.subr.mxu0 %v176
  %280 = vmatpush2.msra.mxu0 %v175
  %281 = vmatprep.subr.mxu0 %v174
  %282 = vmatpush2.msra.mxu0 %v173
  %283 = vmatprep.subr.mxu0 %v172
  %284 = vmatpush2.msra.mxu0 %v171
  %285 = vmatprep.subr.mxu0 %v170
  %286 = vmatpush2.msra.mxu0 %v169
  %287 = vmatprep.subr.mxu0 %v168
  %288 = vmatpush2.msra.mxu0 %v167
  %289 = vmatprep.subr.mxu0 %v166
  %290 = vmatpush2.msra.mxu0 %v165
  %291 = vmatprep.subr.mxu0 %v164
  %292 = vmatpush2.msra.mxu0 %v163
  %293 = vmatprep.subr.mxu0 %v162
  %294 = vmatpush2.msra.mxu0 %v161
  %295 = vmatprep.subr.mxu0 %v160
  %296 = vmatpush2.msra.mxu0 %v159
  %297 = vmatprep.subr.mxu0 %v158
  %298 = vmatpush2.msra.mxu0 %v157
  %299 = vmatprep.subr.mxu0 %v156
  %300 = vmatpush2.msra.mxu0 %v155
  %301 = vmatprep.subr.mxu0 %v154
  %302 = vmatpush2.msra.mxu0 %v153
  %303 = vmatprep.subr.mxu0 %v152
  %304 = vmatpush2.msra.mxu0 %v151
  %305 = vmatprep.mubr.f32.mxu0 %v222
  %306 = vmatmul.mubr.f32.gmra.mxu0 %v219
  %v307 = vpop.f32.mrf.mxu0
  %v308 = vadd.f32 0.0, %v307
  %v309 = vpop.f32.mrf.mxu0
  %v310 = vadd.f32 0.0, %v309
  %311 = vmatprep.mubr.f32.mxu0 %v229
  %312 = vmatmul.mubr.f32.gmra.mxu0 %v227
  %v313 = vpop.f32.mrf.mxu0
  %v314 = vadd.f32 0.0, %v313
  %v315 = vpop.f32.mrf.mxu0
  %v316 = vadd.f32 0.0, %v315
  %317 = vdwg.mxu0
  %318 = vmatprep.subr.mxu0 0.0
  %319 = vmatpush1.msra.mxu0 0.0
  %320 = vmatprep.subr.mxu0 0.0
  %321 = vmatpush1.msra.mxu0 0.0
  %322 = vmatprep.subr.mxu0 0.0
  %323 = vmatpush1.msra.mxu0 0.0
  %324 = vmatprep.subr.mxu0 0.0
  %325 = vmatpush1.msra.mxu0 0.0
  %326 = vmatprep.subr.mxu0 %v206
  %327 = vmatpush1.msra.mxu0 %v205
  %328 = vmatprep.subr.mxu0 %v204
  %329 = vmatpush1.msra.mxu0 %v203
  %330 = vmatprep.subr.mxu0 %v202
  %331 = vmatpush1.msra.mxu0 %v201
  %332 = vmatprep.subr.mxu0 %v200
  %333 = vmatpush1.msra.mxu0 %v199
  %334 = vmatprep.subr.mxu0 %v198
  %335 = vmatpush1.msra.mxu0 %v197
  %336 = vmatprep.subr.mxu0 %v196
  %337 = vmatpush1.msra.mxu0 %v195
  %338 = vmatprep.subr.mxu0 %v194
  %339 = vmatpush1.msra.mxu0 %v193
  %340 = vmatprep.subr.mxu0 %v192
  %341 = vmatpush1.msra.mxu0 %v191
  %342 = vmatprep.subr.mxu0 %v190
  %343 = vmatpush1.msra.mxu0 %v189
  %344 = vmatprep.subr.mxu0 %v188
  %345 = vmatpush1.msra.mxu0 %v187
  %346 = vmatprep.subr.mxu0 %v186
  %347 = vmatpush1.msra.mxu0 %v185
  %348 = vmatprep.subr.mxu0 %v184
  %349 = vmatpush1.msra.mxu0 %v183
  %350 = vmatprep.subr.mxu0 0.0
  %351 = vmatpush2.msra.mxu0 0.0
  %352 = vmatprep.subr.mxu0 0.0
  %353 = vmatpush2.msra.mxu0 0.0
  %354 = vmatprep.subr.mxu0 0.0
  %355 = vmatpush2.msra.mxu0 0.0
  %356 = vmatprep.subr.mxu0 0.0
  %357 = vmatpush2.msra.mxu0 0.0
  %358 = vmatprep.subr.mxu0 0.0
  %359 = vmatpush2.msra.mxu0 0.0
  %360 = vmatprep.subr.mxu0 0.0
  %361 = vmatpush2.msra.mxu0 0.0
  %362 = vmatprep.subr.mxu0 0.0
  %363 = vmatpush2.msra.mxu0 0.0
  %364 = vmatprep.subr.mxu0 0.0
  %365 = vmatpush2.msra.mxu0 0.0
  %366 = vmatprep.subr.mxu0 0.0
  %367 = vmatpush2.msra.mxu0 0.0
  %368 = vmatprep.subr.mxu0 0.0
  %369 = vmatpush2.msra.mxu0 0.0
  %370 = vmatprep.subr.mxu0 0.0
  %371 = vmatpush2.msra.mxu0 0.0
  %372 = vmatprep.subr.mxu0 0.0
  %373 = vmatpush2.msra.mxu0 0.0
  %374 = vmatprep.subr.mxu0 0.0
  %375 = vmatpush2.msra.mxu0 0.0
  %376 = vmatprep.subr.mxu0 0.0
  %377 = vmatpush2.msra.mxu0 0.0
  %378 = vmatprep.subr.mxu0 0.0
  %379 = vmatpush2.msra.mxu0 0.0
  %380 = vmatprep.subr.mxu0 0.0
  %381 = vmatpush2.msra.mxu0 0.0
  %382 = vmatprep.mubr.f32.mxu0 0.0
  %383 = vmatmul.mubr.f32.gmra.mxu0 %v237
  %v384 = vpop.f32.mrf.mxu0
  %v385 = vadd.f32 %v308, %v384
  %v386 = vpop.f32.mrf.mxu0
  %v387 = vadd.f32 %v310, %v386
  %388 = vmatprep.mubr.f32.mxu0 0.0
  %389 = vmatmul.mubr.f32.gmra.mxu0 %v239
  %v390 = vpop.f32.mrf.mxu0
  %v391 = vadd.f32 %v314, %v390
  %v392 = vpop.f32.mrf.mxu0
  %v393 = vadd.f32 %v316, %v392
  %394 = vdwg.mxu0
  %v396 = vsel %vm236, %v20, 0
  %v398 = vsel %vm236, %v23, 0
  %400 = vmatprep.subr.mxu0 %v55
  %401 = vmatpush1.msra.mxu0 %v54
  %402 = vmatprep.subr.mxu0 %v53
  %403 = vmatpush1.msra.mxu0 %v52
  %404 = vmatprep.subr.mxu0 %v51
  %405 = vmatpush1.msra.mxu0 %v50
  %406 = vmatprep.subr.mxu0 %v49
  %407 = vmatpush1.msra.mxu0 %v48
  %408 = vmatprep.subr.mxu0 %v47
  %409 = vmatpush1.msra.mxu0 %v46
  %410 = vmatprep.subr.mxu0 %v45
  %411 = vmatpush1.msra.mxu0 %v44
  %412 = vmatprep.subr.mxu0 %v43
  %413 = vmatpush1.msra.mxu0 %v42
  %414 = vmatprep.subr.mxu0 %v41
  %415 = vmatpush1.msra.mxu0 %v40
  %416 = vmatprep.subr.mxu0 %v39
  %417 = vmatpush1.msra.mxu0 %v38
  %418 = vmatprep.subr.mxu0 %v37
  %419 = vmatpush1.msra.mxu0 %v36
  %420 = vmatprep.subr.mxu0 %v35
  %421 = vmatpush1.msra.mxu0 %v34
  %422 = vmatprep.subr.mxu0 %v33
  %423 = vmatpush1.msra.mxu0 %v32
  %424 = vmatprep.subr.mxu0 %v31
  %425 = vmatpush1.msra.mxu0 %v30
  %426 = vmatprep.subr.mxu0 %v29
  %427 = vmatpush1.msra.mxu0 %v28
  %428 = vmatprep.subr.mxu0 %v27
  %429 = vmatpush1.msra.mxu0 %v26
  %430 = vmatprep.subr.mxu0 %v25
  %431 = vmatpush1.msra.mxu0 %v24
  %432 = vmatprep.subr.mxu0 %v87
  %433 = vmatpush2.msra.mxu0 %v86
  %434 = vmatprep.subr.mxu0 %v85
  %435 = vmatpush2.msra.mxu0 %v84
  %436 = vmatprep.subr.mxu0 %v83
  %437 = vmatpush2.msra.mxu0 %v82
  %438 = vmatprep.subr.mxu0 %v81
  %439 = vmatpush2.msra.mxu0 %v80
  %440 = vmatprep.subr.mxu0 %v79
  %441 = vmatpush2.msra.mxu0 %v78
  %442 = vmatprep.subr.mxu0 %v77
  %443 = vmatpush2.msra.mxu0 %v76
  %444 = vmatprep.subr.mxu0 %v75
  %445 = vmatpush2.msra.mxu0 %v74
  %446 = vmatprep.subr.mxu0 %v73
  %447 = vmatpush2.msra.mxu0 %v72
  %448 = vmatprep.subr.mxu0 %v71
  %449 = vmatpush2.msra.mxu0 %v70
  %450 = vmatprep.subr.mxu0 %v69
  %451 = vmatpush2.msra.mxu0 %v68
  %452 = vmatprep.subr.mxu0 %v67
  %453 = vmatpush2.msra.mxu0 %v66
  %454 = vmatprep.subr.mxu0 %v65
  %455 = vmatpush2.msra.mxu0 %v64
  %456 = vmatprep.subr.mxu0 %v63
  %457 = vmatpush2.msra.mxu0 %v62
  %458 = vmatprep.subr.mxu0 %v61
  %459 = vmatpush2.msra.mxu0 %v60
  %460 = vmatprep.subr.mxu0 %v59
  %461 = vmatpush2.msra.mxu0 %v58
  %462 = vmatprep.subr.mxu0 %v57
  %463 = vmatpush2.msra.mxu0 %v56
  %464 = vmatprep.mubr.f32.mxu0 %v19
  %465 = vmatmul.mubr.f32.gmra.mxu0 %v18
  %v466 = vpop.f32.mrf.mxu0
  %v467 = vadd.f32 %v385, %v466
  %v468 = vpop.f32.mrf.mxu0
  %v469 = vadd.f32 %v387, %v468
  %470 = vmatprep.mubr.f32.mxu0 %v22
  %471 = vmatmul.mubr.f32.gmra.mxu0 %v21
  %v472 = vpop.f32.mrf.mxu0
  %v473 = vadd.f32 %v391, %v472
  %v474 = vpop.f32.mrf.mxu0
  %v475 = vadd.f32 %v393, %v474
  %476 = vdwg.mxu0
  %477 = vmatprep.subr.mxu0 0.0
  %478 = vmatpush1.msra.mxu0 0.0
  %479 = vmatprep.subr.mxu0 0.0
  %480 = vmatpush1.msra.mxu0 0.0
  %481 = vmatprep.subr.mxu0 0.0
  %482 = vmatpush1.msra.mxu0 0.0
  %483 = vmatprep.subr.mxu0 0.0
  %484 = vmatpush1.msra.mxu0 0.0
  %485 = vmatprep.subr.mxu0 %v111
  %486 = vmatpush1.msra.mxu0 %v110
  %487 = vmatprep.subr.mxu0 %v109
  %488 = vmatpush1.msra.mxu0 %v108
  %489 = vmatprep.subr.mxu0 %v107
  %490 = vmatpush1.msra.mxu0 %v106
  %491 = vmatprep.subr.mxu0 %v105
  %492 = vmatpush1.msra.mxu0 %v104
  %493 = vmatprep.subr.mxu0 %v103
  %494 = vmatpush1.msra.mxu0 %v102
  %495 = vmatprep.subr.mxu0 %v101
  %496 = vmatpush1.msra.mxu0 %v100
  %497 = vmatprep.subr.mxu0 %v99
  %498 = vmatpush1.msra.mxu0 %v98
  %499 = vmatprep.subr.mxu0 %v97
  %500 = vmatpush1.msra.mxu0 %v96
  %501 = vmatprep.subr.mxu0 %v95
  %502 = vmatpush1.msra.mxu0 %v94
  %503 = vmatprep.subr.mxu0 %v93
  %504 = vmatpush1.msra.mxu0 %v92
  %505 = vmatprep.subr.mxu0 %v91
  %506 = vmatpush1.msra.mxu0 %v90
  %507 = vmatprep.subr.mxu0 %v89
  %508 = vmatpush1.msra.mxu0 %v88
  %509 = vmatprep.subr.mxu0 0.0
  %510 = vmatpush2.msra.mxu0 0.0
  %511 = vmatprep.subr.mxu0 0.0
  %512 = vmatpush2.msra.mxu0 0.0
  %513 = vmatprep.subr.mxu0 0.0
  %514 = vmatpush2.msra.mxu0 0.0
  %515 = vmatprep.subr.mxu0 0.0
  %516 = vmatpush2.msra.mxu0 0.0
  %517 = vmatprep.subr.mxu0 0.0
  %518 = vmatpush2.msra.mxu0 0.0
  %519 = vmatprep.subr.mxu0 0.0
  %520 = vmatpush2.msra.mxu0 0.0
  %521 = vmatprep.subr.mxu0 0.0
  %522 = vmatpush2.msra.mxu0 0.0
  %523 = vmatprep.subr.mxu0 0.0
  %524 = vmatpush2.msra.mxu0 0.0
  %525 = vmatprep.subr.mxu0 0.0
  %526 = vmatpush2.msra.mxu0 0.0
  %527 = vmatprep.subr.mxu0 0.0
  %528 = vmatpush2.msra.mxu0 0.0
  %529 = vmatprep.subr.mxu0 0.0
  %530 = vmatpush2.msra.mxu0 0.0
  %531 = vmatprep.subr.mxu0 0.0
  %532 = vmatpush2.msra.mxu0 0.0
  %533 = vmatprep.subr.mxu0 0.0
  %534 = vmatpush2.msra.mxu0 0.0
  %535 = vmatprep.subr.mxu0 0.0
  %536 = vmatpush2.msra.mxu0 0.0
  %537 = vmatprep.subr.mxu0 0.0
  %538 = vmatpush2.msra.mxu0 0.0
  %539 = vmatprep.subr.mxu0 0.0
  %540 = vmatpush2.msra.mxu0 0.0
  %541 = vmatprep.mubr.f32.mxu0 0.0
  %542 = vmatmul.mubr.f32.gmra.mxu0 %v396
  %v543 = vpop.f32.mrf.mxu0
  %v544 = vadd.f32 %v467, %v543
  %v545 = vpop.f32.mrf.mxu0
  %v546 = vadd.f32 %v469, %v545
  %547 = vmatprep.mubr.f32.mxu0 0.0
  %548 = vmatmul.mubr.f32.gmra.mxu0 %v398
  %v549 = vpop.f32.mrf.mxu0
  %v550 = vadd.f32 %v473, %v549
  %v551 = vpop.f32.mrf.mxu0
  %v552 = vadd.f32 %v475, %v551
  %553 = vdwg.mxu0
  %v554 = vld [vmem:[%s0] sm:$0xfc]
  %v555 = vld [vmem:[%s0 + $0x8] sm:$0xfc]
  %v556 = vld [vmem:[%s0 + $0x10] sm:$0xfc]
  %v557 = vld [vmem:[%s0 + $0x30] sm:$0x3]
  %v558 = vld [vmem:[%s0 + $0x38] sm:$0x3]
  %v559 = vld [vmem:[%s0 + $0x40] sm:$0x3]
  %s560 = scalar_lea.vmem %s1, 1408
  %v561 = vld [vmem:[%s560] sm:$0xff]
  %v562 = vld [vmem:[%s560 + $0x8] sm:$0xff]
  %v563 = vld [vmem:[%s560 + $0x10] sm:$0xff]
  %v564 = vld [vmem:[%s560 + $0x18] sm:$0xff]
  %v565 = vld [vmem:[%s560 + $0x20] sm:$0xff]
  %v566 = vld [vmem:[%s560 + $0x28] sm:$0xff]
  %v567 = vld [vmem:[%s560 + $0x30] sm:$0xff]
  %v568 = vld [vmem:[%s560 + $0x38] sm:$0xff]
  %v569 = vld [vmem:[%s560 + $0x40] sm:$0xff]
  %v570 = vld [vmem:[%s560 + $0x48] sm:$0xff]
  %v571 = vld [vmem:[%s560 + $0x50] sm:$0xff]
  %v572 = vld [vmem:[%s560 + $0x58] sm:$0xff]
  %v573 = vld [vmem:[%s560 + $0x60] sm:$0xff]
  %v574 = vld [vmem:[%s560 + $0x68] sm:$0xff]
  %v575 = vld [vmem:[%s560 + $0x70] sm:$0xff]
  %v576 = vld [vmem:[%s560 + $0x78] sm:$0xff]
  %v577 = vld [vmem:[%s560 + $0x80] sm:$0xff]
  %v578 = vld [vmem:[%s560 + $0x88] sm:$0xff]
  %v579 = vld [vmem:[%s560 + $0x90] sm:$0xff]
  %v580 = vld [vmem:[%s560 + $0x98] sm:$0xff]
  %v581 = vld [vmem:[%s560 + $0xa0] sm:$0xff]
  %v582 = vld [vmem:[%s560 + $0xa8] sm:$0xff]
  %v583 = vld [vmem:[%s560 + $0xb0] sm:$0xff]
  %v584 = vld [vmem:[%s560 + $0xb8] sm:$0xff]
  %v585 = vld [vmem:[%s560 + $0xc0] sm:$0xff]
  %v586 = vld [vmem:[%s560 + $0xc8] sm:$0xff]
  %v587 = vld [vmem:[%s560 + $0xd0] sm:$0xff]
  %v588 = vld [vmem:[%s560 + $0xd8] sm:$0xff]
  %v589 = vld [vmem:[%s560 + $0xe0] sm:$0xff]
  %v590 = vld [vmem:[%s560 + $0xe8] sm:$0xff]
  %v591 = vld [vmem:[%s560 + $0xf0] sm:$0xff]
  %v592 = vld [vmem:[%s560 + $0xf8] sm:$0xff]
  %v593 = vld [vmem:[%s560 + $0x100] sm:$0xff]
  %v594 = vld [vmem:[%s560 + $0x108] sm:$0xff]
  %v595 = vld [vmem:[%s560 + $0x110] sm:$0xff]
  %v596 = vld [vmem:[%s560 + $0x118] sm:$0xff]
  %v597 = vld [vmem:[%s560 + $0x120] sm:$0xff]
  %v598 = vld [vmem:[%s560 + $0x128] sm:$0xff]
  %v599 = vld [vmem:[%s560 + $0x130] sm:$0xff]
  %v600 = vld [vmem:[%s560 + $0x138] sm:$0xff]
  %v601 = vld [vmem:[%s560 + $0x140] sm:$0xff]
  %v602 = vld [vmem:[%s560 + $0x148] sm:$0xff]
  %v603 = vld [vmem:[%s560 + $0x150] sm:$0xff]
  %v604 = vld [vmem:[%s560 + $0x158] sm:$0xff]
  %v605 = vld [vmem:[%s560 + $0x160] sm:$0xff]
  %v606 = vld [vmem:[%s560 + $0x168] sm:$0xff]
  %v607 = vld [vmem:[%s560 + $0x170] sm:$0xff]
  %v608 = vld [vmem:[%s560 + $0x178] sm:$0xff]
  %v609 = vld [vmem:[%s560 + $0x180] sm:$0xff]
  %v610 = vld [vmem:[%s560 + $0x188] sm:$0xff]
  %v611 = vld [vmem:[%s560 + $0x190] sm:$0xff]
  %v612 = vld [vmem:[%s560 + $0x198] sm:$0xff]
  %v613 = vld [vmem:[%s560 + $0x1a0] sm:$0xff]
  %v614 = vld [vmem:[%s560 + $0x1a8] sm:$0xff]
  %v615 = vld [vmem:[%s560 + $0x1b0] sm:$0xff]
  %v616 = vld [vmem:[%s560 + $0x1b8] sm:$0xff]
  %v617 = vld [vmem:[%s560 + $0x1c0] sm:$0xff]
  %v618 = vld [vmem:[%s560 + $0x1c8] sm:$0xff]
  %v619 = vld [vmem:[%s560 + $0x1d0] sm:$0xff]
  %v620 = vld [vmem:[%s560 + $0x1d8] sm:$0xff]
  %v621 = vld [vmem:[%s560 + $0x1e0] sm:$0xff]
  %v622 = vld [vmem:[%s560 + $0x1e8] sm:$0xff]
  %v623 = vld [vmem:[%s560 + $0x1f0] sm:$0xff]
  %v624 = vld [vmem:[%s560 + $0x1f8] sm:$0xff]
  %v625 = vld [vmem:[%s560 + $0x200] sm:$0xff]
  %v626 = vld [vmem:[%s560 + $0x208] sm:$0xff]
  %v627 = vld [vmem:[%s560 + $0x210] sm:$0xff]
  %v628 = vld [vmem:[%s560 + $0x218] sm:$0xff]
  %v629 = vld [vmem:[%s560 + $0x220] sm:$0xff]
  %v630 = vld [vmem:[%s560 + $0x228] sm:$0xff]
  %v631 = vld [vmem:[%s560 + $0x230] sm:$0xff]
  %v632 = vld [vmem:[%s560 + $0x238] sm:$0xff]
  %v633 = vld [vmem:[%s560 + $0x240] sm:$0xff]
  %v634 = vld [vmem:[%s560 + $0x248] sm:$0xff]
  %v635 = vld [vmem:[%s560 + $0x250] sm:$0xff]
  %v636 = vld [vmem:[%s560 + $0x258] sm:$0xff]
  %v637 = vld [vmem:[%s560 + $0x260] sm:$0xff]
  %v638 = vld [vmem:[%s560 + $0x268] sm:$0xff]
  %v639 = vld [vmem:[%s560 + $0x270] sm:$0xff]
  %v640 = vld [vmem:[%s560 + $0x278] sm:$0xff]
  %v641 = vld [vmem:[%s560 + $0x280] sm:$0xff]
  %v642 = vld [vmem:[%s560 + $0x288] sm:$0xff]
  %v643 = vld [vmem:[%s560 + $0x290] sm:$0xff]
  %v644 = vld [vmem:[%s560 + $0x298] sm:$0xff]
  %v645 = vld [vmem:[%s560 + $0x2a0] sm:$0xff]
  %v646 = vld [vmem:[%s560 + $0x2a8] sm:$0xff]
  %v647 = vld [vmem:[%s560 + $0x2b0] sm:$0xff]
  %v648 = vld [vmem:[%s560 + $0x2b8] sm:$0xff]
  %vm655 = vcmask 1045504
  %v656 = vrot.slane %v554, 2
  %v657 = vrot.slane %v21, 2
  %v658 = vsel %vm655, %v656, %v657
  %v659 = vrot.slane %v555, 2
  %v660 = vrot.slane %v22, 2
  %v661 = vsel %vm655, %v659, %v660
  %v662 = vrot.slane %v556, 2
  %v663 = vrot.slane %v23, 2
  %v664 = vsel %vm655, %v662, %v663
  %v665 = vrot.slane %v557, 2
  %v666 = vsel %vm655, %v657, %v665
  %v667 = vrot.slane %v558, 2
  %v668 = vsel %vm655, %v660, %v667
  %v669 = vrot.slane %v559, 2
  %v670 = vsel %vm655, %v663, %v669
  %v675 = vsel %vm236, %v664, 0
  %v677 = vsel %vm236, %v670, 0
  %679 = vmatprep.subr.mxu0 %v592
  %680 = vmatpush1.msra.mxu0 %v591
  %681 = vmatprep.subr.mxu0 %v590
  %682 = vmatpush1.msra.mxu0 %v589
  %683 = vmatprep.subr.mxu0 %v588
  %684 = vmatpush1.msra.mxu0 %v587
  %685 = vmatprep.subr.mxu0 %v586
  %686 = vmatpush1.msra.mxu0 %v585
  %687 = vmatprep.subr.mxu0 %v584
  %688 = vmatpush1.msra.mxu0 %v583
  %689 = vmatprep.subr.mxu0 %v582
  %690 = vmatpush1.msra.mxu0 %v581
  %691 = vmatprep.subr.mxu0 %v580
  %692 = vmatpush1.msra.mxu0 %v579
  %693 = vmatprep.subr.mxu0 %v578
  %694 = vmatpush1.msra.mxu0 %v577
  %695 = vmatprep.subr.mxu0 %v576
  %696 = vmatpush1.msra.mxu0 %v575
  %697 = vmatprep.subr.mxu0 %v574
  %698 = vmatpush1.msra.mxu0 %v573
  %699 = vmatprep.subr.mxu0 %v572
  %700 = vmatpush1.msra.mxu0 %v571
  %701 = vmatprep.subr.mxu0 %v570
  %702 = vmatpush1.msra.mxu0 %v569
  %703 = vmatprep.subr.mxu0 %v568
  %704 = vmatpush1.msra.mxu0 %v567
  %705 = vmatprep.subr.mxu0 %v566
  %706 = vmatpush1.msra.mxu0 %v565
  %707 = vmatprep.subr.mxu0 %v564
  %708 = vmatpush1.msra.mxu0 %v563
  %709 = vmatprep.subr.mxu0 %v562
  %710 = vmatpush1.msra.mxu0 %v561
  %711 = vmatprep.subr.mxu0 %v624
  %712 = vmatpush2.msra.mxu0 %v623
  %713 = vmatprep.subr.mxu0 %v622
  %714 = vmatpush2.msra.mxu0 %v621
  %715 = vmatprep.subr.mxu0 %v620
  %716 = vmatpush2.msra.mxu0 %v619
  %717 = vmatprep.subr.mxu0 %v618
  %718 = vmatpush2.msra.mxu0 %v617
  %719 = vmatprep.subr.mxu0 %v616
  %720 = vmatpush2.msra.mxu0 %v615
  %721 = vmatprep.subr.mxu0 %v614
  %722 = vmatpush2.msra.mxu0 %v613
  %723 = vmatprep.subr.mxu0 %v612
  %724 = vmatpush2.msra.mxu0 %v611
  %725 = vmatprep.subr.mxu0 %v610
  %726 = vmatpush2.msra.mxu0 %v609
  %727 = vmatprep.subr.mxu0 %v608
  %728 = vmatpush2.msra.mxu0 %v607
  %729 = vmatprep.subr.mxu0 %v606
  %730 = vmatpush2.msra.mxu0 %v605
  %731 = vmatprep.subr.mxu0 %v604
  %732 = vmatpush2.msra.mxu0 %v603
  %733 = vmatprep.subr.mxu0 %v602
  %734 = vmatpush2.msra.mxu0 %v601
  %735 = vmatprep.subr.mxu0 %v600
  %736 = vmatpush2.msra.mxu0 %v599
  %737 = vmatprep.subr.mxu0 %v598
  %738 = vmatpush2.msra.mxu0 %v597
  %739 = vmatprep.subr.mxu0 %v596
  %740 = vmatpush2.msra.mxu0 %v595
  %741 = vmatprep.subr.mxu0 %v594
  %742 = vmatpush2.msra.mxu0 %v593
  %743 = vmatprep.mubr.f32.mxu0 %v661
  %744 = vmatmul.mubr.f32.gmra.mxu0 %v658
  %v745 = vpop.f32.mrf.mxu0
  %v746 = vadd.f32 0.0, %v745
  %v747 = vpop.f32.mrf.mxu0
  %v748 = vadd.f32 0.0, %v747
  %749 = vmatprep.mubr.f32.mxu0 %v668
  %750 = vmatmul.mubr.f32.gmra.mxu0 %v666
  %v751 = vpop.f32.mrf.mxu0
  %v752 = vadd.f32 0.0, %v751
  %v753 = vpop.f32.mrf.mxu0
  %v754 = vadd.f32 0.0, %v753
  %755 = vdwg.mxu0
  %756 = vmatprep.subr.mxu0 0.0
  %757 = vmatpush1.msra.mxu0 0.0
  %758 = vmatprep.subr.mxu0 0.0
  %759 = vmatpush1.msra.mxu0 0.0
  %760 = vmatprep.subr.mxu0 0.0
  %761 = vmatpush1.msra.mxu0 0.0
  %762 = vmatprep.subr.mxu0 0.0
  %763 = vmatpush1.msra.mxu0 0.0
  %764 = vmatprep.subr.mxu0 %v648
  %765 = vmatpush1.msra.mxu0 %v647
  %766 = vmatprep.subr.mxu0 %v646
  %767 = vmatpush1.msra.mxu0 %v645
  %768 = vmatprep.subr.mxu0 %v644
  %769 = vmatpush1.msra.mxu0 %v643
  %770 = vmatprep.subr.mxu0 %v642
  %771 = vmatpush1.msra.mxu0 %v641
  %772 = vmatprep.subr.mxu0 %v640
  %773 = vmatpush1.msra.mxu0 %v639
  %774 = vmatprep.subr.mxu0 %v638
  %775 = vmatpush1.msra.mxu0 %v637
  %776 = vmatprep.subr.mxu0 %v636
  %777 = vmatpush1.msra.mxu0 %v635
  %778 = vmatprep.subr.mxu0 %v634
  %779 = vmatpush1.msra.mxu0 %v633
  %780 = vmatprep.subr.mxu0 %v632
  %781 = vmatpush1.msra.mxu0 %v631
  %782 = vmatprep.subr.mxu0 %v630
  %783 = vmatpush1.msra.mxu0 %v629
  %784 = vmatprep.subr.mxu0 %v628
  %785 = vmatpush1.msra.mxu0 %v627
  %786 = vmatprep.subr.mxu0 %v626
  %787 = vmatpush1.msra.mxu0 %v625
  %788 = vmatprep.subr.mxu0 0.0
  %789 = vmatpush2.msra.mxu0 0.0
  %790 = vmatprep.subr.mxu0 0.0
  %791 = vmatpush2.msra.mxu0 0.0
  %792 = vmatprep.subr.mxu0 0.0
  %793 = vmatpush2.msra.mxu0 0.0
  %794 = vmatprep.subr.mxu0 0.0
  %795 = vmatpush2.msra.mxu0 0.0
  %796 = vmatprep.subr.mxu0 0.0
  %797 = vmatpush2.msra.mxu0 0.0
  %798 = vmatprep.subr.mxu0 0.0
  %799 = vmatpush2.msra.mxu0 0.0
  %800 = vmatprep.subr.mxu0 0.0
  %801 = vmatpush2.msra.mxu0 0.0
  %802 = vmatprep.subr.mxu0 0.0
  %803 = vmatpush2.msra.mxu0 0.0
  %804 = vmatprep.subr.mxu0 0.0
  %805 = vmatpush2.msra.mxu0 0.0
  %806 = vmatprep.subr.mxu0 0.0
  %807 = vmatpush2.msra.mxu0 0.0
  %808 = vmatprep.subr.mxu0 0.0
  %809 = vmatpush2.msra.mxu0 0.0
  %810 = vmatprep.subr.mxu0 0.0
  %811 = vmatpush2.msra.mxu0 0.0
  %812 = vmatprep.subr.mxu0 0.0
  %813 = vmatpush2.msra.mxu0 0.0
  %814 = vmatprep.subr.mxu0 0.0
  %815 = vmatpush2.msra.mxu0 0.0
  %816 = vmatprep.subr.mxu0 0.0
  %817 = vmatpush2.msra.mxu0 0.0
  %818 = vmatprep.subr.mxu0 0.0
  %819 = vmatpush2.msra.mxu0 0.0
  %820 = vmatprep.mubr.f32.mxu0 0.0
  %821 = vmatmul.mubr.f32.gmra.mxu0 %v675
  %v822 = vpop.f32.mrf.mxu0
  %v823 = vadd.f32 %v746, %v822
  %v824 = vpop.f32.mrf.mxu0
  %v825 = vadd.f32 %v748, %v824
  %826 = vmatprep.mubr.f32.mxu0 0.0
  %827 = vmatmul.mubr.f32.gmra.mxu0 %v677
  %v828 = vpop.f32.mrf.mxu0
  %v829 = vadd.f32 %v752, %v828
  %v830 = vpop.f32.mrf.mxu0
  %v831 = vadd.f32 %v754, %v830
  %832 = vdwg.mxu0
  %v833 = vadd.f32 %v544, %v823
  %v834 = vadd.f32 %v546, %v825
  %v835 = vadd.f32 %v550, %v829
  %v836 = vadd.f32 %v552, %v831
  %v837 = vld [vmem:[%s0] sm:$0xf8]
  %v838 = vld [vmem:[%s0 + $0x8] sm:$0xf8]
  %v839 = vld [vmem:[%s0 + $0x10] sm:$0xf8]
  %v840 = vld [vmem:[%s0 + $0x30] sm:$0x7]
  %v841 = vld [vmem:[%s0 + $0x38] sm:$0x7]
  %v842 = vld [vmem:[%s0 + $0x40] sm:$0x7]
  %s843 = scalar_lea.vmem %s1, 2112
  %v844 = vld [vmem:[%s843] sm:$0xff]
  %v845 = vld [vmem:[%s843 + $0x8] sm:$0xff]
  %v846 = vld [vmem:[%s843 + $0x10] sm:$0xff]
  %v847 = vld [vmem:[%s843 + $0x18] sm:$0xff]
  %v848 = vld [vmem:[%s843 + $0x20] sm:$0xff]
  %v849 = vld [vmem:[%s843 + $0x28] sm:$0xff]
  %v850 = vld [vmem:[%s843 + $0x30] sm:$0xff]
  %v851 = vld [vmem:[%s843 + $0x38] sm:$0xff]
  %v852 = vld [vmem:[%s843 + $0x40] sm:$0xff]
  %v853 = vld [vmem:[%s843 + $0x48] sm:$0xff]
  %v854 = vld [vmem:[%s843 + $0x50] sm:$0xff]
  %v855 = vld [vmem:[%s843 + $0x58] sm:$0xff]
  %v856 = vld [vmem:[%s843 + $0x60] sm:$0xff]
  %v857 = vld [vmem:[%s843 + $0x68] sm:$0xff]
  %v858 = vld [vmem:[%s843 + $0x70] sm:$0xff]
  %v859 = vld [vmem:[%s843 + $0x78] sm:$0xff]
  %v860 = vld [vmem:[%s843 + $0x80] sm:$0xff]
  %v861 = vld [vmem:[%s843 + $0x88] sm:$0xff]
  %v862 = vld [vmem:[%s843 + $0x90] sm:$0xff]
  %v863 = vld [vmem:[%s843 + $0x98] sm:$0xff]
  %v864 = vld [vmem:[%s843 + $0xa0] sm:$0xff]
  %v865 = vld [vmem:[%s843 + $0xa8] sm:$0xff]
  %v866 = vld [vmem:[%s843 + $0xb0] sm:$0xff]
  %v867 = vld [vmem:[%s843 + $0xb8] sm:$0xff]
  %v868 = vld [vmem:[%s843 + $0xc0] sm:$0xff]
  %v869 = vld [vmem:[%s843 + $0xc8] sm:$0xff]
  %v870 = vld [vmem:[%s843 + $0xd0] sm:$0xff]
  %v871 = vld [vmem:[%s843 + $0xd8] sm:$0xff]
  %v872 = vld [vmem:[%s843 + $0xe0] sm:$0xff]
  %v873 = vld [vmem:[%s843 + $0xe8] sm:$0xff]
  %v874 = vld [vmem:[%s843 + $0xf0] sm:$0xff]
  %v875 = vld [vmem:[%s843 + $0xf8] sm:$0xff]
  %v876 = vld [vmem:[%s843 + $0x100] sm:$0xff]
  %v877 = vld [vmem:[%s843 + $0x108] sm:$0xff]
  %v878 = vld [vmem:[%s843 + $0x110] sm:$0xff]
  %v879 = vld [vmem:[%s843 + $0x118] sm:$0xff]
  %v880 = vld [vmem:[%s843 + $0x120] sm:$0xff]
  %v881 = vld [vmem:[%s843 + $0x128] sm:$0xff]
  %v882 = vld [vmem:[%s843 + $0x130] sm:$0xff]
  %v883 = vld [vmem:[%s843 + $0x138] sm:$0xff]
  %v884 = vld [vmem:[%s843 + $0x140] sm:$0xff]
  %v885 = vld [vmem:[%s843 + $0x148] sm:$0xff]
  %v886 = vld [vmem:[%s843 + $0x150] sm:$0xff]
  %v887 = vld [vmem:[%s843 + $0x158] sm:$0xff]
  %v888 = vld [vmem:[%s843 + $0x160] sm:$0xff]
  %v889 = vld [vmem:[%s843 + $0x168] sm:$0xff]
  %v890 = vld [vmem:[%s843 + $0x170] sm:$0xff]
  %v891 = vld [vmem:[%s843 + $0x178] sm:$0xff]
  %v892 = vld [vmem:[%s843 + $0x180] sm:$0xff]
  %v893 = vld [vmem:[%s843 + $0x188] sm:$0xff]
  %v894 = vld [vmem:[%s843 + $0x190] sm:$0xff]
  %v895 = vld [vmem:[%s843 + $0x198] sm:$0xff]
  %v896 = vld [vmem:[%s843 + $0x1a0] sm:$0xff]
  %v897 = vld [vmem:[%s843 + $0x1a8] sm:$0xff]
  %v898 = vld [vmem:[%s843 + $0x1b0] sm:$0xff]
  %v899 = vld [vmem:[%s843 + $0x1b8] sm:$0xff]
  %v900 = vld [vmem:[%s843 + $0x1c0] sm:$0xff]
  %v901 = vld [vmem:[%s843 + $0x1c8] sm:$0xff]
  %v902 = vld [vmem:[%s843 + $0x1d0] sm:$0xff]
  %v903 = vld [vmem:[%s843 + $0x1d8] sm:$0xff]
  %v904 = vld [vmem:[%s843 + $0x1e0] sm:$0xff]
  %v905 = vld [vmem:[%s843 + $0x1e8] sm:$0xff]
  %v906 = vld [vmem:[%s843 + $0x1f0] sm:$0xff]
  %v907 = vld [vmem:[%s843 + $0x1f8] sm:$0xff]
  %v908 = vld [vmem:[%s843 + $0x200] sm:$0xff]
  %v909 = vld [vmem:[%s843 + $0x208] sm:$0xff]
  %v910 = vld [vmem:[%s843 + $0x210] sm:$0xff]
  %v911 = vld [vmem:[%s843 + $0x218] sm:$0xff]
  %v912 = vld [vmem:[%s843 + $0x220] sm:$0xff]
  %v913 = vld [vmem:[%s843 + $0x228] sm:$0xff]
  %v914 = vld [vmem:[%s843 + $0x230] sm:$0xff]
  %v915 = vld [vmem:[%s843 + $0x238] sm:$0xff]
  %v916 = vld [vmem:[%s843 + $0x240] sm:$0xff]
  %v917 = vld [vmem:[%s843 + $0x248] sm:$0xff]
  %v918 = vld [vmem:[%s843 + $0x250] sm:$0xff]
  %v919 = vld [vmem:[%s843 + $0x258] sm:$0xff]
  %v920 = vld [vmem:[%s843 + $0x260] sm:$0xff]
  %v921 = vld [vmem:[%s843 + $0x268] sm:$0xff]
  %v922 = vld [vmem:[%s843 + $0x270] sm:$0xff]
  %v923 = vld [vmem:[%s843 + $0x278] sm:$0xff]
  %v924 = vld [vmem:[%s843 + $0x280] sm:$0xff]
  %v925 = vld [vmem:[%s843 + $0x288] sm:$0xff]
  %v926 = vld [vmem:[%s843 + $0x290] sm:$0xff]
  %v927 = vld [vmem:[%s843 + $0x298] sm:$0xff]
  %v928 = vld [vmem:[%s843 + $0x2a0] sm:$0xff]
  %v929 = vld [vmem:[%s843 + $0x2a8] sm:$0xff]
  %v930 = vld [vmem:[%s843 + $0x2b0] sm:$0xff]
  %v931 = vld [vmem:[%s843 + $0x2b8] sm:$0xff]
  %vm938 = vcmask 1044480
  %v939 = vrot.slane %v837, 3
  %v940 = vrot.slane %v21, 3
  %v941 = vsel %vm938, %v939, %v940
  %v942 = vrot.slane %v838, 3
  %v943 = vrot.slane %v22, 3
  %v944 = vsel %vm938, %v942, %v943
  %v945 = vrot.slane %v839, 3
  %v946 = vrot.slane %v23, 3
  %v947 = vsel %vm938, %v945, %v946
  %v948 = vrot.slane %v840, 3
  %v949 = vsel %vm938, %v940, %v948
  %v950 = vrot.slane %v841, 3
  %v951 = vsel %vm938, %v943, %v950
  %v952 = vrot.slane %v842, 3
  %v953 = vsel %vm938, %v946, %v952
  %v958 = vsel %vm236, %v947, 0
  %v960 = vsel %vm236, %v953, 0
  %962 = vmatprep.subr.mxu0 %v875
  %963 = vmatpush1.msra.mxu0 %v874
  %964 = vmatprep.subr.mxu0 %v873
  %965 = vmatpush1.msra.mxu0 %v872
  %966 = vmatprep.subr.mxu0 %v871
  %967 = vmatpush1.msra.mxu0 %v870
  %968 = vmatprep.subr.mxu0 %v869
  %969 = vmatpush1.msra.mxu0 %v868
  %970 = vmatprep.subr.mxu0 %v867
  %971 = vmatpush1.msra.mxu0 %v866
  %972 = vmatprep.subr.mxu0 %v865
  %973 = vmatpush1.msra.mxu0 %v864
  %974 = vmatprep.subr.mxu0 %v863
  %975 = vmatpush1.msra.mxu0 %v862
  %976 = vmatprep.subr.mxu0 %v861
  %977 = vmatpush1.msra.mxu0 %v860
  %978 = vmatprep.subr.mxu0 %v859
  %979 = vmatpush1.msra.mxu0 %v858
  %980 = vmatprep.subr.mxu0 %v857
  %981 = vmatpush1.msra.mxu0 %v856
  %982 = vmatprep.subr.mxu0 %v855
  %983 = vmatpush1.msra.mxu0 %v854
  %984 = vmatprep.subr.mxu0 %v853
  %985 = vmatpush1.msra.mxu0 %v852
  %986 = vmatprep.subr.mxu0 %v851
  %987 = vmatpush1.msra.mxu0 %v850
  %988 = vmatprep.subr.mxu0 %v849
  %989 = vmatpush1.msra.mxu0 %v848
  %990 = vmatprep.subr.mxu0 %v847
  %991 = vmatpush1.msra.mxu0 %v846
  %992 = vmatprep.subr.mxu0 %v845
  %993 = vmatpush1.msra.mxu0 %v844
  %994 = vmatprep.subr.mxu0 %v907
  %995 = vmatpush2.msra.mxu0 %v906
  %996 = vmatprep.subr.mxu0 %v905
  %997 = vmatpush2.msra.mxu0 %v904
  %998 = vmatprep.subr.mxu0 %v903
  %999 = vmatpush2.msra.mxu0 %v902
  %1000 = vmatprep.subr.mxu0 %v901
  %1001 = vmatpush2.msra.mxu0 %v900
  %1002 = vmatprep.subr.mxu0 %v899
  %1003 = vmatpush2.msra.mxu0 %v898
  %1004 = vmatprep.subr.mxu0 %v897
  %1005 = vmatpush2.msra.mxu0 %v896
  %1006 = vmatprep.subr.mxu0 %v895
  %1007 = vmatpush2.msra.mxu0 %v894
  %1008 = vmatprep.subr.mxu0 %v893
  %1009 = vmatpush2.msra.mxu0 %v892
  %1010 = vmatprep.subr.mxu0 %v891
  %1011 = vmatpush2.msra.mxu0 %v890
  %1012 = vmatprep.subr.mxu0 %v889
  %1013 = vmatpush2.msra.mxu0 %v888
  %1014 = vmatprep.subr.mxu0 %v887
  %1015 = vmatpush2.msra.mxu0 %v886
  %1016 = vmatprep.subr.mxu0 %v885
  %1017 = vmatpush2.msra.mxu0 %v884
  %1018 = vmatprep.subr.mxu0 %v883
  %1019 = vmatpush2.msra.mxu0 %v882
  %1020 = vmatprep.subr.mxu0 %v881
  %1021 = vmatpush2.msra.mxu0 %v880
  %1022 = vmatprep.subr.mxu0 %v879
  %1023 = vmatpush2.msra.mxu0 %v878
  %1024 = vmatprep.subr.mxu0 %v877
  %1025 = vmatpush2.msra.mxu0 %v876
  %1026 = vmatprep.mubr.f32.mxu0 %v944
  %1027 = vmatmul.mubr.f32.gmra.mxu0 %v941
  %v1028 = vpop.f32.mrf.mxu0
  %v1029 = vadd.f32 0.0, %v1028
  %v1030 = vpop.f32.mrf.mxu0
  %v1031 = vadd.f32 0.0, %v1030
  %1032 = vmatprep.mubr.f32.mxu0 %v951
  %1033 = vmatmul.mubr.f32.gmra.mxu0 %v949
  %v1034 = vpop.f32.mrf.mxu0
  %v1035 = vadd.f32 0.0, %v1034
  %v1036 = vpop.f32.mrf.mxu0
  %v1037 = vadd.f32 0.0, %v1036
  %1038 = vdwg.mxu0
  %1039 = vmatprep.subr.mxu0 0.0
  %1040 = vmatpush1.msra.mxu0 0.0
  %1041 = vmatprep.subr.mxu0 0.0
  %1042 = vmatpush1.msra.mxu0 0.0
  %1043 = vmatprep.subr.mxu0 0.0
  %1044 = vmatpush1.msra.mxu0 0.0
  %1045 = vmatprep.subr.mxu0 0.0
  %1046 = vmatpush1.msra.mxu0 0.0
  %1047 = vmatprep.subr.mxu0 %v931
  %1048 = vmatpush1.msra.mxu0 %v930
  %1049 = vmatprep.subr.mxu0 %v929
  %1050 = vmatpush1.msra.mxu0 %v928
  %1051 = vmatprep.subr.mxu0 %v927
  %1052 = vmatpush1.msra.mxu0 %v926
  %1053 = vmatprep.subr.mxu0 %v925
  %1054 = vmatpush1.msra.mxu0 %v924
  %1055 = vmatprep.subr.mxu0 %v923
  %1056 = vmatpush1.msra.mxu0 %v922
  %1057 = vmatprep.subr.mxu0 %v921
  %1058 = vmatpush1.msra.mxu0 %v920
  %1059 = vmatprep.subr.mxu0 %v919
  %1060 = vmatpush1.msra.mxu0 %v918
  %1061 = vmatprep.subr.mxu0 %v917
  %1062 = vmatpush1.msra.mxu0 %v916
  %1063 = vmatprep.subr.mxu0 %v915
  %1064 = vmatpush1.msra.mxu0 %v914
  %1065 = vmatprep.subr.mxu0 %v913
  %1066 = vmatpush1.msra.mxu0 %v912
  %1067 = vmatprep.subr.mxu0 %v911
  %1068 = vmatpush1.msra.mxu0 %v910
  %1069 = vmatprep.subr.mxu0 %v909
  %1070 = vmatpush1.msra.mxu0 %v908
  %1071 = vmatprep.subr.mxu0 0.0
  %1072 = vmatpush2.msra.mxu0 0.0
  %1073 = vmatprep.subr.mxu0 0.0
  %1074 = vmatpush2.msra.mxu0 0.0
  %1075 = vmatprep.subr.mxu0 0.0
  %1076 = vmatpush2.msra.mxu0 0.0
  %1077 = vmatprep.subr.mxu0 0.0
  %1078 = vmatpush2.msra.mxu0 0.0
  %1079 = vmatprep.subr.mxu0 0.0
  %1080 = vmatpush2.msra.mxu0 0.0
  %1081 = vmatprep.subr.mxu0 0.0
  %1082 = vmatpush2.msra.mxu0 0.0
  %1083 = vmatprep.subr.mxu0 0.0
  %1084 = vmatpush2.msra.mxu0 0.0
  %1085 = vmatprep.subr.mxu0 0.0
  %1086 = vmatpush2.msra.mxu0 0.0
  %1087 = vmatprep.subr.mxu0 0.0
  %1088 = vmatpush2.msra.mxu0 0.0
  %1089 = vmatprep.subr.mxu0 0.0
  %1090 = vmatpush2.msra.mxu0 0.0
  %1091 = vmatprep.subr.mxu0 0.0
  %1092 = vmatpush2.msra.mxu0 0.0
  %1093 = vmatprep.subr.mxu0 0.0
  %1094 = vmatpush2.msra.mxu0 0.0
  %1095 = vmatprep.subr.mxu0 0.0
  %1096 = vmatpush2.msra.mxu0 0.0
  %1097 = vmatprep.subr.mxu0 0.0
  %1098 = vmatpush2.msra.mxu0 0.0
  %1099 = vmatprep.subr.mxu0 0.0
  %1100 = vmatpush2.msra.mxu0 0.0
  %1101 = vmatprep.subr.mxu0 0.0
  %1102 = vmatpush2.msra.mxu0 0.0
  %1103 = vmatprep.mubr.f32.mxu0 0.0
  %1104 = vmatmul.mubr.f32.gmra.mxu0 %v958
  %v1105 = vpop.f32.mrf.mxu0
  %v1106 = vadd.f32 %v1029, %v1105
  %v1107 = vpop.f32.mrf.mxu0
  %v1108 = vadd.f32 %v1031, %v1107
  %1109 = vmatprep.mubr.f32.mxu0 0.0
  %1110 = vmatmul.mubr.f32.gmra.mxu0 %v960
  %v1111 = vpop.f32.mrf.mxu0
  %v1112 = vadd.f32 %v1035, %v1111
  %v1113 = vpop.f32.mrf.mxu0
  %v1114 = vadd.f32 %v1037, %v1113
  %1115 = vdwg.mxu0
  %v1116 = vadd.f32 %v833, %v1106
  %v1117 = vadd.f32 %v834, %v1108
  %v1118 = vadd.f32 %v835, %v1112
  %v1119 = vadd.f32 %v836, %v1114
  %v1120 = vld [vmem:[%s0] sm:$0xf0]
  %v1121 = vld [vmem:[%s0 + $0x8] sm:$0xf0]
  %v1122 = vld [vmem:[%s0 + $0x10] sm:$0xf0]
  %v1123 = vld [vmem:[%s0 + $0x30] sm:$0xf]
  %v1124 = vld [vmem:[%s0 + $0x38] sm:$0xf]
  %v1125 = vld [vmem:[%s0 + $0x40] sm:$0xf]
  %s1126 = scalar_lea.vmem %s1, 2816
  %v1127 = vld [vmem:[%s1126] sm:$0xff]
  %v1128 = vld [vmem:[%s1126 + $0x8] sm:$0xff]
  %v1129 = vld [vmem:[%s1126 + $0x10] sm:$0xff]
  %v1130 = vld [vmem:[%s1126 + $0x18] sm:$0xff]
  %v1131 = vld [vmem:[%s1126 + $0x20] sm:$0xff]
  %v1132 = vld [vmem:[%s1126 + $0x28] sm:$0xff]
  %v1133 = vld [vmem:[%s1126 + $0x30] sm:$0xff]
  %v1134 = vld [vmem:[%s1126 + $0x38] sm:$0xff]
  %v1135 = vld [vmem:[%s1126 + $0x40] sm:$0xff]
  %v1136 = vld [vmem:[%s1126 + $0x48] sm:$0xff]
  %v1137 = vld [vmem:[%s1126 + $0x50] sm:$0xff]
  %v1138 = vld [vmem:[%s1126 + $0x58] sm:$0xff]
  %v1139 = vld [vmem:[%s1126 + $0x60] sm:$0xff]
  %v1140 = vld [vmem:[%s1126 + $0x68] sm:$0xff]
  %v1141 = vld [vmem:[%s1126 + $0x70] sm:$0xff]
  %v1142 = vld [vmem:[%s1126 + $0x78] sm:$0xff]
  %v1143 = vld [vmem:[%s1126 + $0x80] sm:$0xff]
  %v1144 = vld [vmem:[%s1126 + $0x88] sm:$0xff]
  %v1145 = vld [vmem:[%s1126 + $0x90] sm:$0xff]
  %v1146 = vld [vmem:[%s1126 + $0x98] sm:$0xff]
  %v1147 = vld [vmem:[%s1126 + $0xa0] sm:$0xff]
  %v1148 = vld [vmem:[%s1126 + $0xa8] sm:$0xff]
  %v1149 = vld [vmem:[%s1126 + $0xb0] sm:$0xff]
  %v1150 = vld [vmem:[%s1126 + $0xb8] sm:$0xff]
  %v1151 = vld [vmem:[%s1126 + $0xc0] sm:$0xff]
  %v1152 = vld [vmem:[%s1126 + $0xc8] sm:$0xff]
  %v1153 = vld [vmem:[%s1126 + $0xd0] sm:$0xff]
  %v1154 = vld [vmem:[%s1126 + $0xd8] sm:$0xff]
  %v1155 = vld [vmem:[%s1126 + $0xe0] sm:$0xff]
  %v1156 = vld [vmem:[%s1126 + $0xe8] sm:$0xff]
  %v1157 = vld [vmem:[%s1126 + $0xf0] sm:$0xff]
  %v1158 = vld [vmem:[%s1126 + $0xf8] sm:$0xff]
  %v1159 = vld [vmem:[%s1126 + $0x100] sm:$0xff]
  %v1160 = vld [vmem:[%s1126 + $0x108] sm:$0xff]
  %v1161 = vld [vmem:[%s1126 + $0x110] sm:$0xff]
  %v1162 = vld [vmem:[%s1126 + $0x118] sm:$0xff]
  %v1163 = vld [vmem:[%s1126 + $0x120] sm:$0xff]
  %v1164 = vld [vmem:[%s1126 + $0x128] sm:$0xff]
  %v1165 = vld [vmem:[%s1126 + $0x130] sm:$0xff]
  %v1166 = vld [vmem:[%s1126 + $0x138] sm:$0xff]
  %v1167 = vld [vmem:[%s1126 + $0x140] sm:$0xff]
  %v1168 = vld [vmem:[%s1126 + $0x148] sm:$0xff]
  %v1169 = vld [vmem:[%s1126 + $0x150] sm:$0xff]
  %v1170 = vld [vmem:[%s1126 + $0x158] sm:$0xff]
  %v1171 = vld [vmem:[%s1126 + $0x160] sm:$0xff]
  %v1172 = vld [vmem:[%s1126 + $0x168] sm:$0xff]
  %v1173 = vld [vmem:[%s1126 + $0x170] sm:$0xff]
  %v1174 = vld [vmem:[%s1126 + $0x178] sm:$0xff]
  %v1175 = vld [vmem:[%s1126 + $0x180] sm:$0xff]
  %v1176 = vld [vmem:[%s1126 + $0x188] sm:$0xff]
  %v1177 = vld [vmem:[%s1126 + $0x190] sm:$0xff]
  %v1178 = vld [vmem:[%s1126 + $0x198] sm:$0xff]
  %v1179 = vld [vmem:[%s1126 + $0x1a0] sm:$0xff]
  %v1180 = vld [vmem:[%s1126 + $0x1a8] sm:$0xff]
  %v1181 = vld [vmem:[%s1126 + $0x1b0] sm:$0xff]
  %v1182 = vld [vmem:[%s1126 + $0x1b8] sm:$0xff]
  %v1183 = vld [vmem:[%s1126 + $0x1c0] sm:$0xff]
  %v1184 = vld [vmem:[%s1126 + $0x1c8] sm:$0xff]
  %v1185 = vld [vmem:[%s1126 + $0x1d0] sm:$0xff]
  %v1186 = vld [vmem:[%s1126 + $0x1d8] sm:$0xff]
  %v1187 = vld [vmem:[%s1126 + $0x1e0] sm:$0xff]
  %v1188 = vld [vmem:[%s1126 + $0x1e8] sm:$0xff]
  %v1189 = vld [vmem:[%s1126 + $0x1f0] sm:$0xff]
  %v1190 = vld [vmem:[%s1126 + $0x1f8] sm:$0xff]
  %v1191 = vld [vmem:[%s1126 + $0x200] sm:$0xff]
  %v1192 = vld [vmem:[%s1126 + $0x208] sm:$0xff]
  %v1193 = vld [vmem:[%s1126 + $0x210] sm:$0xff]
  %v1194 = vld [vmem:[%s1126 + $0x218] sm:$0xff]
  %v1195 = vld [vmem:[%s1126 + $0x220] sm:$0xff]
  %v1196 = vld [vmem:[%s1126 + $0x228] sm:$0xff]
  %v1197 = vld [vmem:[%s1126 + $0x230] sm:$0xff]
  %v1198 = vld [vmem:[%s1126 + $0x238] sm:$0xff]
  %v1199 = vld [vmem:[%s1126 + $0x240] sm:$0xff]
  %v1200 = vld [vmem:[%s1126 + $0x248] sm:$0xff]
  %v1201 = vld [vmem:[%s1126 + $0x250] sm:$0xff]
  %v1202 = vld [vmem:[%s1126 + $0x258] sm:$0xff]
  %v1203 = vld [vmem:[%s1126 + $0x260] sm:$0xff]
  %v1204 = vld [vmem:[%s1126 + $0x268] sm:$0xff]
  %v1205 = vld [vmem:[%s1126 + $0x270] sm:$0xff]
  %v1206 = vld [vmem:[%s1126 + $0x278] sm:$0xff]
  %v1207 = vld [vmem:[%s1126 + $0x280] sm:$0xff]
  %v1208 = vld [vmem:[%s1126 + $0x288] sm:$0xff]
  %v1209 = vld [vmem:[%s1126 + $0x290] sm:$0xff]
  %v1210 = vld [vmem:[%s1126 + $0x298] sm:$0xff]
  %v1211 = vld [vmem:[%s1126 + $0x2a0] sm:$0xff]
  %v1212 = vld [vmem:[%s1126 + $0x2a8] sm:$0xff]
  %v1213 = vld [vmem:[%s1126 + $0x2b0] sm:$0xff]
  %v1214 = vld [vmem:[%s1126 + $0x2b8] sm:$0xff]
  %vm1221 = vcmask 1043456
  %v1222 = vrot.slane %v1120, 4
  %v1223 = vrot.slane %v21, 4
  %v1224 = vsel %vm1221, %v1222, %v1223
  %v1225 = vrot.slane %v1121, 4
  %v1226 = vrot.slane %v22, 4
  %v1227 = vsel %vm1221, %v1225, %v1226
  %v1228 = vrot.slane %v1122, 4
  %v1229 = vrot.slane %v23, 4
  %v1230 = vsel %vm1221, %v1228, %v1229
  %v1231 = vrot.slane %v1123, 4
  %v1232 = vsel %vm1221, %v1223, %v1231
  %v1233 = vrot.slane %v1124, 4
  %v1234 = vsel %vm1221, %v1226, %v1233
  %v1235 = vrot.slane %v1125, 4
  %v1236 = vsel %vm1221, %v1229, %v1235
  %v1241 = vsel %vm236, %v1230, 0
  %v1243 = vsel %vm236, %v1236, 0
  %1245 = vmatprep.subr.mxu0 %v1158
  %1246 = vmatpush1.msra.mxu0 %v1157
  %1247 = vmatprep.subr.mxu0 %v1156
  %1248 = vmatpush1.msra.mxu0 %v1155
  %1249 = vmatprep.subr.mxu0 %v1154
  %1250 = vmatpush1.msra.mxu0 %v1153
  %1251 = vmatprep.subr.mxu0 %v1152
  %1252 = vmatpush1.msra.mxu0 %v1151
  %1253 = vmatprep.subr.mxu0 %v1150
  %1254 = vmatpush1.msra.mxu0 %v1149
  %1255 = vmatprep.subr.mxu0 %v1148
  %1256 = vmatpush1.msra.mxu0 %v1147
  %1257 = vmatprep.subr.mxu0 %v1146
  %1258 = vmatpush1.msra.mxu0 %v1145
  %1259 = vmatprep.subr.mxu0 %v1144
  %1260 = vmatpush1.msra.mxu0 %v1143
  %1261 = vmatprep.subr.mxu0 %v1142
  %1262 = vmatpush1.msra.mxu0 %v1141
  %1263 = vmatprep.subr.mxu0 %v1140
  %1264 = vmatpush1.msra.mxu0 %v1139
  %1265 = vmatprep.subr.mxu0 %v1138
  %1266 = vmatpush1.msra.mxu0 %v1137
  %1267 = vmatprep.subr.mxu0 %v1136
  %1268 = vmatpush1.msra.mxu0 %v1135
  %1269 = vmatprep.subr.mxu0 %v1134
  %1270 = vmatpush1.msra.mxu0 %v1133
  %1271 = vmatprep.subr.mxu0 %v1132
  %1272 = vmatpush1.msra.mxu0 %v1131
  %1273 = vmatprep.subr.mxu0 %v1130
  %1274 = vmatpush1.msra.mxu0 %v1129
  %1275 = vmatprep.subr.mxu0 %v1128
  %1276 = vmatpush1.msra.mxu0 %v1127
  %1277 = vmatprep.subr.mxu0 %v1190
  %1278 = vmatpush2.msra.mxu0 %v1189
  %1279 = vmatprep.subr.mxu0 %v1188
  %1280 = vmatpush2.msra.mxu0 %v1187
  %1281 = vmatprep.subr.mxu0 %v1186
  %1282 = vmatpush2.msra.mxu0 %v1185
  %1283 = vmatprep.subr.mxu0 %v1184
  %1284 = vmatpush2.msra.mxu0 %v1183
  %1285 = vmatprep.subr.mxu0 %v1182
  %1286 = vmatpush2.msra.mxu0 %v1181
  %1287 = vmatprep.subr.mxu0 %v1180
  %1288 = vmatpush2.msra.mxu0 %v1179
  %1289 = vmatprep.subr.mxu0 %v1178
  %1290 = vmatpush2.msra.mxu0 %v1177
  %1291 = vmatprep.subr.mxu0 %v1176
  %1292 = vmatpush2.msra.mxu0 %v1175
  %1293 = vmatprep.subr.mxu0 %v1174
  %1294 = vmatpush2.msra.mxu0 %v1173
  %1295 = vmatprep.subr.mxu0 %v1172
  %1296 = vmatpush2.msra.mxu0 %v1171
  %1297 = vmatprep.subr.mxu0 %v1170
  %1298 = vmatpush2.msra.mxu0 %v1169
  %1299 = vmatprep.subr.mxu0 %v1168
  %1300 = vmatpush2.msra.mxu0 %v1167
  %1301 = vmatprep.subr.mxu0 %v1166
  %1302 = vmatpush2.msra.mxu0 %v1165
  %1303 = vmatprep.subr.mxu0 %v1164
  %1304 = vmatpush2.msra.mxu0 %v1163
  %1305 = vmatprep.subr.mxu0 %v1162
  %1306 = vmatpush2.msra.mxu0 %v1161
  %1307 = vmatprep.subr.mxu0 %v1160
  %1308 = vmatpush2.msra.mxu0 %v1159
  %1309 = vmatprep.mubr.f32.mxu0 %v1227
  %1310 = vmatmul.mubr.f32.gmra.mxu0 %v1224
  %v1311 = vpop.f32.mrf.mxu0
  %v1312 = vadd.f32 0.0, %v1311
  %v1313 = vpop.f32.mrf.mxu0
  %v1314 = vadd.f32 0.0, %v1313
  %1315 = vmatprep.mubr.f32.mxu0 %v1234
  %1316 = vmatmul.mubr.f32.gmra.mxu0 %v1232
  %v1317 = vpop.f32.mrf.mxu0
  %v1318 = vadd.f32 0.0, %v1317
  %v1319 = vpop.f32.mrf.mxu0
  %v1320 = vadd.f32 0.0, %v1319
  %1321 = vdwg.mxu0
  %1322 = vmatprep.subr.mxu0 0.0
  %1323 = vmatpush1.msra.mxu0 0.0
  %1324 = vmatprep.subr.mxu0 0.0
  %1325 = vmatpush1.msra.mxu0 0.0
  %1326 = vmatprep.subr.mxu0 0.0
  %1327 = vmatpush1.msra.mxu0 0.0
  %1328 = vmatprep.subr.mxu0 0.0
  %1329 = vmatpush1.msra.mxu0 0.0
  %1330 = vmatprep.subr.mxu0 %v1214
  %1331 = vmatpush1.msra.mxu0 %v1213
  %1332 = vmatprep.subr.mxu0 %v1212
  %1333 = vmatpush1.msra.mxu0 %v1211
  %1334 = vmatprep.subr.mxu0 %v1210
  %1335 = vmatpush1.msra.mxu0 %v1209
  %1336 = vmatprep.subr.mxu0 %v1208
  %1337 = vmatpush1.msra.mxu0 %v1207
  %1338 = vmatprep.subr.mxu0 %v1206
  %1339 = vmatpush1.msra.mxu0 %v1205
  %1340 = vmatprep.subr.mxu0 %v1204
  %1341 = vmatpush1.msra.mxu0 %v1203
  %1342 = vmatprep.subr.mxu0 %v1202
  %1343 = vmatpush1.msra.mxu0 %v1201
  %1344 = vmatprep.subr.mxu0 %v1200
  %1345 = vmatpush1.msra.mxu0 %v1199
  %1346 = vmatprep.subr.mxu0 %v1198
  %1347 = vmatpush1.msra.mxu0 %v1197
  %1348 = vmatprep.subr.mxu0 %v1196
  %1349 = vmatpush1.msra.mxu0 %v1195
  %1350 = vmatprep.subr.mxu0 %v1194
  %1351 = vmatpush1.msra.mxu0 %v1193
  %1352 = vmatprep.subr.mxu0 %v1192
  %1353 = vmatpush1.msra.mxu0 %v1191
  %1354 = vmatprep.subr.mxu0 0.0
  %1355 = vmatpush2.msra.mxu0 0.0
  %1356 = vmatprep.subr.mxu0 0.0
  %1357 = vmatpush2.msra.mxu0 0.0
  %1358 = vmatprep.subr.mxu0 0.0
  %1359 = vmatpush2.msra.mxu0 0.0
  %1360 = vmatprep.subr.mxu0 0.0
  %1361 = vmatpush2.msra.mxu0 0.0
  %1362 = vmatprep.subr.mxu0 0.0
  %1363 = vmatpush2.msra.mxu0 0.0
  %1364 = vmatprep.subr.mxu0 0.0
  %1365 = vmatpush2.msra.mxu0 0.0
  %1366 = vmatprep.subr.mxu0 0.0
  %1367 = vmatpush2.msra.mxu0 0.0
  %1368 = vmatprep.subr.mxu0 0.0
  %1369 = vmatpush2.msra.mxu0 0.0
  %1370 = vmatprep.subr.mxu0 0.0
  %1371 = vmatpush2.msra.mxu0 0.0
  %1372 = vmatprep.subr.mxu0 0.0
  %1373 = vmatpush2.msra.mxu0 0.0
  %1374 = vmatprep.subr.mxu0 0.0
  %1375 = vmatpush2.msra.mxu0 0.0
  %1376 = vmatprep.subr.mxu0 0.0
  %1377 = vmatpush2.msra.mxu0 0.0
  %1378 = vmatprep.subr.mxu0 0.0
  %1379 = vmatpush2.msra.mxu0 0.0
  %1380 = vmatprep.subr.mxu0 0.0
  %1381 = vmatpush2.msra.mxu0 0.0
  %1382 = vmatprep.subr.mxu0 0.0
  %1383 = vmatpush2.msra.mxu0 0.0
  %1384 = vmatprep.subr.mxu0 0.0
  %1385 = vmatpush2.msra.mxu0 0.0
  %1386 = vmatprep.mubr.f32.mxu0 0.0
  %1387 = vmatmul.mubr.f32.gmra.mxu0 %v1241
  %v1388 = vpop.f32.mrf.mxu0
  %v1389 = vadd.f32 %v1312, %v1388
  %v1390 = vpop.f32.mrf.mxu0
  %v1391 = vadd.f32 %v1314, %v1390
  %1392 = vmatprep.mubr.f32.mxu0 0.0
  %1393 = vmatmul.mubr.f32.gmra.mxu0 %v1243
  %v1394 = vpop.f32.mrf.mxu0
  %v1395 = vadd.f32 %v1318, %v1394
  %v1396 = vpop.f32.mrf.mxu0
  %v1397 = vadd.f32 %v1320, %v1396
  %1398 = vdwg.mxu0
  %v1399 = vadd.f32 %v1116, %v1389
  %v1400 = vadd.f32 %v1117, %v1391
  %v1401 = vadd.f32 %v1118, %v1395
  %v1402 = vadd.f32 %v1119, %v1397
  %v1403 = vld [vmem:[%s0] sm:$0xe0]
  %v1404 = vld [vmem:[%s0 + $0x8] sm:$0xe0]
  %v1405 = vld [vmem:[%s0 + $0x10] sm:$0xe0]
  %v1406 = vld [vmem:[%s0 + $0x30] sm:$0x1f]
  %v1407 = vld [vmem:[%s0 + $0x38] sm:$0x1f]
  %v1408 = vld [vmem:[%s0 + $0x40] sm:$0x1f]
  %s1409 = scalar_lea.vmem %s1, 3520
  %v1410 = vld [vmem:[%s1409] sm:$0xff]
  %v1411 = vld [vmem:[%s1409 + $0x8] sm:$0xff]
  %v1412 = vld [vmem:[%s1409 + $0x10] sm:$0xff]
  %v1413 = vld [vmem:[%s1409 + $0x18] sm:$0xff]
  %v1414 = vld [vmem:[%s1409 + $0x20] sm:$0xff]
  %v1415 = vld [vmem:[%s1409 + $0x28] sm:$0xff]
  %v1416 = vld [vmem:[%s1409 + $0x30] sm:$0xff]
  %v1417 = vld [vmem:[%s1409 + $0x38] sm:$0xff]
  %v1418 = vld [vmem:[%s1409 + $0x40] sm:$0xff]
  %v1419 = vld [vmem:[%s1409 + $0x48] sm:$0xff]
  %v1420 = vld [vmem:[%s1409 + $0x50] sm:$0xff]
  %v1421 = vld [vmem:[%s1409 + $0x58] sm:$0xff]
  %v1422 = vld [vmem:[%s1409 + $0x60] sm:$0xff]
  %v1423 = vld [vmem:[%s1409 + $0x68] sm:$0xff]
  %v1424 = vld [vmem:[%s1409 + $0x70] sm:$0xff]
  %v1425 = vld [vmem:[%s1409 + $0x78] sm:$0xff]
  %v1426 = vld [vmem:[%s1409 + $0x80] sm:$0xff]
  %v1427 = vld [vmem:[%s1409 + $0x88] sm:$0xff]
  %v1428 = vld [vmem:[%s1409 + $0x90] sm:$0xff]
  %v1429 = vld [vmem:[%s1409 + $0x98] sm:$0xff]
  %v1430 = vld [vmem:[%s1409 + $0xa0] sm:$0xff]
  %v1431 = vld [vmem:[%s1409 + $0xa8] sm:$0xff]
  %v1432 = vld [vmem:[%s1409 + $0xb0] sm:$0xff]
  %v1433 = vld [vmem:[%s1409 + $0xb8] sm:$0xff]
  %v1434 = vld [vmem:[%s1409 + $0xc0] sm:$0xff]
  %v1435 = vld [vmem:[%s1409 + $0xc8] sm:$0xff]
  %v1436 = vld [vmem:[%s1409 + $0xd0] sm:$0xff]
  %v1437 = vld [vmem:[%s1409 + $0xd8] sm:$0xff]
  %v1438 = vld [vmem:[%s1409 + $0xe0] sm:$0xff]
  %v1439 = vld [vmem:[%s1409 + $0xe8] sm:$0xff]
  %v1440 = vld [vmem:[%s1409 + $0xf0] sm:$0xff]
  %v1441 = vld [vmem:[%s1409 + $0xf8] sm:$0xff]
  %v1442 = vld [vmem:[%s1409 + $0x100] sm:$0xff]
  %v1443 = vld [vmem:[%s1409 + $0x108] sm:$0xff]
  %v1444 = vld [vmem:[%s1409 + $0x110] sm:$0xff]
  %v1445 = vld [vmem:[%s1409 + $0x118] sm:$0xff]
  %v1446 = vld [vmem:[%s1409 + $0x120] sm:$0xff]
  %v1447 = vld [vmem:[%s1409 + $0x128] sm:$0xff]
  %v1448 = vld [vmem:[%s1409 + $0x130] sm:$0xff]
  %v1449 = vld [vmem:[%s1409 + $0x138] sm:$0xff]
  %v1450 = vld [vmem:[%s1409 + $0x140] sm:$0xff]
  %v1451 = vld [vmem:[%s1409 + $0x148] sm:$0xff]
  %v1452 = vld [vmem:[%s1409 + $0x150] sm:$0xff]
  %v1453 = vld [vmem:[%s1409 + $0x158] sm:$0xff]
  %v1454 = vld [vmem:[%s1409 + $0x160] sm:$0xff]
  %v1455 = vld [vmem:[%s1409 + $0x168] sm:$0xff]
  %v1456 = vld [vmem:[%s1409 + $0x170] sm:$0xff]
  %v1457 = vld [vmem:[%s1409 + $0x178] sm:$0xff]
  %v1458 = vld [vmem:[%s1409 + $0x180] sm:$0xff]
  %v1459 = vld [vmem:[%s1409 + $0x188] sm:$0xff]
  %v1460 = vld [vmem:[%s1409 + $0x190] sm:$0xff]
  %v1461 = vld [vmem:[%s1409 + $0x198] sm:$0xff]
  %v1462 = vld [vmem:[%s1409 + $0x1a0] sm:$0xff]
  %v1463 = vld [vmem:[%s1409 + $0x1a8] sm:$0xff]
  %v1464 = vld [vmem:[%s1409 + $0x1b0] sm:$0xff]
  %v1465 = vld [vmem:[%s1409 + $0x1b8] sm:$0xff]
  %v1466 = vld [vmem:[%s1409 + $0x1c0] sm:$0xff]
  %v1467 = vld [vmem:[%s1409 + $0x1c8] sm:$0xff]
  %v1468 = vld [vmem:[%s1409 + $0x1d0] sm:$0xff]
  %v1469 = vld [vmem:[%s1409 + $0x1d8] sm:$0xff]
  %v1470 = vld [vmem:[%s1409 + $0x1e0] sm:$0xff]
  %v1471 = vld [vmem:[%s1409 + $0x1e8] sm:$0xff]
  %v1472 = vld [vmem:[%s1409 + $0x1f0] sm:$0xff]
  %v1473 = vld [vmem:[%s1409 + $0x1f8] sm:$0xff]
  %v1474 = vld [vmem:[%s1409 + $0x200] sm:$0xff]
  %v1475 = vld [vmem:[%s1409 + $0x208] sm:$0xff]
  %v1476 = vld [vmem:[%s1409 + $0x210] sm:$0xff]
  %v1477 = vld [vmem:[%s1409 + $0x218] sm:$0xff]
  %v1478 = vld [vmem:[%s1409 + $0x220] sm:$0xff]
  %v1479 = vld [vmem:[%s1409 + $0x228] sm:$0xff]
  %v1480 = vld [vmem:[%s1409 + $0x230] sm:$0xff]
  %v1481 = vld [vmem:[%s1409 + $0x238] sm:$0xff]
  %v1482 = vld [vmem:[%s1409 + $0x240] sm:$0xff]
  %v1483 = vld [vmem:[%s1409 + $0x248] sm:$0xff]
  %v1484 = vld [vmem:[%s1409 + $0x250] sm:$0xff]
  %v1485 = vld [vmem:[%s1409 + $0x258] sm:$0xff]
  %v1486 = vld [vmem:[%s1409 + $0x260] sm:$0xff]
  %v1487 = vld [vmem:[%s1409 + $0x268] sm:$0xff]
  %v1488 = vld [vmem:[%s1409 + $0x270] sm:$0xff]
  %v1489 = vld [vmem:[%s1409 + $0x278] sm:$0xff]
  %v1490 = vld [vmem:[%s1409 + $0x280] sm:$0xff]
  %v1491 = vld [vmem:[%s1409 + $0x288] sm:$0xff]
  %v1492 = vld [vmem:[%s1409 + $0x290] sm:$0xff]
  %v1493 = vld [vmem:[%s1409 + $0x298] sm:$0xff]
  %v1494 = vld [vmem:[%s1409 + $0x2a0] sm:$0xff]
  %v1495 = vld [vmem:[%s1409 + $0x2a8] sm:$0xff]
  %v1496 = vld [vmem:[%s1409 + $0x2b0] sm:$0xff]
  %v1497 = vld [vmem:[%s1409 + $0x2b8] sm:$0xff]
  %vm1504 = vcmask 1042432
  %v1505 = vrot.slane %v1403, 5
  %v1506 = vrot.slane %v21, 5
  %v1507 = vsel %vm1504, %v1505, %v1506
  %v1508 = vrot.slane %v1404, 5
  %v1509 = vrot.slane %v22, 5
  %v1510 = vsel %vm1504, %v1508, %v1509
  %v1511 = vrot.slane %v1405, 5
  %v1512 = vrot.slane %v23, 5
  %v1513 = vsel %vm1504, %v1511, %v1512
  %v1514 = vrot.slane %v1406, 5
  %v1515 = vsel %vm1504, %v1506, %v1514
  %v1516 = vrot.slane %v1407, 5
  %v1517 = vsel %vm1504, %v1509, %v1516
  %v1518 = vrot.slane %v1408, 5
  %v1519 = vsel %vm1504, %v1512, %v1518
  %v1524 = vsel %vm236, %v1513, 0
  %v1526 = vsel %vm236, %v1519, 0
  %1528 = vmatprep.subr.mxu0 %v1441
  %1529 = vmatpush1.msra.mxu0 %v1440
  %1530 = vmatprep.subr.mxu0 %v1439
  %1531 = vmatpush1.msra.mxu0 %v1438
  %1532 = vmatprep.subr.mxu0 %v1437
  %1533 = vmatpush1.msra.mxu0 %v1436
  %1534 = vmatprep.subr.mxu0 %v1435
  %1535 = vmatpush1.msra.mxu0 %v1434
  %1536 = vmatprep.subr.mxu0 %v1433
  %1537 = vmatpush1.msra.mxu0 %v1432
  %1538 = vmatprep.subr.mxu0 %v1431
  %1539 = vmatpush1.msra.mxu0 %v1430
  %1540 = vmatprep.subr.mxu0 %v1429
  %1541 = vmatpush1.msra.mxu0 %v1428
  %1542 = vmatprep.subr.mxu0 %v1427
  %1543 = vmatpush1.msra.mxu0 %v1426
  %1544 = vmatprep.subr.mxu0 %v1425
  %1545 = vmatpush1.msra.mxu0 %v1424
  %1546 = vmatprep.subr.mxu0 %v1423
  %1547 = vmatpush1.msra.mxu0 %v1422
  %1548 = vmatprep.subr.mxu0 %v1421
  %1549 = vmatpush1.msra.mxu0 %v1420
  %1550 = vmatprep.subr.mxu0 %v1419
  %1551 = vmatpush1.msra.mxu0 %v1418
  %1552 = vmatprep.subr.mxu0 %v1417
  %1553 = vmatpush1.msra.mxu0 %v1416
  %1554 = vmatprep.subr.mxu0 %v1415
  %1555 = vmatpush1.msra.mxu0 %v1414
  %1556 = vmatprep.subr.mxu0 %v1413
  %1557 = vmatpush1.msra.mxu0 %v1412
  %1558 = vmatprep.subr.mxu0 %v1411
  %1559 = vmatpush1.msra.mxu0 %v1410
  %1560 = vmatprep.subr.mxu0 %v1473
  %1561 = vmatpush2.msra.mxu0 %v1472
  %1562 = vmatprep.subr.mxu0 %v1471
  %1563 = vmatpush2.msra.mxu0 %v1470
  %1564 = vmatprep.subr.mxu0 %v1469
  %1565 = vmatpush2.msra.mxu0 %v1468
  %1566 = vmatprep.subr.mxu0 %v1467
  %1567 = vmatpush2.msra.mxu0 %v1466
  %1568 = vmatprep.subr.mxu0 %v1465
  %1569 = vmatpush2.msra.mxu0 %v1464
  %1570 = vmatprep.subr.mxu0 %v1463
  %1571 = vmatpush2.msra.mxu0 %v1462
  %1572 = vmatprep.subr.mxu0 %v1461
  %1573 = vmatpush2.msra.mxu0 %v1460
  %1574 = vmatprep.subr.mxu0 %v1459
  %1575 = vmatpush2.msra.mxu0 %v1458
  %1576 = vmatprep.subr.mxu0 %v1457
  %1577 = vmatpush2.msra.mxu0 %v1456
  %1578 = vmatprep.subr.mxu0 %v1455
  %1579 = vmatpush2.msra.mxu0 %v1454
  %1580 = vmatprep.subr.mxu0 %v1453
  %1581 = vmatpush2.msra.mxu0 %v1452
  %1582 = vmatprep.subr.mxu0 %v1451
  %1583 = vmatpush2.msra.mxu0 %v1450
  %1584 = vmatprep.subr.mxu0 %v1449
  %1585 = vmatpush2.msra.mxu0 %v1448
  %1586 = vmatprep.subr.mxu0 %v1447
  %1587 = vmatpush2.msra.mxu0 %v1446
  %1588 = vmatprep.subr.mxu0 %v1445
  %1589 = vmatpush2.msra.mxu0 %v1444
  %1590 = vmatprep.subr.mxu0 %v1443
  %1591 = vmatpush2.msra.mxu0 %v1442
  %1592 = vmatprep.mubr.f32.mxu0 %v1510
  %1593 = vmatmul.mubr.f32.gmra.mxu0 %v1507
  %v1594 = vpop.f32.mrf.mxu0
  %v1595 = vadd.f32 0.0, %v1594
  %v1596 = vpop.f32.mrf.mxu0
  %v1597 = vadd.f32 0.0, %v1596
  %1598 = vmatprep.mubr.f32.mxu0 %v1517
  %1599 = vmatmul.mubr.f32.gmra.mxu0 %v1515
  %v1600 = vpop.f32.mrf.mxu0
  %v1601 = vadd.f32 0.0, %v1600
  %v1602 = vpop.f32.mrf.mxu0
  %v1603 = vadd.f32 0.0, %v1602
  %1604 = vdwg.mxu0
  %1605 = vmatprep.subr.mxu0 0.0
  %1606 = vmatpush1.msra.mxu0 0.0
  %1607 = vmatprep.subr.mxu0 0.0
  %1608 = vmatpush1.msra.mxu0 0.0
  %1609 = vmatprep.subr.mxu0 0.0
  %1610 = vmatpush1.msra.mxu0 0.0
  %1611 = vmatprep.subr.mxu0 0.0
  %1612 = vmatpush1.msra.mxu0 0.0
  %1613 = vmatprep.subr.mxu0 %v1497
  %1614 = vmatpush1.msra.mxu0 %v1496
  %1615 = vmatprep.subr.mxu0 %v1495
  %1616 = vmatpush1.msra.mxu0 %v1494
  %1617 = vmatprep.subr.mxu0 %v1493
  %1618 = vmatpush1.msra.mxu0 %v1492
  %1619 = vmatprep.subr.mxu0 %v1491
  %1620 = vmatpush1.msra.mxu0 %v1490
  %1621 = vmatprep.subr.mxu0 %v1489
  %1622 = vmatpush1.msra.mxu0 %v1488
  %1623 = vmatprep.subr.mxu0 %v1487
  %1624 = vmatpush1.msra.mxu0 %v1486
  %1625 = vmatprep.subr.mxu0 %v1485
  %1626 = vmatpush1.msra.mxu0 %v1484
  %1627 = vmatprep.subr.mxu0 %v1483
  %1628 = vmatpush1.msra.mxu0 %v1482
  %1629 = vmatprep.subr.mxu0 %v1481
  %1630 = vmatpush1.msra.mxu0 %v1480
  %1631 = vmatprep.subr.mxu0 %v1479
  %1632 = vmatpush1.msra.mxu0 %v1478
  %1633 = vmatprep.subr.mxu0 %v1477
  %1634 = vmatpush1.msra.mxu0 %v1476
  %1635 = vmatprep.subr.mxu0 %v1475
  %1636 = vmatpush1.msra.mxu0 %v1474
  %1637 = vmatprep.subr.mxu0 0.0
  %1638 = vmatpush2.msra.mxu0 0.0
  %1639 = vmatprep.subr.mxu0 0.0
  %1640 = vmatpush2.msra.mxu0 0.0
  %1641 = vmatprep.subr.mxu0 0.0
  %1642 = vmatpush2.msra.mxu0 0.0
  %1643 = vmatprep.subr.mxu0 0.0
  %1644 = vmatpush2.msra.mxu0 0.0
  %1645 = vmatprep.subr.mxu0 0.0
  %1646 = vmatpush2.msra.mxu0 0.0
  %1647 = vmatprep.subr.mxu0 0.0
  %1648 = vmatpush2.msra.mxu0 0.0
  %1649 = vmatprep.subr.mxu0 0.0
  %1650 = vmatpush2.msra.mxu0 0.0
  %1651 = vmatprep.subr.mxu0 0.0
  %1652 = vmatpush2.msra.mxu0 0.0
  %1653 = vmatprep.subr.mxu0 0.0
  %1654 = vmatpush2.msra.mxu0 0.0
  %1655 = vmatprep.subr.mxu0 0.0
  %1656 = vmatpush2.msra.mxu0 0.0
  %1657 = vmatprep.subr.mxu0 0.0
  %1658 = vmatpush2.msra.mxu0 0.0
  %1659 = vmatprep.subr.mxu0 0.0
  %1660 = vmatpush2.msra.mxu0 0.0
  %1661 = vmatprep.subr.mxu0 0.0
  %1662 = vmatpush2.msra.mxu0 0.0
  %1663 = vmatprep.subr.mxu0 0.0
  %1664 = vmatpush2.msra.mxu0 0.0
  %1665 = vmatprep.subr.mxu0 0.0
  %1666 = vmatpush2.msra.mxu0 0.0
  %1667 = vmatprep.subr.mxu0 0.0
  %1668 = vmatpush2.msra.mxu0 0.0
  %1669 = vmatprep.mubr.f32.mxu0 0.0
  %1670 = vmatmul.mubr.f32.gmra.mxu0 %v1524
  %v1671 = vpop.f32.mrf.mxu0
  %v1672 = vadd.f32 %v1595, %v1671
  %v1673 = vpop.f32.mrf.mxu0
  %v1674 = vadd.f32 %v1597, %v1673
  %1675 = vmatprep.mubr.f32.mxu0 0.0
  %1676 = vmatmul.mubr.f32.gmra.mxu0 %v1526
  %v1677 = vpop.f32.mrf.mxu0
  %v1678 = vadd.f32 %v1601, %v1677
  %v1679 = vpop.f32.mrf.mxu0
  %v1680 = vadd.f32 %v1603, %v1679
  %1681 = vdwg.mxu0
  %v1682 = vadd.f32 %v1399, %v1672
  %v1683 = vadd.f32 %v1400, %v1674
  %v1684 = vadd.f32 %v1401, %v1678
  %v1685 = vadd.f32 %v1402, %v1680
  %v1686 = vld [vmem:[%s0] sm:$0xc0]
  %v1687 = vld [vmem:[%s0 + $0x8] sm:$0xc0]
  %v1688 = vld [vmem:[%s0 + $0x10] sm:$0xc0]
  %v1689 = vld [vmem:[%s0 + $0x30] sm:$0x3f]
  %v1690 = vld [vmem:[%s0 + $0x38] sm:$0x3f]
  %v1691 = vld [vmem:[%s0 + $0x40] sm:$0x3f]
  %s1692 = scalar_lea.vmem %s1, 4224
  %v1693 = vld [vmem:[%s1692] sm:$0xff]
  %v1694 = vld [vmem:[%s1692 + $0x8] sm:$0xff]
  %v1695 = vld [vmem:[%s1692 + $0x10] sm:$0xff]
  %v1696 = vld [vmem:[%s1692 + $0x18] sm:$0xff]
  %v1697 = vld [vmem:[%s1692 + $0x20] sm:$0xff]
  %v1698 = vld [vmem:[%s1692 + $0x28] sm:$0xff]
  %v1699 = vld [vmem:[%s1692 + $0x30] sm:$0xff]
  %v1700 = vld [vmem:[%s1692 + $0x38] sm:$0xff]
  %v1701 = vld [vmem:[%s1692 + $0x40] sm:$0xff]
  %v1702 = vld [vmem:[%s1692 + $0x48] sm:$0xff]
  %v1703 = vld [vmem:[%s1692 + $0x50] sm:$0xff]
  %v1704 = vld [vmem:[%s1692 + $0x58] sm:$0xff]
  %v1705 = vld [vmem:[%s1692 + $0x60] sm:$0xff]
  %v1706 = vld [vmem:[%s1692 + $0x68] sm:$0xff]
  %v1707 = vld [vmem:[%s1692 + $0x70] sm:$0xff]
  %v1708 = vld [vmem:[%s1692 + $0x78] sm:$0xff]
  %v1709 = vld [vmem:[%s1692 + $0x80] sm:$0xff]
  %v1710 = vld [vmem:[%s1692 + $0x88] sm:$0xff]
  %v1711 = vld [vmem:[%s1692 + $0x90] sm:$0xff]
  %v1712 = vld [vmem:[%s1692 + $0x98] sm:$0xff]
  %v1713 = vld [vmem:[%s1692 + $0xa0] sm:$0xff]
  %v1714 = vld [vmem:[%s1692 + $0xa8] sm:$0xff]
  %v1715 = vld [vmem:[%s1692 + $0xb0] sm:$0xff]
  %v1716 = vld [vmem:[%s1692 + $0xb8] sm:$0xff]
  %v1717 = vld [vmem:[%s1692 + $0xc0] sm:$0xff]
  %v1718 = vld [vmem:[%s1692 + $0xc8] sm:$0xff]
  %v1719 = vld [vmem:[%s1692 + $0xd0] sm:$0xff]
  %v1720 = vld [vmem:[%s1692 + $0xd8] sm:$0xff]
  %v1721 = vld [vmem:[%s1692 + $0xe0] sm:$0xff]
  %v1722 = vld [vmem:[%s1692 + $0xe8] sm:$0xff]
  %v1723 = vld [vmem:[%s1692 + $0xf0] sm:$0xff]
  %v1724 = vld [vmem:[%s1692 + $0xf8] sm:$0xff]
  %v1725 = vld [vmem:[%s1692 + $0x100] sm:$0xff]
  %v1726 = vld [vmem:[%s1692 + $0x108] sm:$0xff]
  %v1727 = vld [vmem:[%s1692 + $0x110] sm:$0xff]
  %v1728 = vld [vmem:[%s1692 + $0x118] sm:$0xff]
  %v1729 = vld [vmem:[%s1692 + $0x120] sm:$0xff]
  %v1730 = vld [vmem:[%s1692 + $0x128] sm:$0xff]
  %v1731 = vld [vmem:[%s1692 + $0x130] sm:$0xff]
  %v1732 = vld [vmem:[%s1692 + $0x138] sm:$0xff]
  %v1733 = vld [vmem:[%s1692 + $0x140] sm:$0xff]
  %v1734 = vld [vmem:[%s1692 + $0x148] sm:$0xff]
  %v1735 = vld [vmem:[%s1692 + $0x150] sm:$0xff]
  %v1736 = vld [vmem:[%s1692 + $0x158] sm:$0xff]
  %v1737 = vld [vmem:[%s1692 + $0x160] sm:$0xff]
  %v1738 = vld [vmem:[%s1692 + $0x168] sm:$0xff]
  %v1739 = vld [vmem:[%s1692 + $0x170] sm:$0xff]
  %v1740 = vld [vmem:[%s1692 + $0x178] sm:$0xff]
  %v1741 = vld [vmem:[%s1692 + $0x180] sm:$0xff]
  %v1742 = vld [vmem:[%s1692 + $0x188] sm:$0xff]
  %v1743 = vld [vmem:[%s1692 + $0x190] sm:$0xff]
  %v1744 = vld [vmem:[%s1692 + $0x198] sm:$0xff]
  %v1745 = vld [vmem:[%s1692 + $0x1a0] sm:$0xff]
  %v1746 = vld [vmem:[%s1692 + $0x1a8] sm:$0xff]
  %v1747 = vld [vmem:[%s1692 + $0x1b0] sm:$0xff]
  %v1748 = vld [vmem:[%s1692 + $0x1b8] sm:$0xff]
  %v1749 = vld [vmem:[%s1692 + $0x1c0] sm:$0xff]
  %v1750 = vld [vmem:[%s1692 + $0x1c8] sm:$0xff]
  %v1751 = vld [vmem:[%s1692 + $0x1d0] sm:$0xff]
  %v1752 = vld [vmem:[%s1692 + $0x1d8] sm:$0xff]
  %v1753 = vld [vmem:[%s1692 + $0x1e0] sm:$0xff]
  %v1754 = vld [vmem:[%s1692 + $0x1e8] sm:$0xff]
  %v1755 = vld [vmem:[%s1692 + $0x1f0] sm:$0xff]
  %v1756 = vld [vmem:[%s1692 + $0x1f8] sm:$0xff]
  %v1757 = vld [vmem:[%s1692 + $0x200] sm:$0xff]
  %v1758 = vld [vmem:[%s1692 + $0x208] sm:$0xff]
  %v1759 = vld [vmem:[%s1692 + $0x210] sm:$0xff]
  %v1760 = vld [vmem:[%s1692 + $0x218] sm:$0xff]
  %v1761 = vld [vmem:[%s1692 + $0x220] sm:$0xff]
  %v1762 = vld [vmem:[%s1692 + $0x228] sm:$0xff]
  %v1763 = vld [vmem:[%s1692 + $0x230] sm:$0xff]
  %v1764 = vld [vmem:[%s1692 + $0x238] sm:$0xff]
  %v1765 = vld [vmem:[%s1692 + $0x240] sm:$0xff]
  %v1766 = vld [vmem:[%s1692 + $0x248] sm:$0xff]
  %v1767 = vld [vmem:[%s1692 + $0x250] sm:$0xff]
  %v1768 = vld [vmem:[%s1692 + $0x258] sm:$0xff]
  %v1769 = vld [vmem:[%s1692 + $0x260] sm:$0xff]
  %v1770 = vld [vmem:[%s1692 + $0x268] sm:$0xff]
  %v1771 = vld [vmem:[%s1692 + $0x270] sm:$0xff]
  %v1772 = vld [vmem:[%s1692 + $0x278] sm:$0xff]
  %v1773 = vld [vmem:[%s1692 + $0x280] sm:$0xff]
  %v1774 = vld [vmem:[%s1692 + $0x288] sm:$0xff]
  %v1775 = vld [vmem:[%s1692 + $0x290] sm:$0xff]
  %v1776 = vld [vmem:[%s1692 + $0x298] sm:$0xff]
  %v1777 = vld [vmem:[%s1692 + $0x2a0] sm:$0xff]
  %v1778 = vld [vmem:[%s1692 + $0x2a8] sm:$0xff]
  %v1779 = vld [vmem:[%s1692 + $0x2b0] sm:$0xff]
  %v1780 = vld [vmem:[%s1692 + $0x2b8] sm:$0xff]
  %vm1787 = vcmask 1041408
  %v1788 = vrot.slane %v1686, 6
  %v1789 = vrot.slane %v21, 6
  %v1790 = vsel %vm1787, %v1788, %v1789
  %v1791 = vrot.slane %v1687, 6
  %v1792 = vrot.slane %v22, 6
  %v1793 = vsel %vm1787, %v1791, %v1792
  %v1794 = vrot.slane %v1688, 6
  %v1795 = vrot.slane %v23, 6
  %v1796 = vsel %vm1787, %v1794, %v1795
  %v1797 = vrot.slane %v1689, 6
  %v1798 = vsel %vm1787, %v1789, %v1797
  %v1799 = vrot.slane %v1690, 6
  %v1800 = vsel %vm1787, %v1792, %v1799
  %v1801 = vrot.slane %v1691, 6
  %v1802 = vsel %vm1787, %v1795, %v1801
  %v1807 = vsel %vm236, %v1796, 0
  %v1809 = vsel %vm236, %v1802, 0
  %1811 = vmatprep.subr.mxu0 %v1724
  %1812 = vmatpush1.msra.mxu0 %v1723
  %1813 = vmatprep.subr.mxu0 %v1722
  %1814 = vmatpush1.msra.mxu0 %v1721
  %1815 = vmatprep.subr.mxu0 %v1720
  %1816 = vmatpush1.msra.mxu0 %v1719
  %1817 = vmatprep.subr.mxu0 %v1718
  %1818 = vmatpush1.msra.mxu0 %v1717
  %1819 = vmatprep.subr.mxu0 %v1716
  %1820 = vmatpush1.msra.mxu0 %v1715
  %1821 = vmatprep.subr.mxu0 %v1714
  %1822 = vmatpush1.msra.mxu0 %v1713
  %1823 = vmatprep.subr.mxu0 %v1712
  %1824 = vmatpush1.msra.mxu0 %v1711
  %1825 = vmatprep.subr.mxu0 %v1710
  %1826 = vmatpush1.msra.mxu0 %v1709
  %1827 = vmatprep.subr.mxu0 %v1708
  %1828 = vmatpush1.msra.mxu0 %v1707
  %1829 = vmatprep.subr.mxu0 %v1706
  %1830 = vmatpush1.msra.mxu0 %v1705
  %1831 = vmatprep.subr.mxu0 %v1704
  %1832 = vmatpush1.msra.mxu0 %v1703
  %1833 = vmatprep.subr.mxu0 %v1702
  %1834 = vmatpush1.msra.mxu0 %v1701
  %1835 = vmatprep.subr.mxu0 %v1700
  %1836 = vmatpush1.msra.mxu0 %v1699
  %1837 = vmatprep.subr.mxu0 %v1698
  %1838 = vmatpush1.msra.mxu0 %v1697
  %1839 = vmatprep.subr.mxu0 %v1696
  %1840 = vmatpush1.msra.mxu0 %v1695
  %1841 = vmatprep.subr.mxu0 %v1694
  %1842 = vmatpush1.msra.mxu0 %v1693
  %1843 = vmatprep.subr.mxu0 %v1756
  %1844 = vmatpush2.msra.mxu0 %v1755
  %1845 = vmatprep.subr.mxu0 %v1754
  %1846 = vmatpush2.msra.mxu0 %v1753
  %1847 = vmatprep.subr.mxu0 %v1752
  %1848 = vmatpush2.msra.mxu0 %v1751
  %1849 = vmatprep.subr.mxu0 %v1750
  %1850 = vmatpush2.msra.mxu0 %v1749
  %1851 = vmatprep.subr.mxu0 %v1748
  %1852 = vmatpush2.msra.mxu0 %v1747
  %1853 = vmatprep.subr.mxu0 %v1746
  %1854 = vmatpush2.msra.mxu0 %v1745
  %1855 = vmatprep.subr.mxu0 %v1744
  %1856 = vmatpush2.msra.mxu0 %v1743
  %1857 = vmatprep.subr.mxu0 %v1742
  %1858 = vmatpush2.msra.mxu0 %v1741
  %1859 = vmatprep.subr.mxu0 %v1740
  %1860 = vmatpush2.msra.mxu0 %v1739
  %1861 = vmatprep.subr.mxu0 %v1738
  %1862 = vmatpush2.msra.mxu0 %v1737
  %1863 = vmatprep.subr.mxu0 %v1736
  %1864 = vmatpush2.msra.mxu0 %v1735
  %1865 = vmatprep.subr.mxu0 %v1734
  %1866 = vmatpush2.msra.mxu0 %v1733
  %1867 = vmatprep.subr.mxu0 %v1732
  %1868 = vmatpush2.msra.mxu0 %v1731
  %1869 = vmatprep.subr.mxu0 %v1730
  %1870 = vmatpush2.msra.mxu0 %v1729
  %1871 = vmatprep.subr.mxu0 %v1728
  %1872 = vmatpush2.msra.mxu0 %v1727
  %1873 = vmatprep.subr.mxu0 %v1726
  %1874 = vmatpush2.msra.mxu0 %v1725
  %1875 = vmatprep.mubr.f32.mxu0 %v1793
  %1876 = vmatmul.mubr.f32.gmra.mxu0 %v1790
  %v1877 = vpop.f32.mrf.mxu0
  %v1878 = vadd.f32 0.0, %v1877
  %v1879 = vpop.f32.mrf.mxu0
  %v1880 = vadd.f32 0.0, %v1879
  %1881 = vmatprep.mubr.f32.mxu0 %v1800
  %1882 = vmatmul.mubr.f32.gmra.mxu0 %v1798
  %v1883 = vpop.f32.mrf.mxu0
  %v1884 = vadd.f32 0.0, %v1883
  %v1885 = vpop.f32.mrf.mxu0
  %v1886 = vadd.f32 0.0, %v1885
  %1887 = vdwg.mxu0
  %1888 = vmatprep.subr.mxu0 0.0
  %1889 = vmatpush1.msra.mxu0 0.0
  %1890 = vmatprep.subr.mxu0 0.0
  %1891 = vmatpush1.msra.mxu0 0.0
  %1892 = vmatprep.subr.mxu0 0.0
  %1893 = vmatpush1.msra.mxu0 0.0
  %1894 = vmatprep.subr.mxu0 0.0
  %1895 = vmatpush1.msra.mxu0 0.0
  %1896 = vmatprep.subr.mxu0 %v1780
  %1897 = vmatpush1.msra.mxu0 %v1779
  %1898 = vmatprep.subr.mxu0 %v1778
  %1899 = vmatpush1.msra.mxu0 %v1777
  %1900 = vmatprep.subr.mxu0 %v1776
  %1901 = vmatpush1.msra.mxu0 %v1775
  %1902 = vmatprep.subr.mxu0 %v1774
  %1903 = vmatpush1.msra.mxu0 %v1773
  %1904 = vmatprep.subr.mxu0 %v1772
  %1905 = vmatpush1.msra.mxu0 %v1771
  %1906 = vmatprep.subr.mxu0 %v1770
  %1907 = vmatpush1.msra.mxu0 %v1769
  %1908 = vmatprep.subr.mxu0 %v1768
  %1909 = vmatpush1.msra.mxu0 %v1767
  %1910 = vmatprep.subr.mxu0 %v1766
  %1911 = vmatpush1.msra.mxu0 %v1765
  %1912 = vmatprep.subr.mxu0 %v1764
  %1913 = vmatpush1.msra.mxu0 %v1763
  %1914 = vmatprep.subr.mxu0 %v1762
  %1915 = vmatpush1.msra.mxu0 %v1761
  %1916 = vmatprep.subr.mxu0 %v1760
  %1917 = vmatpush1.msra.mxu0 %v1759
  %1918 = vmatprep.subr.mxu0 %v1758
  %1919 = vmatpush1.msra.mxu0 %v1757
  %1920 = vmatprep.subr.mxu0 0.0
  %1921 = vmatpush2.msra.mxu0 0.0
  %1922 = vmatprep.subr.mxu0 0.0
  %1923 = vmatpush2.msra.mxu0 0.0
  %1924 = vmatprep.subr.mxu0 0.0
  %1925 = vmatpush2.msra.mxu0 0.0
  %1926 = vmatprep.subr.mxu0 0.0
  %1927 = vmatpush2.msra.mxu0 0.0
  %1928 = vmatprep.subr.mxu0 0.0
  %1929 = vmatpush2.msra.mxu0 0.0
  %1930 = vmatprep.subr.mxu0 0.0
  %1931 = vmatpush2.msra.mxu0 0.0
  %1932 = vmatprep.subr.mxu0 0.0
  %1933 = vmatpush2.msra.mxu0 0.0
  %1934 = vmatprep.subr.mxu0 0.0
  %1935 = vmatpush2.msra.mxu0 0.0
  %1936 = vmatprep.subr.mxu0 0.0
  %1937 = vmatpush2.msra.mxu0 0.0
  %1938 = vmatprep.subr.mxu0 0.0
  %1939 = vmatpush2.msra.mxu0 0.0
  %1940 = vmatprep.subr.mxu0 0.0
  %1941 = vmatpush2.msra.mxu0 0.0
  %1942 = vmatprep.subr.mxu0 0.0
  %1943 = vmatpush2.msra.mxu0 0.0
  %1944 = vmatprep.subr.mxu0 0.0
  %1945 = vmatpush2.msra.mxu0 0.0
  %1946 = vmatprep.subr.mxu0 0.0
  %1947 = vmatpush2.msra.mxu0 0.0
  %1948 = vmatprep.subr.mxu0 0.0
  %1949 = vmatpush2.msra.mxu0 0.0
  %1950 = vmatprep.subr.mxu0 0.0
  %1951 = vmatpush2.msra.mxu0 0.0
  %1952 = vmatprep.mubr.f32.mxu0 0.0
  %1953 = vmatmul.mubr.f32.gmra.mxu0 %v1807
  %v1954 = vpop.f32.mrf.mxu0
  %v1955 = vadd.f32 %v1878, %v1954
  %v1956 = vpop.f32.mrf.mxu0
  %v1957 = vadd.f32 %v1880, %v1956
  %1958 = vmatprep.mubr.f32.mxu0 0.0
  %1959 = vmatmul.mubr.f32.gmra.mxu0 %v1809
  %v1960 = vpop.f32.mrf.mxu0
  %v1961 = vadd.f32 %v1884, %v1960
  %v1962 = vpop.f32.mrf.mxu0
  %v1963 = vadd.f32 %v1886, %v1962
  %1964 = vdwg.mxu0
  %v1965 = vadd.f32 %v1682, %v1955
  %v1966 = vadd.f32 %v1683, %v1957
  %v1967 = vadd.f32 %v1684, %v1961
  %v1968 = vadd.f32 %v1685, %v1963
  %v1970 = vlaneseq
  %v1971 = vshrl.u32 %v1970, 7
  %v1972 = vsub.s32 0, %v1971
  %v1973 = vrot.slane %v17, %v1972
  %v1974 = vlaneseq
  %v1975 = vshrl.u32 %v1974, 7
  %v1976 = vsub.s32 1, %v1975
  %v1977 = vrot.slane %v17, %v1976
  %v1980 = vadd.f32 %v1965, %v1973
  %v1981 = vadd.f32 %v1966, %v1977
  %v1982 = vadd.f32 %v1967, %v1973
  %v1983 = vadd.f32 %v1968, %v1977
  %v1984 = vld [vmem:[%s3] sm:$0xff]
  %v1985 = vld [vmem:[%s3 + $0x8] sm:$0xff]
  %v1986 = vld [vmem:[%s3 + $0x10] sm:$0xff]
  %v1987 = vld [vmem:[%s3 + $0x18] sm:$0xff]
  %v1988 = vadd.f32 %v1980, %v1984
  %v1989 = vadd.f32 %v1981, %v1985
  %v1990 = vadd.f32 %v1982, %v1986
  %v1991 = vadd.f32 %v1983, %v1987
  %v1992 = vmax.f32 %v1988, 0.0
  %v1993 = vmax.f32 %v1989, 0.0
  %v1994 = vmax.f32 %v1990, 0.0
  %v1995 = vmax.f32 %v1991, 0.0
  %1996 = vst [vmem:[%s4] sm:$0xff] %v1992
  %1997 = vst [vmem:[%s4 + $0x8] sm:$0xff] %v1993
  %1998 = vst [vmem:[%s4 + $0x10] sm:$0xff] %v1994
  %1999 = vst [vmem:[%s4 + $0x18] sm:$0xff] %v1995
  %s2000 = scalar_lea.vmem %s0, 72
  %v2001 = vld [vmem:[%s2000] sm:$0xff]
  %v2002 = vld [vmem:[%s2000 + $0x8] sm:$0xff]
  %v2003 = vld [vmem:[%s2000 + $0x10] sm:$0xff]
  %v2004 = vld [vmem:[%s2000 + $0x18] sm:$0xff]
  %v2005 = vld [vmem:[%s2000 + $0x20] sm:$0xff]
  %v2006 = vld [vmem:[%s2000 + $0x28] sm:$0xff]
  %v2007 = vld [vmem:[%s1] sm:$0xff]
  %v2008 = vld [vmem:[%s1 + $0x8] sm:$0xff]
  %v2009 = vld [vmem:[%s1 + $0x10] sm:$0xff]
  %v2010 = vld [vmem:[%s1 + $0x18] sm:$0xff]
  %v2011 = vld [vmem:[%s1 + $0x20] sm:$0xff]
  %v2012 = vld [vmem:[%s1 + $0x28] sm:$0xff]
  %v2013 = vld [vmem:[%s1 + $0x30] sm:$0xff]
  %v2014 = vld [vmem:[%s1 + $0x38] sm:$0xff]
  %v2015 = vld [vmem:[%s1 + $0x40] sm:$0xff]
  %v2016 = vld [vmem:[%s1 + $0x48] sm:$0xff]
  %v2017 = vld [vmem:[%s1 + $0x50] sm:$0xff]
  %v2018 = vld [vmem:[%s1 + $0x58] sm:$0xff]
  %v2019 = vld [vmem:[%s1 + $0x60] sm:$0xff]
  %v2020 = vld [vmem:[%s1 + $0x68] sm:$0xff]
  %v2021 = vld [vmem:[%s1 + $0x70] sm:$0xff]
  %v2022 = vld [vmem:[%s1 + $0x78] sm:$0xff]
  %v2023 = vld [vmem:[%s1 + $0x80] sm:$0xff]
  %v2024 = vld [vmem:[%s1 + $0x88] sm:$0xff]
  %v2025 = vld [vmem:[%s1 + $0x90] sm:$0xff]
  %v2026 = vld [vmem:[%s1 + $0x98] sm:$0xff]
  %v2027 = vld [vmem:[%s1 + $0xa0] sm:$0xff]
  %v2028 = vld [vmem:[%s1 + $0xa8] sm:$0xff]
  %v2029 = vld [vmem:[%s1 + $0xb0] sm:$0xff]
  %v2030 = vld [vmem:[%s1 + $0xb8] sm:$0xff]
  %v2031 = vld [vmem:[%s1 + $0xc0] sm:$0xff]
  %v2032 = vld [vmem:[%s1 + $0xc8] sm:$0xff]
  %v2033 = vld [vmem:[%s1 + $0xd0] sm:$0xff]
  %v2034 = vld [vmem:[%s1 + $0xd8] sm:$0xff]
  %v2035 = vld [vmem:[%s1 + $0xe0] sm:$0xff]
  %v2036 = vld [vmem:[%s1 + $0xe8] sm:$0xff]
  %v2037 = vld [vmem:[%s1 + $0xf0] sm:$0xff]
  %v2038 = vld [vmem:[%s1 + $0xf8] sm:$0xff]
  %v2039 = vld [vmem:[%s1 + $0x100] sm:$0xff]
  %v2040 = vld [vmem:[%s1 + $0x108] sm:$0xff]
  %v2041 = vld [vmem:[%s1 + $0x110] sm:$0xff]
  %v2042 = vld [vmem:[%s1 + $0x118] sm:$0xff]
  %v2043 = vld [vmem:[%s1 + $0x120] sm:$0xff]
  %v2044 = vld [vmem:[%s1 + $0x128] sm:$0xff]
  %v2045 = vld [vmem:[%s1 + $0x130] sm:$0xff]
  %v2046 = vld [vmem:[%s1 + $0x138] sm:$0xff]
  %v2047 = vld [vmem:[%s1 + $0x140] sm:$0xff]
  %v2048 = vld [vmem:[%s1 + $0x148] sm:$0xff]
  %v2049 = vld [vmem:[%s1 + $0x150] sm:$0xff]
  %v2050 = vld [vmem:[%s1 + $0x158] sm:$0xff]
  %v2051 = vld [vmem:[%s1 + $0x160] sm:$0xff]
  %v2052 = vld [vmem:[%s1 + $0x168] sm:$0xff]
  %v2053 = vld [vmem:[%s1 + $0x170] sm:$0xff]
  %v2054 = vld [vmem:[%s1 + $0x178] sm:$0xff]
  %v2055 = vld [vmem:[%s1 + $0x180] sm:$0xff]
  %v2056 = vld [vmem:[%s1 + $0x188] sm:$0xff]
  %v2057 = vld [vmem:[%s1 + $0x190] sm:$0xff]
  %v2058 = vld [vmem:[%s1 + $0x198] sm:$0xff]
  %v2059 = vld [vmem:[%s1 + $0x1a0] sm:$0xff]
  %v2060 = vld [vmem:[%s1 + $0x1a8] sm:$0xff]
  %v2061 = vld [vmem:[%s1 + $0x1b0] sm:$0xff]
  %v2062 = vld [vmem:[%s1 + $0x1b8] sm:$0xff]
  %v2063 = vld [vmem:[%s1 + $0x1c0] sm:$0xff]
  %v2064 = vld [vmem:[%s1 + $0x1c8] sm:$0xff]
  %v2065 = vld [vmem:[%s1 + $0x1d0] sm:$0xff]
  %v2066 = vld [vmem:[%s1 + $0x1d8] sm:$0xff]
  %v2067 = vld [vmem:[%s1 + $0x1e0] sm:$0xff]
  %v2068 = vld [vmem:[%s1 + $0x1e8] sm:$0xff]
  %v2069 = vld [vmem:[%s1 + $0x1f0] sm:$0xff]
  %v2070 = vld [vmem:[%s1 + $0x1f8] sm:$0xff]
  %v2071 = vld [vmem:[%s1 + $0x200] sm:$0xff]
  %v2072 = vld [vmem:[%s1 + $0x208] sm:$0xff]
  %v2073 = vld [vmem:[%s1 + $0x210] sm:$0xff]
  %v2074 = vld [vmem:[%s1 + $0x218] sm:$0xff]
  %v2075 = vld [vmem:[%s1 + $0x220] sm:$0xff]
  %v2076 = vld [vmem:[%s1 + $0x228] sm:$0xff]
  %v2077 = vld [vmem:[%s1 + $0x230] sm:$0xff]
  %v2078 = vld [vmem:[%s1 + $0x238] sm:$0xff]
  %v2079 = vld [vmem:[%s1 + $0x240] sm:$0xff]
  %v2080 = vld [vmem:[%s1 + $0x248] sm:$0xff]
  %v2081 = vld [vmem:[%s1 + $0x250] sm:$0xff]
  %v2082 = vld [vmem:[%s1 + $0x258] sm:$0xff]
  %v2083 = vld [vmem:[%s1 + $0x260] sm:$0xff]
  %v2084 = vld [vmem:[%s1 + $0x268] sm:$0xff]
  %v2085 = vld [vmem:[%s1 + $0x270] sm:$0xff]
  %v2086 = vld [vmem:[%s1 + $0x278] sm:$0xff]
  %v2087 = vld [vmem:[%s1 + $0x280] sm:$0xff]
  %v2088 = vld [vmem:[%s1 + $0x288] sm:$0xff]
  %v2089 = vld [vmem:[%s1 + $0x290] sm:$0xff]
  %v2090 = vld [vmem:[%s1 + $0x298] sm:$0xff]
  %v2091 = vld [vmem:[%s1 + $0x2a0] sm:$0xff]
  %v2092 = vld [vmem:[%s1 + $0x2a8] sm:$0xff]
  %v2093 = vld [vmem:[%s1 + $0x2b0] sm:$0xff]
  %v2094 = vld [vmem:[%s1 + $0x2b8] sm:$0xff]
  %v2095 = vld [vmem:[%s2000] sm:$0xfe]
  %v2096 = vld [vmem:[%s2000 + $0x8] sm:$0xfe]
  %v2097 = vld [vmem:[%s2000 + $0x10] sm:$0xfe]
  %v2098 = vld [vmem:[%s2000 + $0x30] sm:$0x1]
  %v2099 = vld [vmem:[%s2000 + $0x38] sm:$0x1]
  %v2100 = vld [vmem:[%s2000 + $0x40] sm:$0x1]
  %v2101 = vld [vmem:[%s118] sm:$0xff]
  %v2102 = vld [vmem:[%s118 + $0x8] sm:$0xff]
  %v2103 = vld [vmem:[%s118 + $0x10] sm:$0xff]
  %v2104 = vld [vmem:[%s118 + $0x18] sm:$0xff]
  %v2105 = vld [vmem:[%s118 + $0x20] sm:$0xff]
  %v2106 = vld [vmem:[%s118 + $0x28] sm:$0xff]
  %v2107 = vld [vmem:[%s118 + $0x30] sm:$0xff]
  %v2108 = vld [vmem:[%s118 + $0x38] sm:$0xff]
  %v2109 = vld [vmem:[%s118 + $0x40] sm:$0xff]
  %v2110 = vld [vmem:[%s118 + $0x48] sm:$0xff]
  %v2111 = vld [vmem:[%s118 + $0x50] sm:$0xff]
  %v2112 = vld [vmem:[%s118 + $0x58] sm:$0xff]
  %v2113 = vld [vmem:[%s118 + $0x60] sm:$0xff]
  %v2114 = vld [vmem:[%s118 + $0x68] sm:$0xff]
  %v2115 = vld [vmem:[%s118 + $0x70] sm:$0xff]
  %v2116 = vld [vmem:[%s118 + $0x78] sm:$0xff]
  %v2117 = vld [vmem:[%s118 + $0x80] sm:$0xff]
  %v2118 = vld [vmem:[%s118 + $0x88] sm:$0xff]
  %v2119 = vld [vmem:[%s118 + $0x90] sm:$0xff]
  %v2120 = vld [vmem:[%s118 + $0x98] sm:$0xff]
  %v2121 = vld [vmem:[%s118 + $0xa0] sm:$0xff]
  %v2122 = vld [vmem:[%s118 + $0xa8] sm:$0xff]
  %v2123 = vld [vmem:[%s118 + $0xb0] sm:$0xff]
  %v2124 = vld [vmem:[%s118 + $0xb8] sm:$0xff]
  %v2125 = vld [vmem:[%s118 + $0xc0] sm:$0xff]
  %v2126 = vld [vmem:[%s118 + $0xc8] sm:$0xff]
  %v2127 = vld [vmem:[%s118 + $0xd0] sm:$0xff]
  %v2128 = vld [vmem:[%s118 + $0xd8] sm:$0xff]
  %v2129 = vld [vmem:[%s118 + $0xe0] sm:$0xff]
  %v2130 = vld [vmem:[%s118 + $0xe8] sm:$0xff]
  %v2131 = vld [vmem:[%s118 + $0xf0] sm:$0xff]
  %v2132 = vld [vmem:[%s118 + $0xf8] sm:$0xff]
  %v2133 = vld [vmem:[%s118 + $0x100] sm:$0xff]
  %v2134 = vld [vmem:[%s118 + $0x108] sm:$0xff]
  %v2135 = vld [vmem:[%s118 + $0x110] sm:$0xff]
  %v2136 = vld [vmem:[%s118 + $0x118] sm:$0xff]
  %v2137 = vld [vmem:[%s118 + $0x120] sm:$0xff]
  %v2138 = vld [vmem:[%s118 + $0x128] sm:$0xff]
  %v2139 = vld [vmem:[%s118 + $0x130] sm:$0xff]
  %v2140 = vld [vmem:[%s118 + $0x138] sm:$0xff]
  %v2141 = vld [vmem:[%s118 + $0x140] sm:$0xff]
  %v2142 = vld [vmem:[%s118 + $0x148] sm:$0xff]
  %v2143 = vld [vmem:[%s118 + $0x150] sm:$0xff]
  %v2144 = vld [vmem:[%s118 + $0x158] sm:$0xff]
  %v2145 = vld [vmem:[%s118 + $0x160] sm:$0xff]
  %v2146 = vld [vmem:[%s118 + $0x168] sm:$0xff]
  %v2147 = vld [vmem:[%s118 + $0x170] sm:$0xff]
  %v2148 = vld [vmem:[%s118 + $0x178] sm:$0xff]
  %v2149 = vld [vmem:[%s118 + $0x180] sm:$0xff]
  %v2150 = vld [vmem:[%s118 + $0x188] sm:$0xff]
  %v2151 = vld [vmem:[%s118 + $0x190] sm:$0xff]
  %v2152 = vld [vmem:[%s118 + $0x198] sm:$0xff]
  %v2153 = vld [vmem:[%s118 + $0x1a0] sm:$0xff]
  %v2154 = vld [vmem:[%s118 + $0x1a8] sm:$0xff]
  %v2155 = vld [vmem:[%s118 + $0x1b0] sm:$0xff]
  %v2156 = vld [vmem:[%s118 + $0x1b8] sm:$0xff]
  %v2157 = vld [vmem:[%s118 + $0x1c0] sm:$0xff]
  %v2158 = vld [vmem:[%s118 + $0x1c8] sm:$0xff]
  %v2159 = vld [vmem:[%s118 + $0x1d0] sm:$0xff]
  %v2160 = vld [vmem:[%s118 + $0x1d8] sm:$0xff]
  %v2161 = vld [vmem:[%s118 + $0x1e0] sm:$0xff]
  %v2162 = vld [vmem:[%s118 + $0x1e8] sm:$0xff]
  %v2163 = vld [vmem:[%s118 + $0x1f0] sm:$0xff]
  %v2164 = vld [vmem:[%s118 + $0x1f8] sm:$0xff]
  %v2165 = vld [vmem:[%s118 + $0x200] sm:$0xff]
  %v2166 = vld [vmem:[%s118 + $0x208] sm:$0xff]
  %v2167 = vld [vmem:[%s118 + $0x210] sm:$0xff]
  %v2168 = vld [vmem:[%s118 + $0x218] sm:$0xff]
  %v2169 = vld [vmem:[%s118 + $0x220] sm:$0xff]
  %v2170 = vld [vmem:[%s118 + $0x228] sm:$0xff]
  %v2171 = vld [vmem:[%s118 + $0x230] sm:$0xff]
  %v2172 = vld [vmem:[%s118 + $0x238] sm:$0xff]
  %v2173 = vld [vmem:[%s118 + $0x240] sm:$0xff]
  %v2174 = vld [vmem:[%s118 + $0x248] sm:$0xff]
  %v2175 = vld [vmem:[%s118 + $0x250] sm:$0xff]
  %v2176 = vld [vmem:[%s118 + $0x258] sm:$0xff]
  %v2177 = vld [vmem:[%s118 + $0x260] sm:$0xff]
  %v2178 = vld [vmem:[%s118 + $0x268] sm:$0xff]
  %v2179 = vld [vmem:[%s118 + $0x270] sm:$0xff]
  %v2180 = vld [vmem:[%s118 + $0x278] sm:$0xff]
  %v2181 = vld [vmem:[%s118 + $0x280] sm:$0xff]
  %v2182 = vld [vmem:[%s118 + $0x288] sm:$0xff]
  %v2183 = vld [vmem:[%s118 + $0x290] sm:$0xff]
  %v2184 = vld [vmem:[%s118 + $0x298] sm:$0xff]
  %v2185 = vld [vmem:[%s118 + $0x2a0] sm:$0xff]
  %v2186 = vld [vmem:[%s118 + $0x2a8] sm:$0xff]
  %v2187 = vld [vmem:[%s118 + $0x2b0] sm:$0xff]
  %v2188 = vld [vmem:[%s118 + $0x2b8] sm:$0xff]
  %v2198 = vrot.slane %v2095, 1
  %v2199 = vrot.slane %v2004, 1
  %v2200 = vsel %vm216, %v2198, %v2199
  %v2201 = vrot.slane %v2096, 1
  %v2202 = vrot.slane %v2005, 1
  %v2203 = vsel %vm216, %v2201, %v2202
  %v2204 = vrot.slane %v2097, 1
  %v2205 = vrot.slane %v2006, 1
  %v2206 = vsel %vm216, %v2204, %v2205
  %v2207 = vrot.slane %v2098, 1
  %v2208 = vsel %vm216, %v2199, %v2207
  %v2209 = vrot.slane %v2099, 1
  %v2210 = vsel %vm216, %v2202, %v2209
  %v2211 = vrot.slane %v2100, 1
  %v2212 = vsel %vm216, %v2205, %v2211
  %v2217 = vsel %vm236, %v2206, 0
  %v2219 = vsel %vm236, %v2212, 0
  %2221 = vmatprep.subr.mxu0 %v2132
  %2222 = vmatpush1.msra.mxu0 %v2131
  %2223 = vmatprep.subr.mxu0 %v2130
  %2224 = vmatpush1.msra.mxu0 %v2129
  %2225 = vmatprep.subr.mxu0 %v2128
  %2226 = vmatpush1.msra.mxu0 %v2127
  %2227 = vmatprep.subr.mxu0 %v2126
  %2228 = vmatpush1.msra.mxu0 %v2125
  %2229 = vmatprep.subr.mxu0 %v2124
  %2230 = vmatpush1.msra.mxu0 %v2123
  %2231 = vmatprep.subr.mxu0 %v2122
  %2232 = vmatpush1.msra.mxu0 %v2121
  %2233 = vmatprep.subr.mxu0 %v2120
  %2234 = vmatpush1.msra.mxu0 %v2119
  %2235 = vmatprep.subr.mxu0 %v2118
  %2236 = vmatpush1.msra.mxu0 %v2117
  %2237 = vmatprep.subr.mxu0 %v2116
  %2238 = vmatpush1.msra.mxu0 %v2115
  %2239 = vmatprep.subr.mxu0 %v2114
  %2240 = vmatpush1.msra.mxu0 %v2113
  %2241 = vmatprep.subr.mxu0 %v2112
  %2242 = vmatpush1.msra.mxu0 %v2111
  %2243 = vmatprep.subr.mxu0 %v2110
  %2244 = vmatpush1.msra.mxu0 %v2109
  %2245 = vmatprep.subr.mxu0 %v2108
  %2246 = vmatpush1.msra.mxu0 %v2107
  %2247 = vmatprep.subr.mxu0 %v2106
  %2248 = vmatpush1.msra.mxu0 %v2105
  %2249 = vmatprep.subr.mxu0 %v2104
  %2250 = vmatpush1.msra.mxu0 %v2103
  %2251 = vmatprep.subr.mxu0 %v2102
  %2252 = vmatpush1.msra.mxu0 %v2101
  %2253 = vmatprep.subr.mxu0 %v2164
  %2254 = vmatpush2.msra.mxu0 %v2163
  %2255 = vmatprep.subr.mxu0 %v2162
  %2256 = vmatpush2.msra.mxu0 %v2161
  %2257 = vmatprep.subr.mxu0 %v2160
  %2258 = vmatpush2.msra.mxu0 %v2159
  %2259 = vmatprep.subr.mxu0 %v2158
  %2260 = vmatpush2.msra.mxu0 %v2157
  %2261 = vmatprep.subr.mxu0 %v2156
  %2262 = vmatpush2.msra.mxu0 %v2155
  %2263 = vmatprep.subr.mxu0 %v2154
  %2264 = vmatpush2.msra.mxu0 %v2153
  %2265 = vmatprep.subr.mxu0 %v2152
  %2266 = vmatpush2.msra.mxu0 %v2151
  %2267 = vmatprep.subr.mxu0 %v2150
  %2268 = vmatpush2.msra.mxu0 %v2149
  %2269 = vmatprep.subr.mxu0 %v2148
  %2270 = vmatpush2.msra.mxu0 %v2147
  %2271 = vmatprep.subr.mxu0 %v2146
  %2272 = vmatpush2.msra.mxu0 %v2145
  %2273 = vmatprep.subr.mxu0 %v2144
  %2274 = vmatpush2.msra.mxu0 %v2143
  %2275 = vmatprep.subr.mxu0 %v2142
  %2276 = vmatpush2.msra.mxu0 %v2141
  %2277 = vmatprep.subr.mxu0 %v2140
  %2278 = vmatpush2.msra.mxu0 %v2139
  %2279 = vmatprep.subr.mxu0 %v2138
  %2280 = vmatpush2.msra.mxu0 %v2137
  %2281 = vmatprep.subr.mxu0 %v2136
  %2282 = vmatpush2.msra.mxu0 %v2135
  %2283 = vmatprep.subr.mxu0 %v2134
  %2284 = vmatpush2.msra.mxu0 %v2133
  %2285 = vmatprep.mubr.f32.mxu0 %v2203
  %2286 = vmatmul.mubr.f32.gmra.mxu0 %v2200
  %v2287 = vpop.f32.mrf.mxu0
  %v2288 = vadd.f32 0.0, %v2287
  %v2289 = vpop.f32.mrf.mxu0
  %v2290 = vadd.f32 0.0, %v2289
  %2291 = vmatprep.mubr.f32.mxu0 %v2210
  %2292 = vmatmul.mubr.f32.gmra.mxu0 %v2208
  %v2293 = vpop.f32.mrf.mxu0
  %v2294 = vadd.f32 0.0, %v2293
  %v2295 = vpop.f32.mrf.mxu0
  %v2296 = vadd.f32 0.0, %v2295
  %2297 = vdwg.mxu0
  %2298 = vmatprep.subr.mxu0 0.0
  %2299 = vmatpush1.msra.mxu0 0.0
  %2300 = vmatprep.subr.mxu0 0.0
  %2301 = vmatpush1.msra.mxu0 0.0
  %2302 = vmatprep.subr.mxu0 0.0
  %2303 = vmatpush1.msra.mxu0 0.0
  %2304 = vmatprep.subr.mxu0 0.0
  %2305 = vmatpush1.msra.mxu0 0.0
  %2306 = vmatprep.subr.mxu0 %v2188
  %2307 = vmatpush1.msra.mxu0 %v2187
  %2308 = vmatprep.subr.mxu0 %v2186
  %2309 = vmatpush1.msra.mxu0 %v2185
  %2310 = vmatprep.subr.mxu0 %v2184
  %2311 = vmatpush1.msra.mxu0 %v2183
  %2312 = vmatprep.subr.mxu0 %v2182
  %2313 = vmatpush1.msra.mxu0 %v2181
  %2314 = vmatprep.subr.mxu0 %v2180
  %2315 = vmatpush1.msra.mxu0 %v2179
  %2316 = vmatprep.subr.mxu0 %v2178
  %2317 = vmatpush1.msra.mxu0 %v2177
  %2318 = vmatprep.subr.mxu0 %v2176
  %2319 = vmatpush1.msra.mxu0 %v2175
  %2320 = vmatprep.subr.mxu0 %v2174
  %2321 = vmatpush1.msra.mxu0 %v2173
  %2322 = vmatprep.subr.mxu0 %v2172
  %2323 = vmatpush1.msra.mxu0 %v2171
  %2324 = vmatprep.subr.mxu0 %v2170
  %2325 = vmatpush1.msra.mxu0 %v2169
  %2326 = vmatprep.subr.mxu0 %v2168
  %2327 = vmatpush1.msra.mxu0 %v2167
  %2328 = vmatprep.subr.mxu0 %v2166
  %2329 = vmatpush1.msra.mxu0 %v2165
  %2330 = vmatprep.subr.mxu0 0.0
  %2331 = vmatpush2.msra.mxu0 0.0
  %2332 = vmatprep.subr.mxu0 0.0
  %2333 = vmatpush2.msra.mxu0 0.0
  %2334 = vmatprep.subr.mxu0 0.0
  %2335 = vmatpush2.msra.mxu0 0.0
  %2336 = vmatprep.subr.mxu0 0.0
  %2337 = vmatpush2.msra.mxu0 0.0
  %2338 = vmatprep.subr.mxu0 0.0
  %2339 = vmatpush2.msra.mxu0 0.0
  %2340 = vmatprep.subr.mxu0 0.0
  %2341 = vmatpush2.msra.mxu0 0.0
  %2342 = vmatprep.subr.mxu0 0.0
  %2343 = vmatpush2.msra.mxu0 0.0
  %2344 = vmatprep.subr.mxu0 0.0
  %2345 = vmatpush2.msra.mxu0 0.0
  %2346 = vmatprep.subr.mxu0 0.0
  %2347 = vmatpush2.msra.mxu0 0.0
  %2348 = vmatprep.subr.mxu0 0.0
  %2349 = vmatpush2.msra.mxu0 0.0
  %2350 = vmatprep.subr.mxu0 0.0
  %2351 = vmatpush2.msra.mxu0 0.0
  %2352 = vmatprep.subr.mxu0 0.0
  %2353 = vmatpush2.msra.mxu0 0.0
  %2354 = vmatprep.subr.mxu0 0.0
  %2355 = vmatpush2.msra.mxu0 0.0
  %2356 = vmatprep.subr.mxu0 0.0
  %2357 = vmatpush2.msra.mxu0 0.0
  %2358 = vmatprep.subr.mxu0 0.0
  %2359 = vmatpush2.msra.mxu0 0.0
  %2360 = vmatprep.subr.mxu0 0.0
  %2361 = vmatpush2.msra.mxu0 0.0
  %2362 = vmatprep.mubr.f32.mxu0 0.0
  %2363 = vmatmul.mubr.f32.gmra.mxu0 %v2217
  %v2364 = vpop.f32.mrf.mxu0
  %v2365 = vadd.f32 %v2288, %v2364
  %v2366 = vpop.f32.mrf.mxu0
  %v2367 = vadd.f32 %v2290, %v2366
  %2368 = vmatprep.mubr.f32.mxu0 0.0
  %2369 = vmatmul.mubr.f32.gmra.mxu0 %v2219
  %v2370 = vpop.f32.mrf.mxu0
  %v2371 = vadd.f32 %v2294, %v2370
  %v2372 = vpop.f32.mrf.mxu0
  %v2373 = vadd.f32 %v2296, %v2372
  %2374 = vdwg.mxu0
  %v2376 = vsel %vm236, %v2003, 0
  %v2378 = vsel %vm236, %v2006, 0
  %2380 = vmatprep.subr.mxu0 %v2038
  %2381 = vmatpush1.msra.mxu0 %v2037
  %2382 = vmatprep.subr.mxu0 %v2036
  %2383 = vmatpush1.msra.mxu0 %v2035
  %2384 = vmatprep.subr.mxu0 %v2034
  %2385 = vmatpush1.msra.mxu0 %v2033
  %2386 = vmatprep.subr.mxu0 %v2032
  %2387 = vmatpush1.msra.mxu0 %v2031
  %2388 = vmatprep.subr.mxu0 %v2030
  %2389 = vmatpush1.msra.mxu0 %v2029
  %2390 = vmatprep.subr.mxu0 %v2028
  %2391 = vmatpush1.msra.mxu0 %v2027
  %2392 = vmatprep.subr.mxu0 %v2026
  %2393 = vmatpush1.msra.mxu0 %v2025
  %2394 = vmatprep.subr.mxu0 %v2024
  %2395 = vmatpush1.msra.mxu0 %v2023
  %2396 = vmatprep.subr.mxu0 %v2022
  %2397 = vmatpush1.msra.mxu0 %v2021
  %2398 = vmatprep.subr.mxu0 %v2020
  %2399 = vmatpush1.msra.mxu0 %v2019
  %2400 = vmatprep.subr.mxu0 %v2018
  %2401 = vmatpush1.msra.mxu0 %v2017
  %2402 = vmatprep.subr.mxu0 %v2016
  %2403 = vmatpush1.msra.mxu0 %v2015
  %2404 = vmatprep.subr.mxu0 %v2014
  %2405 = vmatpush1.msra.mxu0 %v2013
  %2406 = vmatprep.subr.mxu0 %v2012
  %2407 = vmatpush1.msra.mxu0 %v2011
  %2408 = vmatprep.subr.mxu0 %v2010
  %2409 = vmatpush1.msra.mxu0 %v2009
  %2410 = vmatprep.subr.mxu0 %v2008
  %2411 = vmatpush1.msra.mxu0 %v2007
  %2412 = vmatprep.subr.mxu0 %v2070
  %2413 = vmatpush2.msra.mxu0 %v2069
  %2414 = vmatprep.subr.mxu0 %v2068
  %2415 = vmatpush2.msra.mxu0 %v2067
  %2416 = vmatprep.subr.mxu0 %v2066
  %2417 = vmatpush2.msra.mxu0 %v2065
  %2418 = vmatprep.subr.mxu0 %v2064
  %2419 = vmatpush2.msra.mxu0 %v2063
  %2420 = vmatprep.subr.mxu0 %v2062
  %2421 = vmatpush2.msra.mxu0 %v2061
  %2422 = vmatprep.subr.mxu0 %v2060
  %2423 = vmatpush2.msra.mxu0 %v2059
  %2424 = vmatprep.subr.mxu0 %v2058
  %2425 = vmatpush2.msra.mxu0 %v2057
  %2426 = vmatprep.subr.mxu0 %v2056
  %2427 = vmatpush2.msra.mxu0 %v2055
  %2428 = vmatprep.subr.mxu0 %v2054
  %2429 = vmatpush2.msra.mxu0 %v2053
  %2430 = vmatprep.subr.mxu0 %v2052
  %2431 = vmatpush2.msra.mxu0 %v2051
  %2432 = vmatprep.subr.mxu0 %v2050
  %2433 = vmatpush2.msra.mxu0 %v2049
  %2434 = vmatprep.subr.mxu0 %v2048
  %2435 = vmatpush2.msra.mxu0 %v2047
  %2436 = vmatprep.subr.mxu0 %v2046
  %2437 = vmatpush2.msra.mxu0 %v2045
  %2438 = vmatprep.subr.mxu0 %v2044
  %2439 = vmatpush2.msra.mxu0 %v2043
  %2440 = vmatprep.subr.mxu0 %v2042
  %2441 = vmatpush2.msra.mxu0 %v2041
  %2442 = vmatprep.subr.mxu0 %v2040
  %2443 = vmatpush2.msra.mxu0 %v2039
  %2444 = vmatprep.mubr.f32.mxu0 %v2002
  %2445 = vmatmul.mubr.f32.gmra.mxu0 %v2001
  %v2446 = vpop.f32.mrf.mxu0
  %v2447 = vadd.f32 %v2365, %v2446
  %v2448 = vpop.f32.mrf.mxu0
  %v2449 = vadd.f32 %v2367, %v2448
  %2450 = vmatprep.mubr.f32.mxu0 %v2005
  %2451 = vmatmul.mubr.f32.gmra.mxu0 %v2004
  %v2452 = vpop.f32.mrf.mxu0
  %v2453 = vadd.f32 %v2371, %v2452
  %v2454 = vpop.f32.mrf.mxu0
  %v2455 = vadd.f32 %v2373, %v2454
  %2456 = vdwg.mxu0
  %2457 = vmatprep.subr.mxu0 0.0
  %2458 = vmatpush1.msra.mxu0 0.0
  %2459 = vmatprep.subr.mxu0 0.0
  %2460 = vmatpush1.msra.mxu0 0.0
  %2461 = vmatprep.subr.mxu0 0.0
  %2462 = vmatpush1.msra.mxu0 0.0
  %2463 = vmatprep.subr.mxu0 0.0
  %2464 = vmatpush1.msra.mxu0 0.0
  %2465 = vmatprep.subr.mxu0 %v2094
  %2466 = vmatpush1.msra.mxu0 %v2093
  %2467 = vmatprep.subr.mxu0 %v2092
  %2468 = vmatpush1.msra.mxu0 %v2091
  %2469 = vmatprep.subr.mxu0 %v2090
  %2470 = vmatpush1.msra.mxu0 %v2089
  %2471 = vmatprep.subr.mxu0 %v2088
  %2472 = vmatpush1.msra.mxu0 %v2087
  %2473 = vmatprep.subr.mxu0 %v2086
  %2474 = vmatpush1.msra.mxu0 %v2085
  %2475 = vmatprep.subr.mxu0 %v2084
  %2476 = vmatpush1.msra.mxu0 %v2083
  %2477 = vmatprep.subr.mxu0 %v2082
  %2478 = vmatpush1.msra.mxu0 %v2081
  %2479 = vmatprep.subr.mxu0 %v2080
  %2480 = vmatpush1.msra.mxu0 %v2079
  %2481 = vmatprep.subr.mxu0 %v2078
  %2482 = vmatpush1.msra.mxu0 %v2077
  %2483 = vmatprep.subr.mxu0 %v2076
  %2484 = vmatpush1.msra.mxu0 %v2075
  %2485 = vmatprep.subr.mxu0 %v2074
  %2486 = vmatpush1.msra.mxu0 %v2073
  %2487 = vmatprep.subr.mxu0 %v2072
  %2488 = vmatpush1.msra.mxu0 %v2071
  %2489 = vmatprep.subr.mxu0 0.0
  %2490 = vmatpush2.msra.mxu0 0.0
  %2491 = vmatprep.subr.mxu0 0.0
  %2492 = vmatpush2.msra.mxu0 0.0
  %2493 = vmatprep.subr.mxu0 0.0
  %2494 = vmatpush2.msra.mxu0 0.0
  %2495 = vmatprep.subr.mxu0 0.0
  %2496 = vmatpush2.msra.mxu0 0.0
  %2497 = vmatprep.subr.mxu0 0.0
  %2498 = vmatpush2.msra.mxu0 0.0
  %2499 = vmatprep.subr.mxu0 0.0
  %2500 = vmatpush2.msra.mxu0 0.0
  %2501 = vmatprep.subr.mxu0 0.0
  %2502 = vmatpush2.msra.mxu0 0.0
  %2503 = vmatprep.subr.mxu0 0.0
  %2504 = vmatpush2.msra.mxu0 0.0
  %2505 = vmatprep.subr.mxu0 0.0
  %2506 = vmatpush2.msra.mxu0 0.0
  %2507 = vmatprep.subr.mxu0 0.0
  %2508 = vmatpush2.msra.mxu0 0.0
  %2509 = vmatprep.subr.mxu0 0.0
  %2510 = vmatpush2.msra.mxu0 0.0
  %2511 = vmatprep.subr.mxu0 0.0
  %2512 = vmatpush2.msra.mxu0 0.0
  %2513 = vmatprep.subr.mxu0 0.0
  %2514 = vmatpush2.msra.mxu0 0.0
  %2515 = vmatprep.subr.mxu0 0.0
  %2516 = vmatpush2.msra.mxu0 0.0
  %2517 = vmatprep.subr.mxu0 0.0
  %2518 = vmatpush2.msra.mxu0 0.0
  %2519 = vmatprep.subr.mxu0 0.0
  %2520 = vmatpush2.msra.mxu0 0.0
  %2521 = vmatprep.mubr.f32.mxu0 0.0
  %2522 = vmatmul.mubr.f32.gmra.mxu0 %v2376
  %v2523 = vpop.f32.mrf.mxu0
  %v2524 = vadd.f32 %v2447, %v2523
  %v2525 = vpop.f32.mrf.mxu0
  %v2526 = vadd.f32 %v2449, %v2525
  %2527 = vmatprep.mubr.f32.mxu0 0.0
  %2528 = vmatmul.mubr.f32.gmra.mxu0 %v2378
  %v2529 = vpop.f32.mrf.mxu0
  %v2530 = vadd.f32 %v2453, %v2529
  %v2531 = vpop.f32.mrf.mxu0
  %v2532 = vadd.f32 %v2455, %v2531
  %2533 = vdwg.mxu0
  %v2534 = vld [vmem:[%s2000] sm:$0xfc]
  %v2535 = vld [vmem:[%s2000 + $0x8] sm:$0xfc]
  %v2536 = vld [vmem:[%s2000 + $0x10] sm:$0xfc]
  %v2537 = vld [vmem:[%s2000 + $0x30] sm:$0x3]
  %v2538 = vld [vmem:[%s2000 + $0x38] sm:$0x3]
  %v2539 = vld [vmem:[%s2000 + $0x40] sm:$0x3]
  %v2540 = vld [vmem:[%s560] sm:$0xff]
  %v2541 = vld [vmem:[%s560 + $0x8] sm:$0xff]
  %v2542 = vld [vmem:[%s560 + $0x10] sm:$0xff]
  %v2543 = vld [vmem:[%s560 + $0x18] sm:$0xff]
  %v2544 = vld [vmem:[%s560 + $0x20] sm:$0xff]
  %v2545 = vld [vmem:[%s560 + $0x28] sm:$0xff]
  %v2546 = vld [vmem:[%s560 + $0x30] sm:$0xff]
  %v2547 = vld [vmem:[%s560 + $0x38] sm:$0xff]
  %v2548 = vld [vmem:[%s560 + $0x40] sm:$0xff]
  %v2549 = vld [vmem:[%s560 + $0x48] sm:$0xff]
  %v2550 = vld [vmem:[%s560 + $0x50] sm:$0xff]
  %v2551 = vld [vmem:[%s560 + $0x58] sm:$0xff]
  %v2552 = vld [vmem:[%s560 + $0x60] sm:$0xff]
  %v2553 = vld [vmem:[%s560 + $0x68] sm:$0xff]
  %v2554 = vld [vmem:[%s560 + $0x70] sm:$0xff]
  %v2555 = vld [vmem:[%s560 + $0x78] sm:$0xff]
  %v2556 = vld [vmem:[%s560 + $0x80] sm:$0xff]
  %v2557 = vld [vmem:[%s560 + $0x88] sm:$0xff]
  %v2558 = vld [vmem:[%s560 + $0x90] sm:$0xff]
  %v2559 = vld [vmem:[%s560 + $0x98] sm:$0xff]
  %v2560 = vld [vmem:[%s560 + $0xa0] sm:$0xff]
  %v2561 = vld [vmem:[%s560 + $0xa8] sm:$0xff]
  %v2562 = vld [vmem:[%s560 + $0xb0] sm:$0xff]
  %v2563 = vld [vmem:[%s560 + $0xb8] sm:$0xff]
  %v2564 = vld [vmem:[%s560 + $0xc0] sm:$0xff]
  %v2565 = vld [vmem:[%s560 + $0xc8] sm:$0xff]
  %v2566 = vld [vmem:[%s560 + $0xd0] sm:$0xff]
  %v2567 = vld [vmem:[%s560 + $0xd8] sm:$0xff]
  %v2568 = vld [vmem:[%s560 + $0xe0] sm:$0xff]
  %v2569 = vld [vmem:[%s560 + $0xe8] sm:$0xff]
  %v2570 = vld [vmem:[%s560 + $0xf0] sm:$0xff]
  %v2571 = vld [vmem:[%s560 + $0xf8] sm:$0xff]
  %v2572 = vld [vmem:[%s560 + $0x100] sm:$0xff]
  %v2573 = vld [vmem:[%s560 + $0x108] sm:$0xff]
  %v2574 = vld [vmem:[%s560 + $0x110] sm:$0xff]
  %v2575 = vld [vmem:[%s560 + $0x118] sm:$0xff]
  %v2576 = vld [vmem:[%s560 + $0x120] sm:$0xff]
  %v2577 = vld [vmem:[%s560 + $0x128] sm:$0xff]
  %v2578 = vld [vmem:[%s560 + $0x130] sm:$0xff]
  %v2579 = vld [vmem:[%s560 + $0x138] sm:$0xff]
  %v2580 = vld [vmem:[%s560 + $0x140] sm:$0xff]
  %v2581 = vld [vmem:[%s560 + $0x148] sm:$0xff]
  %v2582 = vld [vmem:[%s560 + $0x150] sm:$0xff]
  %v2583 = vld [vmem:[%s560 + $0x158] sm:$0xff]
  %v2584 = vld [vmem:[%s560 + $0x160] sm:$0xff]
  %v2585 = vld [vmem:[%s560 + $0x168] sm:$0xff]
  %v2586 = vld [vmem:[%s560 + $0x170] sm:$0xff]
  %v2587 = vld [vmem:[%s560 + $0x178] sm:$0xff]
  %v2588 = vld [vmem:[%s560 + $0x180] sm:$0xff]
  %v2589 = vld [vmem:[%s560 + $0x188] sm:$0xff]
  %v2590 = vld [vmem:[%s560 + $0x190] sm:$0xff]
  %v2591 = vld [vmem:[%s560 + $0x198] sm:$0xff]
  %v2592 = vld [vmem:[%s560 + $0x1a0] sm:$0xff]
  %v2593 = vld [vmem:[%s560 + $0x1a8] sm:$0xff]
  %v2594 = vld [vmem:[%s560 + $0x1b0] sm:$0xff]
  %v2595 = vld [vmem:[%s560 + $0x1b8] sm:$0xff]
  %v2596 = vld [vmem:[%s560 + $0x1c0] sm:$0xff]
  %v2597 = vld [vmem:[%s560 + $0x1c8] sm:$0xff]
  %v2598 = vld [vmem:[%s560 + $0x1d0] sm:$0xff]
  %v2599 = vld [vmem:[%s560 + $0x1d8] sm:$0xff]
  %v2600 = vld [vmem:[%s560 + $0x1e0] sm:$0xff]
  %v2601 = vld [vmem:[%s560 + $0x1e8] sm:$0xff]
  %v2602 = vld [vmem:[%s560 + $0x1f0] sm:$0xff]
  %v2603 = vld [vmem:[%s560 + $0x1f8] sm:$0xff]
  %v2604 = vld [vmem:[%s560 + $0x200] sm:$0xff]
  %v2605 = vld [vmem:[%s560 + $0x208] sm:$0xff]
  %v2606 = vld [vmem:[%s560 + $0x210] sm:$0xff]
  %v2607 = vld [vmem:[%s560 + $0x218] sm:$0xff]
  %v2608 = vld [vmem:[%s560 + $0x220] sm:$0xff]
  %v2609 = vld [vmem:[%s560 + $0x228] sm:$0xff]
  %v2610 = vld [vmem:[%s560 + $0x230] sm:$0xff]
  %v2611 = vld [vmem:[%s560 + $0x238] sm:$0xff]
  %v2612 = vld [vmem:[%s560 + $0x240] sm:$0xff]
  %v2613 = vld [vmem:[%s560 + $0x248] sm:$0xff]
  %v2614 = vld [vmem:[%s560 + $0x250] sm:$0xff]
  %v2615 = vld [vmem:[%s560 + $0x258] sm:$0xff]
  %v2616 = vld [vmem:[%s560 + $0x260] sm:$0xff]
  %v2617 = vld [vmem:[%s560 + $0x268] sm:$0xff]
  %v2618 = vld [vmem:[%s560 + $0x270] sm:$0xff]
  %v2619 = vld [vmem:[%s560 + $0x278] sm:$0xff]
  %v2620 = vld [vmem:[%s560 + $0x280] sm:$0xff]
  %v2621 = vld [vmem:[%s560 + $0x288] sm:$0xff]
  %v2622 = vld [vmem:[%s560 + $0x290] sm:$0xff]
  %v2623 = vld [vmem:[%s560 + $0x298] sm:$0xff]
  %v2624 = vld [vmem:[%s560 + $0x2a0] sm:$0xff]
  %v2625 = vld [vmem:[%s560 + $0x2a8] sm:$0xff]
  %v2626 = vld [vmem:[%s560 + $0x2b0] sm:$0xff]
  %v2627 = vld [vmem:[%s560 + $0x2b8] sm:$0xff]
  %v2634 = vrot.slane %v2534, 2
  %v2635 = vrot.slane %v2004, 2
  %v2636 = vsel %vm655, %v2634, %v2635
  %v2637 = vrot.slane %v2535, 2
  %v2638 = vrot.slane %v2005, 2
  %v2639 = vsel %vm655, %v2637, %v2638
  %v2640 = vrot.slane %v2536, 2
  %v2641 = vrot.slane %v2006, 2
  %v2642 = vsel %vm655, %v2640, %v2641
  %v2643 = vrot.slane %v2537, 2
  %v2644 = vsel %vm655, %v2635, %v2643
  %v2645 = vrot.slane %v2538, 2
  %v2646 = vsel %vm655, %v2638, %v2645
  %v2647 = vrot.slane %v2539, 2
  %v2648 = vsel %vm655, %v2641, %v2647
  %v2653 = vsel %vm236, %v2642, 0
  %v2655 = vsel %vm236, %v2648, 0
  %2657 = vmatprep.subr.mxu0 %v2571
  %2658 = vmatpush1.msra.mxu0 %v2570
  %2659 = vmatprep.subr.mxu0 %v2569
  %2660 = vmatpush1.msra.mxu0 %v2568
  %2661 = vmatprep.subr.mxu0 %v2567
  %2662 = vmatpush1.msra.mxu0 %v2566
  %2663 = vmatprep.subr.mxu0 %v2565
  %2664 = vmatpush1.msra.mxu0 %v2564
  %2665 = vmatprep.subr.mxu0 %v2563
  %2666 = vmatpush1.msra.mxu0 %v2562
  %2667 = vmatprep.subr.mxu0 %v2561
  %2668 = vmatpush1.msra.mxu0 %v2560
  %2669 = vmatprep.subr.mxu0 %v2559
  %2670 = vmatpush1.msra.mxu0 %v2558
  %2671 = vmatprep.subr.mxu0 %v2557
  %2672 = vmatpush1.msra.mxu0 %v2556
  %2673 = vmatprep.subr.mxu0 %v2555
  %2674 = vmatpush1.msra.mxu0 %v2554
  %2675 = vmatprep.subr.mxu0 %v2553
  %2676 = vmatpush1.msra.mxu0 %v2552
  %2677 = vmatprep.subr.mxu0 %v2551
  %2678 = vmatpush1.msra.mxu0 %v2550
  %2679 = vmatprep.subr.mxu0 %v2549
  %2680 = vmatpush1.msra.mxu0 %v2548
  %2681 = vmatprep.subr.mxu0 %v2547
  %2682 = vmatpush1.msra.mxu0 %v2546
  %2683 = vmatprep.subr.mxu0 %v2545
  %2684 = vmatpush1.msra.mxu0 %v2544
  %2685 = vmatprep.subr.mxu0 %v2543
  %2686 = vmatpush1.msra.mxu0 %v2542
  %2687 = vmatprep.subr.mxu0 %v2541
  %2688 = vmatpush1.msra.mxu0 %v2540
  %2689 = vmatprep.subr.mxu0 %v2603
  %2690 = vmatpush2.msra.mxu0 %v2602
  %2691 = vmatprep.subr.mxu0 %v2601
  %2692 = vmatpush2.msra.mxu0 %v2600
  %2693 = vmatprep.subr.mxu0 %v2599
  %2694 = vmatpush2.msra.mxu0 %v2598
  %2695 = vmatprep.subr.mxu0 %v2597
  %2696 = vmatpush2.msra.mxu0 %v2596
  %2697 = vmatprep.subr.mxu0 %v2595
  %2698 = vmatpush2.msra.mxu0 %v2594
  %2699 = vmatprep.subr.mxu0 %v2593
  %2700 = vmatpush2.msra.mxu0 %v2592
  %2701 = vmatprep.subr.mxu0 %v2591
  %2702 = vmatpush2.msra.mxu0 %v2590
  %2703 = vmatprep.subr.mxu0 %v2589
  %2704 = vmatpush2.msra.mxu0 %v2588
  %2705 = vmatprep.subr.mxu0 %v2587
  %2706 = vmatpush2.msra.mxu0 %v2586
  %2707 = vmatprep.subr.mxu0 %v2585
  %2708 = vmatpush2.msra.mxu0 %v2584
  %2709 = vmatprep.subr.mxu0 %v2583
  %2710 = vmatpush2.msra.mxu0 %v2582
  %2711 = vmatprep.subr.mxu0 %v2581
  %2712 = vmatpush2.msra.mxu0 %v2580
  %2713 = vmatprep.subr.mxu0 %v2579
  %2714 = vmatpush2.msra.mxu0 %v2578
  %2715 = vmatprep.subr.mxu0 %v2577
  %2716 = vmatpush2.msra.mxu0 %v2576
  %2717 = vmatprep.subr.mxu0 %v2575
  %2718 = vmatpush2.msra.mxu0 %v2574
  %2719 = vmatprep.subr.mxu0 %v2573
  %2720 = vmatpush2.msra.mxu0 %v2572
  %2721 = vmatprep.mubr.f32.mxu0 %v2639
  %2722 = vmatmul.mubr.f32.gmra.mxu0 %v2636
  %v2723 = vpop.f32.mrf.mxu0
  %v2724 = vadd.f32 0.0, %v2723
  %v2725 = vpop.f32.mrf.mxu0
  %v2726 = vadd.f32 0.0, %v2725
  %2727 = vmatprep.mubr.f32.mxu0 %v2646
  %2728 = vmatmul.mubr.f32.gmra.mxu0 %v2644
  %v2729 = vpop.f32.mrf.mxu0
  %v2730 = vadd.f32 0.0, %v2729
  %v2731 = vpop.f32.mrf.mxu0
  %v2732 = vadd.f32 0.0, %v2731
  %2733 = vdwg.mxu0
  %2734 = vmatprep.subr.mxu0 0.0
  %2735 = vmatpush1.msra.mxu0 0.0
  %2736 = vmatprep.subr.mxu0 0.0
  %2737 = vmatpush1.msra.mxu0 0.0
  %2738 = vmatprep.subr.mxu0 0.0
  %2739 = vmatpush1.msra.mxu0 0.0
  %2740 = vmatprep.subr.mxu0 0.0
  %2741 = vmatpush1.msra.mxu0 0.0
  %2742 = vmatprep.subr.mxu0 %v2627
  %2743 = vmatpush1.msra.mxu0 %v2626
  %2744 = vmatprep.subr.mxu0 %v2625
  %2745 = vmatpush1.msra.mxu0 %v2624
  %2746 = vmatprep.subr.mxu0 %v2623
  %2747 = vmatpush1.msra.mxu0 %v2622
  %2748 = vmatprep.subr.mxu0 %v2621
  %2749 = vmatpush1.msra.mxu0 %v2620
  %2750 = vmatprep.subr.mxu0 %v2619
  %2751 = vmatpush1.msra.mxu0 %v2618
  %2752 = vmatprep.subr.mxu0 %v2617
  %2753 = vmatpush1.msra.mxu0 %v2616
  %2754 = vmatprep.subr.mxu0 %v2615
  %2755 = vmatpush1.msra.mxu0 %v2614
  %2756 = vmatprep.subr.mxu0 %v2613
  %2757 = vmatpush1.msra.mxu0 %v2612
  %2758 = vmatprep.subr.mxu0 %v2611
  %2759 = vmatpush1.msra.mxu0 %v2610
  %2760 = vmatprep.subr.mxu0 %v2609
  %2761 = vmatpush1.msra.mxu0 %v2608
  %2762 = vmatprep.subr.mxu0 %v2607
  %2763 = vmatpush1.msra.mxu0 %v2606
  %2764 = vmatprep.subr.mxu0 %v2605
  %2765 = vmatpush1.msra.mxu0 %v2604
  %2766 = vmatprep.subr.mxu0 0.0
  %2767 = vmatpush2.msra.mxu0 0.0
  %2768 = vmatprep.subr.mxu0 0.0
  %2769 = vmatpush2.msra.mxu0 0.0
  %2770 = vmatprep.subr.mxu0 0.0
  %2771 = vmatpush2.msra.mxu0 0.0
  %2772 = vmatprep.subr.mxu0 0.0
  %2773 = vmatpush2.msra.mxu0 0.0
  %2774 = vmatprep.subr.mxu0 0.0
  %2775 = vmatpush2.msra.mxu0 0.0
  %2776 = vmatprep.subr.mxu0 0.0
  %2777 = vmatpush2.msra.mxu0 0.0
  %2778 = vmatprep.subr.mxu0 0.0
  %2779 = vmatpush2.msra.mxu0 0.0
  %2780 = vmatprep.subr.mxu0 0.0
  %2781 = vmatpush2.msra.mxu0 0.0
  %2782 = vmatprep.subr.mxu0 0.0
  %2783 = vmatpush2.msra.mxu0 0.0
  %2784 = vmatprep.subr.mxu0 0.0
  %2785 = vmatpush2.msra.mxu0 0.0
  %2786 = vmatprep.subr.mxu0 0.0
  %2787 = vmatpush2.msra.mxu0 0.0
  %2788 = vmatprep.subr.mxu0 0.0
  %2789 = vmatpush2.msra.mxu0 0.0
  %2790 = vmatprep.subr.mxu0 0.0
  %2791 = vmatpush2.msra.mxu0 0.0
  %2792 = vmatprep.subr.mxu0 0.0
  %2793 = vmatpush2.msra.mxu0 0.0
  %2794 = vmatprep.subr.mxu0 0.0
  %2795 = vmatpush2.msra.mxu0 0.0
  %2796 = vmatprep.subr.mxu0 0.0
  %2797 = vmatpush2.msra.mxu0 0.0
  %2798 = vmatprep.mubr.f32.mxu0 0.0
  %2799 = vmatmul.mubr.f32.gmra.mxu0 %v2653
  %v2800 = vpop.f32.mrf.mxu0
  %v2801 = vadd.f32 %v2724, %v2800
  %v2802 = vpop.f32.mrf.mxu0
  %v2803 = vadd.f32 %v2726, %v2802
  %2804 = vmatprep.mubr.f32.mxu0 0.0
  %2805 = vmatmul.mubr.f32.gmra.mxu0 %v2655
  %v2806 = vpop.f32.mrf.mxu0
  %v2807 = vadd.f32 %v2730, %v2806
  %v2808 = vpop.f32.mrf.mxu0
  %v2809 = vadd.f32 %v2732, %v2808
  %2810 = vdwg.mxu0
  %v2811 = vadd.f32 %v2524, %v2801
  %v2812 = vadd.f32 %v2526, %v2803
  %v2813 = vadd.f32 %v2530, %v2807
  %v2814 = vadd.f32 %v2532, %v2809
  %v2815 = vld [vmem:[%s2000] sm:$0xf8]
  %v2816 = vld [vmem:[%s2000 + $0x8] sm:$0xf8]
  %v2817 = vld [vmem:[%s2000 + $0x10] sm:$0xf8]
  %v2818 = vld [vmem:[%s2000 + $0x30] sm:$0x7]
  %v2819 = vld [vmem:[%s2000 + $0x38] sm:$0x7]
  %v2820 = vld [vmem:[%s2000 + $0x40] sm:$0x7]
  %v2821 = vld [vmem:[%s843] sm:$0xff]
  %v2822 = vld [vmem:[%s843 + $0x8] sm:$0xff]
  %v2823 = vld [vmem:[%s843 + $0x10] sm:$0xff]
  %v2824 = vld [vmem:[%s843 + $0x18] sm:$0xff]
  %v2825 = vld [vmem:[%s843 + $0x20] sm:$0xff]
  %v2826 = vld [vmem:[%s843 + $0x28] sm:$0xff]
  %v2827 = vld [vmem:[%s843 + $0x30] sm:$0xff]
  %v2828 = vld [vmem:[%s843 + $0x38] sm:$0xff]
  %v2829 = vld [vmem:[%s843 + $0x40] sm:$0xff]
  %v2830 = vld [vmem:[%s843 + $0x48] sm:$0xff]
  %v2831 = vld [vmem:[%s843 + $0x50] sm:$0xff]
  %v2832 = vld [vmem:[%s843 + $0x58] sm:$0xff]
  %v2833 = vld [vmem:[%s843 + $0x60] sm:$0xff]
  %v2834 = vld [vmem:[%s843 + $0x68] sm:$0xff]
  %v2835 = vld [vmem:[%s843 + $0x70] sm:$0xff]
  %v2836 = vld [vmem:[%s843 + $0x78] sm:$0xff]
  %v2837 = vld [vmem:[%s843 + $0x80] sm:$0xff]
  %v2838 = vld [vmem:[%s843 + $0x88] sm:$0xff]
  %v2839 = vld [vmem:[%s843 + $0x90] sm:$0xff]
  %v2840 = vld [vmem:[%s843 + $0x98] sm:$0xff]
  %v2841 = vld [vmem:[%s843 + $0xa0] sm:$0xff]
  %v2842 = vld [vmem:[%s843 + $0xa8] sm:$0xff]
  %v2843 = vld [vmem:[%s843 + $0xb0] sm:$0xff]
  %v2844 = vld [vmem:[%s843 + $0xb8] sm:$0xff]
  %v2845 = vld [vmem:[%s843 + $0xc0] sm:$0xff]
  %v2846 = vld [vmem:[%s843 + $0xc8] sm:$0xff]
  %v2847 = vld [vmem:[%s843 + $0xd0] sm:$0xff]
  %v2848 = vld [vmem:[%s843 + $0xd8] sm:$0xff]
  %v2849 = vld [vmem:[%s843 + $0xe0] sm:$0xff]
  %v2850 = vld [vmem:[%s843 + $0xe8] sm:$0xff]
  %v2851 = vld [vmem:[%s843 + $0xf0] sm:$0xff]
  %v2852 = vld [vmem:[%s843 + $0xf8] sm:$0xff]
  %v2853 = vld [vmem:[%s843 + $0x100] sm:$0xff]
  %v2854 = vld [vmem:[%s843 + $0x108] sm:$0xff]
  %v2855 = vld [vmem:[%s843 + $0x110] sm:$0xff]
  %v2856 = vld [vmem:[%s843 + $0x118] sm:$0xff]
  %v2857 = vld [vmem:[%s843 + $0x120] sm:$0xff]
  %v2858 = vld [vmem:[%s843 + $0x128] sm:$0xff]
  %v2859 = vld [vmem:[%s843 + $0x130] sm:$0xff]
  %v2860 = vld [vmem:[%s843 + $0x138] sm:$0xff]
  %v2861 = vld [vmem:[%s843 + $0x140] sm:$0xff]
  %v2862 = vld [vmem:[%s843 + $0x148] sm:$0xff]
  %v2863 = vld [vmem:[%s843 + $0x150] sm:$0xff]
  %v2864 = vld [vmem:[%s843 + $0x158] sm:$0xff]
  %v2865 = vld [vmem:[%s843 + $0x160] sm:$0xff]
  %v2866 = vld [vmem:[%s843 + $0x168] sm:$0xff]
  %v2867 = vld [vmem:[%s843 + $0x170] sm:$0xff]
  %v2868 = vld [vmem:[%s843 + $0x178] sm:$0xff]
  %v2869 = vld [vmem:[%s843 + $0x180] sm:$0xff]
  %v2870 = vld [vmem:[%s843 + $0x188] sm:$0xff]
  %v2871 = vld [vmem:[%s843 + $0x190] sm:$0xff]
  %v2872 = vld [vmem:[%s843 + $0x198] sm:$0xff]
  %v2873 = vld [vmem:[%s843 + $0x1a0] sm:$0xff]
  %v2874 = vld [vmem:[%s843 + $0x1a8] sm:$0xff]
  %v2875 = vld [vmem:[%s843 + $0x1b0] sm:$0xff]
  %v2876 = vld [vmem:[%s843 + $0x1b8] sm:$0xff]
  %v2877 = vld [vmem:[%s843 + $0x1c0] sm:$0xff]
  %v2878 = vld [vmem:[%s843 + $0x1c8] sm:$0xff]
  %v2879 = vld [vmem:[%s843 + $0x1d0] sm:$0xff]
  %v2880 = vld [vmem:[%s843 + $0x1d8] sm:$0xff]
  %v2881 = vld [vmem:[%s843 + $0x1e0] sm:$0xff]
  %v2882 = vld [vmem:[%s843 + $0x1e8] sm:$0xff]
  %v2883 = vld [vmem:[%s843 + $0x1f0] sm:$0xff]
  %v2884 = vld [vmem:[%s843 + $0x1f8] sm:$0xff]
  %v2885 = vld [vmem:[%s843 + $0x200] sm:$0xff]
  %v2886 = vld [vmem:[%s843 + $0x208] sm:$0xff]
  %v2887 = vld [vmem:[%s843 + $0x210] sm:$0xff]
  %v2888 = vld [vmem:[%s843 + $0x218] sm:$0xff]
  %v2889 = vld [vmem:[%s843 + $0x220] sm:$0xff]
  %v2890 = vld [vmem:[%s843 + $0x228] sm:$0xff]
  %v2891 = vld [vmem:[%s843 + $0x230] sm:$0xff]
  %v2892 = vld [vmem:[%s843 + $0x238] sm:$0xff]
  %v2893 = vld [vmem:[%s843 + $0x240] sm:$0xff]
  %v2894 = vld [vmem:[%s843 + $0x248] sm:$0xff]
  %v2895 = vld [vmem:[%s843 + $0x250] sm:$0xff]
  %v2896 = vld [vmem:[%s843 + $0x258] sm:$0xff]
  %v2897 = vld [vmem:[%s843 + $0x260] sm:$0xff]
  %v2898 = vld [vmem:[%s843 + $0x268] sm:$0xff]
  %v2899 = vld [vmem:[%s843 + $0x270] sm:$0xff]
  %v2900 = vld [vmem:[%s843 + $0x278] sm:$0xff]
  %v2901 = vld [vmem:[%s843 + $0x280] sm:$0xff]
  %v2902 = vld [vmem:[%s843 + $0x288] sm:$0xff]
  %v2903 = vld [vmem:[%s843 + $0x290] sm:$0xff]
  %v2904 = vld [vmem:[%s843 + $0x298] sm:$0xff]
  %v2905 = vld [vmem:[%s843 + $0x2a0] sm:$0xff]
  %v2906 = vld [vmem:[%s843 + $0x2a8] sm:$0xff]
  %v2907 = vld [vmem:[%s843 + $0x2b0] sm:$0xff]
  %v2908 = vld [vmem:[%s843 + $0x2b8] sm:$0xff]
  %v2915 = vrot.slane %v2815, 3
  %v2916 = vrot.slane %v2004, 3
  %v2917 = vsel %vm938, %v2915, %v2916
  %v2918 = vrot.slane %v2816, 3
  %v2919 = vrot.slane %v2005, 3
  %v2920 = vsel %vm938, %v2918, %v2919
  %v2921 = vrot.slane %v2817, 3
  %v2922 = vrot.slane %v2006, 3
  %v2923 = vsel %vm938, %v2921, %v2922
  %v2924 = vrot.slane %v2818, 3
  %v2925 = vsel %vm938, %v2916, %v2924
  %v2926 = vrot.slane %v2819, 3
  %v2927 = vsel %vm938, %v2919, %v2926
  %v2928 = vrot.slane %v2820, 3
  %v2929 = vsel %vm938, %v2922, %v2928
  %v2934 = vsel %vm236, %v2923, 0
  %v2936 = vsel %vm236, %v2929, 0
  %2938 = vmatprep.subr.mxu0 %v2852
  %2939 = vmatpush1.msra.mxu0 %v2851
  %2940 = vmatprep.subr.mxu0 %v2850
  %2941 = vmatpush1.msra.mxu0 %v2849
  %2942 = vmatprep.subr.mxu0 %v2848
  %2943 = vmatpush1.msra.mxu0 %v2847
  %2944 = vmatprep.subr.mxu0 %v2846
  %2945 = vmatpush1.msra.mxu0 %v2845
  %2946 = vmatprep.subr.mxu0 %v2844
  %2947 = vmatpush1.msra.mxu0 %v2843
  %2948 = vmatprep.subr.mxu0 %v2842
  %2949 = vmatpush1.msra.mxu0 %v2841
  %2950 = vmatprep.subr.mxu0 %v2840
  %2951 = vmatpush1.msra.mxu0 %v2839
  %2952 = vmatprep.subr.mxu0 %v2838
  %2953 = vmatpush1.msra.mxu0 %v2837
  %2954 = vmatprep.subr.mxu0 %v2836
  %2955 = vmatpush1.msra.mxu0 %v2835
  %2956 = vmatprep.subr.mxu0 %v2834
  %2957 = vmatpush1.msra.mxu0 %v2833
  %2958 = vmatprep.subr.mxu0 %v2832
  %2959 = vmatpush1.msra.mxu0 %v2831
  %2960 = vmatprep.subr.mxu0 %v2830
  %2961 = vmatpush1.msra.mxu0 %v2829
  %2962 = vmatprep.subr.mxu0 %v2828
  %2963 = vmatpush1.msra.mxu0 %v2827
  %2964 = vmatprep.subr.mxu0 %v2826
  %2965 = vmatpush1.msra.mxu0 %v2825
  %2966 = vmatprep.subr.mxu0 %v2824
  %2967 = vmatpush1.msra.mxu0 %v2823
  %2968 = vmatprep.subr.mxu0 %v2822
  %2969 = vmatpush1.msra.mxu0 %v2821
  %2970 = vmatprep.subr.mxu0 %v2884
  %2971 = vmatpush2.msra.mxu0 %v2883
  %2972 = vmatprep.subr.mxu0 %v2882
  %2973 = vmatpush2.msra.mxu0 %v2881
  %2974 = vmatprep.subr.mxu0 %v2880
  %2975 = vmatpush2.msra.mxu0 %v2879
  %2976 = vmatprep.subr.mxu0 %v2878
  %2977 = vmatpush2.msra.mxu0 %v2877
  %2978 = vmatprep.subr.mxu0 %v2876
  %2979 = vmatpush2.msra.mxu0 %v2875
  %2980 = vmatprep.subr.mxu0 %v2874
  %2981 = vmatpush2.msra.mxu0 %v2873
  %2982 = vmatprep.subr.mxu0 %v2872
  %2983 = vmatpush2.msra.mxu0 %v2871
  %2984 = vmatprep.subr.mxu0 %v2870
  %2985 = vmatpush2.msra.mxu0 %v2869
  %2986 = vmatprep.subr.mxu0 %v2868
  %2987 = vmatpush2.msra.mxu0 %v2867
  %2988 = vmatprep.subr.mxu0 %v2866
  %2989 = vmatpush2.msra.mxu0 %v2865
  %2990 = vmatprep.subr.mxu0 %v2864
  %2991 = vmatpush2.msra.mxu0 %v2863
  %2992 = vmatprep.subr.mxu0 %v2862
  %2993 = vmatpush2.msra.mxu0 %v2861
  %2994 = vmatprep.subr.mxu0 %v2860
  %2995 = vmatpush2.msra.mxu0 %v2859
  %2996 = vmatprep.subr.mxu0 %v2858
  %2997 = vmatpush2.msra.mxu0 %v2857
  %2998 = vmatprep.subr.mxu0 %v2856
  %2999 = vmatpush2.msra.mxu0 %v2855
  %3000 = vmatprep.subr.mxu0 %v2854
  %3001 = vmatpush2.msra.mxu0 %v2853
  %3002 = vmatprep.mubr.f32.mxu0 %v2920
  %3003 = vmatmul.mubr.f32.gmra.mxu0 %v2917
  %v3004 = vpop.f32.mrf.mxu0
  %v3005 = vadd.f32 0.0, %v3004
  %v3006 = vpop.f32.mrf.mxu0
  %v3007 = vadd.f32 0.0, %v3006
  %3008 = vmatprep.mubr.f32.mxu0 %v2927
  %3009 = vmatmul.mubr.f32.gmra.mxu0 %v2925
  %v3010 = vpop.f32.mrf.mxu0
  %v3011 = vadd.f32 0.0, %v3010
  %v3012 = vpop.f32.mrf.mxu0
  %v3013 = vadd.f32 0.0, %v3012
  %3014 = vdwg.mxu0
  %3015 = vmatprep.subr.mxu0 0.0
  %3016 = vmatpush1.msra.mxu0 0.0
  %3017 = vmatprep.subr.mxu0 0.0
  %3018 = vmatpush1.msra.mxu0 0.0
  %3019 = vmatprep.subr.mxu0 0.0
  %3020 = vmatpush1.msra.mxu0 0.0
  %3021 = vmatprep.subr.mxu0 0.0
  %3022 = vmatpush1.msra.mxu0 0.0
  %3023 = vmatprep.subr.mxu0 %v2908
  %3024 = vmatpush1.msra.mxu0 %v2907
  %3025 = vmatprep.subr.mxu0 %v2906
  %3026 = vmatpush1.msra.mxu0 %v2905
  %3027 = vmatprep.subr.mxu0 %v2904
  %3028 = vmatpush1.msra.mxu0 %v2903
  %3029 = vmatprep.subr.mxu0 %v2902
  %3030 = vmatpush1.msra.mxu0 %v2901
  %3031 = vmatprep.subr.mxu0 %v2900
  %3032 = vmatpush1.msra.mxu0 %v2899
  %3033 = vmatprep.subr.mxu0 %v2898
  %3034 = vmatpush1.msra.mxu0 %v2897
  %3035 = vmatprep.subr.mxu0 %v2896
  %3036 = vmatpush1.msra.mxu0 %v2895
  %3037 = vmatprep.subr.mxu0 %v2894
  %3038 = vmatpush1.msra.mxu0 %v2893
  %3039 = vmatprep.subr.mxu0 %v2892
  %3040 = vmatpush1.msra.mxu0 %v2891
  %3041 = vmatprep.subr.mxu0 %v2890
  %3042 = vmatpush1.msra.mxu0 %v2889
  %3043 = vmatprep.subr.mxu0 %v2888
  %3044 = vmatpush1.msra.mxu0 %v2887
  %3045 = vmatprep.subr.mxu0 %v2886
  %3046 = vmatpush1.msra.mxu0 %v2885
  %3047 = vmatprep.subr.mxu0 0.0
  %3048 = vmatpush2.msra.mxu0 0.0
  %3049 = vmatprep.subr.mxu0 0.0
  %3050 = vmatpush2.msra.mxu0 0.0
  %3051 = vmatprep.subr.mxu0 0.0
  %3052 = vmatpush2.msra.mxu0 0.0
  %3053 = vmatprep.subr.mxu0 0.0
  %3054 = vmatpush2.msra.mxu0 0.0
  %3055 = vmatprep.subr.mxu0 0.0
  %3056 = vmatpush2.msra.mxu0 0.0
  %3057 = vmatprep.subr.mxu0 0.0
  %3058 = vmatpush2.msra.mxu0 0.0
  %3059 = vmatprep.subr.mxu0 0.0
  %3060 = vmatpush2.msra.mxu0 0.0
  %3061 = vmatprep.subr.mxu0 0.0
  %3062 = vmatpush2.msra.mxu0 0.0
  %3063 = vmatprep.subr.mxu0 0.0
  %3064 = vmatpush2.msra.mxu0 0.0
  %3065 = vmatprep.subr.mxu0 0.0
  %3066 = vmatpush2.msra.mxu0 0.0
  %3067 = vmatprep.subr.mxu0 0.0
  %3068 = vmatpush2.msra.mxu0 0.0
  %3069 = vmatprep.subr.mxu0 0.0
  %3070 = vmatpush2.msra.mxu0 0.0
  %3071 = vmatprep.subr.mxu0 0.0
  %3072 = vmatpush2.msra.mxu0 0.0
  %3073 = vmatprep.subr.mxu0 0.0
  %3074 = vmatpush2.msra.mxu0 0.0
  %3075 = vmatprep.subr.mxu0 0.0
  %3076 = vmatpush2.msra.mxu0 0.0
  %3077 = vmatprep.subr.mxu0 0.0
  %3078 = vmatpush2.msra.mxu0 0.0
  %3079 = vmatprep.mubr.f32.mxu0 0.0
  %3080 = vmatmul.mubr.f32.gmra.mxu0 %v2934
  %v3081 = vpop.f32.mrf.mxu0
  %v3082 = vadd.f32 %v3005, %v3081
  %v3083 = vpop.f32.mrf.mxu0
  %v3084 = vadd.f32 %v3007, %v3083
  %3085 = vmatprep.mubr.f32.mxu0 0.0
  %3086 = vmatmul.mubr.f32.gmra.mxu0 %v2936
  %v3087 = vpop.f32.mrf.mxu0
  %v3088 = vadd.f32 %v3011, %v3087
  %v3089 = vpop.f32.mrf.mxu0
  %v3090 = vadd.f32 %v3013, %v3089
  %3091 = vdwg.mxu0
  %v3092 = vadd.f32 %v2811, %v3082
  %v3093 = vadd.f32 %v2812, %v3084
  %v3094 = vadd.f32 %v2813, %v3088
  %v3095 = vadd.f32 %v2814, %v3090
  %v3096 = vld [vmem:[%s2000] sm:$0xf0]
  %v3097 = vld [vmem:[%s2000 + $0x8] sm:$0xf0]
  %v3098 = vld [vmem:[%s2000 + $0x10] sm:$0xf0]
  %v3099 = vld [vmem:[%s2000 + $0x30] sm:$0xf]
  %v3100 = vld [vmem:[%s2000 + $0x38] sm:$0xf]
  %v3101 = vld [vmem:[%s2000 + $0x40] sm:$0xf]
  %v3102 = vld [vmem:[%s1126] sm:$0xff]
  %v3103 = vld [vmem:[%s1126 + $0x8] sm:$0xff]
  %v3104 = vld [vmem:[%s1126 + $0x10] sm:$0xff]
  %v3105 = vld [vmem:[%s1126 + $0x18] sm:$0xff]
  %v3106 = vld [vmem:[%s1126 + $0x20] sm:$0xff]
  %v3107 = vld [vmem:[%s1126 + $0x28] sm:$0xff]
  %v3108 = vld [vmem:[%s1126 + $0x30] sm:$0xff]
  %v3109 = vld [vmem:[%s1126 + $0x38] sm:$0xff]
  %v3110 = vld [vmem:[%s1126 + $0x40] sm:$0xff]
  %v3111 = vld [vmem:[%s1126 + $0x48] sm:$0xff]
  %v3112 = vld [vmem:[%s1126 + $0x50] sm:$0xff]
  %v3113 = vld [vmem:[%s1126 + $0x58] sm:$0xff]
  %v3114 = vld [vmem:[%s1126 + $0x60] sm:$0xff]
  %v3115 = vld [vmem:[%s1126 + $0x68] sm:$0xff]
  %v3116 = vld [vmem:[%s1126 + $0x70] sm:$0xff]
  %v3117 = vld [vmem:[%s1126 + $0x78] sm:$0xff]
  %v3118 = vld [vmem:[%s1126 + $0x80] sm:$0xff]
  %v3119 = vld [vmem:[%s1126 + $0x88] sm:$0xff]
  %v3120 = vld [vmem:[%s1126 + $0x90] sm:$0xff]
  %v3121 = vld [vmem:[%s1126 + $0x98] sm:$0xff]
  %v3122 = vld [vmem:[%s1126 + $0xa0] sm:$0xff]
  %v3123 = vld [vmem:[%s1126 + $0xa8] sm:$0xff]
  %v3124 = vld [vmem:[%s1126 + $0xb0] sm:$0xff]
  %v3125 = vld [vmem:[%s1126 + $0xb8] sm:$0xff]
  %v3126 = vld [vmem:[%s1126 + $0xc0] sm:$0xff]
  %v3127 = vld [vmem:[%s1126 + $0xc8] sm:$0xff]
  %v3128 = vld [vmem:[%s1126 + $0xd0] sm:$0xff]
  %v3129 = vld [vmem:[%s1126 + $0xd8] sm:$0xff]
  %v3130 = vld [vmem:[%s1126 + $0xe0] sm:$0xff]
  %v3131 = vld [vmem:[%s1126 + $0xe8] sm:$0xff]
  %v3132 = vld [vmem:[%s1126 + $0xf0] sm:$0xff]
  %v3133 = vld [vmem:[%s1126 + $0xf8] sm:$0xff]
  %v3134 = vld [vmem:[%s1126 + $0x100] sm:$0xff]
  %v3135 = vld [vmem:[%s1126 + $0x108] sm:$0xff]
  %v3136 = vld [vmem:[%s1126 + $0x110] sm:$0xff]
  %v3137 = vld [vmem:[%s1126 + $0x118] sm:$0xff]
  %v3138 = vld [vmem:[%s1126 + $0x120] sm:$0xff]
  %v3139 = vld [vmem:[%s1126 + $0x128] sm:$0xff]
  %v3140 = vld [vmem:[%s1126 + $0x130] sm:$0xff]
  %v3141 = vld [vmem:[%s1126 + $0x138] sm:$0xff]
  %v3142 = vld [vmem:[%s1126 + $0x140] sm:$0xff]
  %v3143 = vld [vmem:[%s1126 + $0x148] sm:$0xff]
  %v3144 = vld [vmem:[%s1126 + $0x150] sm:$0xff]
  %v3145 = vld [vmem:[%s1126 + $0x158] sm:$0xff]
  %v3146 = vld [vmem:[%s1126 + $0x160] sm:$0xff]
  %v3147 = vld [vmem:[%s1126 + $0x168] sm:$0xff]
  %v3148 = vld [vmem:[%s1126 + $0x170] sm:$0xff]
  %v3149 = vld [vmem:[%s1126 + $0x178] sm:$0xff]
  %v3150 = vld [vmem:[%s1126 + $0x180] sm:$0xff]
  %v3151 = vld [vmem:[%s1126 + $0x188] sm:$0xff]
  %v3152 = vld [vmem:[%s1126 + $0x190] sm:$0xff]
  %v3153 = vld [vmem:[%s1126 + $0x198] sm:$0xff]
  %v3154 = vld [vmem:[%s1126 + $0x1a0] sm:$0xff]
  %v3155 = vld [vmem:[%s1126 + $0x1a8] sm:$0xff]
  %v3156 = vld [vmem:[%s1126 + $0x1b0] sm:$0xff]
  %v3157 = vld [vmem:[%s1126 + $0x1b8] sm:$0xff]
  %v3158 = vld [vmem:[%s1126 + $0x1c0] sm:$0xff]
  %v3159 = vld [vmem:[%s1126 + $0x1c8] sm:$0xff]
  %v3160 = vld [vmem:[%s1126 + $0x1d0] sm:$0xff]
  %v3161 = vld [vmem:[%s1126 + $0x1d8] sm:$0xff]
  %v3162 = vld [vmem:[%s1126 + $0x1e0] sm:$0xff]
  %v3163 = vld [vmem:[%s1126 + $0x1e8] sm:$0xff]
  %v3164 = vld [vmem:[%s1126 + $0x1f0] sm:$0xff]
  %v3165 = vld [vmem:[%s1126 + $0x1f8] sm:$0xff]
  %v3166 = vld [vmem:[%s1126 + $0x200] sm:$0xff]
  %v3167 = vld [vmem:[%s1126 + $0x208] sm:$0xff]
  %v3168 = vld [vmem:[%s1126 + $0x210] sm:$0xff]
  %v3169 = vld [vmem:[%s1126 + $0x218] sm:$0xff]
  %v3170 = vld [vmem:[%s1126 + $0x220] sm:$0xff]
  %v3171 = vld [vmem:[%s1126 + $0x228] sm:$0xff]
  %v3172 = vld [vmem:[%s1126 + $0x230] sm:$0xff]
  %v3173 = vld [vmem:[%s1126 + $0x238] sm:$0xff]
  %v3174 = vld [vmem:[%s1126 + $0x240] sm:$0xff]
  %v3175 = vld [vmem:[%s1126 + $0x248] sm:$0xff]
  %v3176 = vld [vmem:[%s1126 + $0x250] sm:$0xff]
  %v3177 = vld [vmem:[%s1126 + $0x258] sm:$0xff]
  %v3178 = vld [vmem:[%s1126 + $0x260] sm:$0xff]
  %v3179 = vld [vmem:[%s1126 + $0x268] sm:$0xff]
  %v3180 = vld [vmem:[%s1126 + $0x270] sm:$0xff]
  %v3181 = vld [vmem:[%s1126 + $0x278] sm:$0xff]
  %v3182 = vld [vmem:[%s1126 + $0x280] sm:$0xff]
  %v3183 = vld [vmem:[%s1126 + $0x288] sm:$0xff]
  %v3184 = vld [vmem:[%s1126 + $0x290] sm:$0xff]
  %v3185 = vld [vmem:[%s1126 + $0x298] sm:$0xff]
  %v3186 = vld [vmem:[%s1126 + $0x2a0] sm:$0xff]
  %v3187 = vld [vmem:[%s1126 + $0x2a8] sm:$0xff]
  %v3188 = vld [vmem:[%s1126 + $0x2b0] sm:$0xff]
  %v3189 = vld [vmem:[%s1126 + $0x2b8] sm:$0xff]
  %v3196 = vrot.slane %v3096, 4
  %v3197 = vrot.slane %v2004, 4
  %v3198 = vsel %vm1221, %v3196, %v3197
  %v3199 = vrot.slane %v3097, 4
  %v3200 = vrot.slane %v2005, 4
  %v3201 = vsel %vm1221, %v3199, %v3200
  %v3202 = vrot.slane %v3098, 4
  %v3203 = vrot.slane %v2006, 4
  %v3204 = vsel %vm1221, %v3202, %v3203
  %v3205 = vrot.slane %v3099, 4
  %v3206 = vsel %vm1221, %v3197, %v3205
  %v3207 = vrot.slane %v3100, 4
  %v3208 = vsel %vm1221, %v3200, %v3207
  %v3209 = vrot.slane %v3101, 4
  %v3210 = vsel %vm1221, %v3203, %v3209
  %v3215 = vsel %vm236, %v3204, 0
  %v3217 = vsel %vm236, %v3210, 0
  %3219 = vmatprep.subr.mxu0 %v3133
  %3220 = vmatpush1.msra.mxu0 %v3132
  %3221 = vmatprep.subr.mxu0 %v3131
  %3222 = vmatpush1.msra.mxu0 %v3130
  %3223 = vmatprep.subr.mxu0 %v3129
  %3224 = vmatpush1.msra.mxu0 %v3128
  %3225 = vmatprep.subr.mxu0 %v3127
  %3226 = vmatpush1.msra.mxu0 %v3126
  %3227 = vmatprep.subr.mxu0 %v3125
  %3228 = vmatpush1.msra.mxu0 %v3124
  %3229 = vmatprep.subr.mxu0 %v3123
  %3230 = vmatpush1.msra.mxu0 %v3122
  %3231 = vmatprep.subr.mxu0 %v3121
  %3232 = vmatpush1.msra.mxu0 %v3120
  %3233 = vmatprep.subr.mxu0 %v3119
  %3234 = vmatpush1.msra.mxu0 %v3118
  %3235 = vmatprep.subr.mxu0 %v3117
  %3236 = vmatpush1.msra.mxu0 %v3116
  %3237 = vmatprep.subr.mxu0 %v3115
  %3238 = vmatpush1.msra.mxu0 %v3114
  %3239 = vmatprep.subr.mxu0 %v3113
  %3240 = vmatpush1.msra.mxu0 %v3112
  %3241 = vmatprep.subr.mxu0 %v3111
  %3242 = vmatpush1.msra.mxu0 %v3110
  %3243 = vmatprep.subr.mxu0 %v3109
  %3244 = vmatpush1.msra.mxu0 %v3108
  %3245 = vmatprep.subr.mxu0 %v3107
  %3246 = vmatpush1.msra.mxu0 %v3106
  %3247 = vmatprep.subr.mxu0 %v3105
  %3248 = vmatpush1.msra.mxu0 %v3104
  %3249 = vmatprep.subr.mxu0 %v3103
  %3250 = vmatpush1.msra.mxu0 %v3102
  %3251 = vmatprep.subr.mxu0 %v3165
  %3252 = vmatpush2.msra.mxu0 %v3164
  %3253 = vmatprep.subr.mxu0 %v3163
  %3254 = vmatpush2.msra.mxu0 %v3162
  %3255 = vmatprep.subr.mxu0 %v3161
  %3256 = vmatpush2.msra.mxu0 %v3160
  %3257 = vmatprep.subr.mxu0 %v3159
  %3258 = vmatpush2.msra.mxu0 %v3158
  %3259 = vmatprep.subr.mxu0 %v3157
  %3260 = vmatpush2.msra.mxu0 %v3156
  %3261 = vmatprep.subr.mxu0 %v3155
  %3262 = vmatpush2.msra.mxu0 %v3154
  %3263 = vmatprep.subr.mxu0 %v3153
  %3264 = vmatpush2.msra.mxu0 %v3152
  %3265 = vmatprep.subr.mxu0 %v3151
  %3266 = vmatpush2.msra.mxu0 %v3150
  %3267 = vmatprep.subr.mxu0 %v3149
  %3268 = vmatpush2.msra.mxu0 %v3148
  %3269 = vmatprep.subr.mxu0 %v3147
  %3270 = vmatpush2.msra.mxu0 %v3146
  %3271 = vmatprep.subr.mxu0 %v3145
  %3272 = vmatpush2.msra.mxu0 %v3144
  %3273 = vmatprep.subr.mxu0 %v3143
  %3274 = vmatpush2.msra.mxu0 %v3142
  %3275 = vmatprep.subr.mxu0 %v3141
  %3276 = vmatpush2.msra.mxu0 %v3140
  %3277 = vmatprep.subr.mxu0 %v3139
  %3278 = vmatpush2.msra.mxu0 %v3138
  %3279 = vmatprep.subr.mxu0 %v3137
  %3280 = vmatpush2.msra.mxu0 %v3136
  %3281 = vmatprep.subr.mxu0 %v3135
  %3282 = vmatpush2.msra.mxu0 %v3134
  %3283 = vmatprep.mubr.f32.mxu0 %v3201
  %3284 = vmatmul.mubr.f32.gmra.mxu0 %v3198
  %v3285 = vpop.f32.mrf.mxu0
  %v3286 = vadd.f32 0.0, %v3285
  %v3287 = vpop.f32.mrf.mxu0
  %v3288 = vadd.f32 0.0, %v3287
  %3289 = vmatprep.mubr.f32.mxu0 %v3208
  %3290 = vmatmul.mubr.f32.gmra.mxu0 %v3206
  %v3291 = vpop.f32.mrf.mxu0
  %v3292 = vadd.f32 0.0, %v3291
  %v3293 = vpop.f32.mrf.mxu0
  %v3294 = vadd.f32 0.0, %v3293
  %3295 = vdwg.mxu0
  %3296 = vmatprep.subr.mxu0 0.0
  %3297 = vmatpush1.msra.mxu0 0.0
  %3298 = vmatprep.subr.mxu0 0.0
  %3299 = vmatpush1.msra.mxu0 0.0
  %3300 = vmatprep.subr.mxu0 0.0
  %3301 = vmatpush1.msra.mxu0 0.0
  %3302 = vmatprep.subr.mxu0 0.0
  %3303 = vmatpush1.msra.mxu0 0.0
  %3304 = vmatprep.subr.mxu0 %v3189
  %3305 = vmatpush1.msra.mxu0 %v3188
  %3306 = vmatprep.subr.mxu0 %v3187
  %3307 = vmatpush1.msra.mxu0 %v3186
  %3308 = vmatprep.subr.mxu0 %v3185
  %3309 = vmatpush1.msra.mxu0 %v3184
  %3310 = vmatprep.subr.mxu0 %v3183
  %3311 = vmatpush1.msra.mxu0 %v3182
  %3312 = vmatprep.subr.mxu0 %v3181
  %3313 = vmatpush1.msra.mxu0 %v3180
  %3314 = vmatprep.subr.mxu0 %v3179
  %3315 = vmatpush1.msra.mxu0 %v3178
  %3316 = vmatprep.subr.mxu0 %v3177
  %3317 = vmatpush1.msra.mxu0 %v3176
  %3318 = vmatprep.subr.mxu0 %v3175
  %3319 = vmatpush1.msra.mxu0 %v3174
  %3320 = vmatprep.subr.mxu0 %v3173
  %3321 = vmatpush1.msra.mxu0 %v3172
  %3322 = vmatprep.subr.mxu0 %v3171
  %3323 = vmatpush1.msra.mxu0 %v3170
  %3324 = vmatprep.subr.mxu0 %v3169
  %3325 = vmatpush1.msra.mxu0 %v3168
  %3326 = vmatprep.subr.mxu0 %v3167
  %3327 = vmatpush1.msra.mxu0 %v3166
  %3328 = vmatprep.subr.mxu0 0.0
  %3329 = vmatpush2.msra.mxu0 0.0
  %3330 = vmatprep.subr.mxu0 0.0
  %3331 = vmatpush2.msra.mxu0 0.0
  %3332 = vmatprep.subr.mxu0 0.0
  %3333 = vmatpush2.msra.mxu0 0.0
  %3334 = vmatprep.subr.mxu0 0.0
  %3335 = vmatpush2.msra.mxu0 0.0
  %3336 = vmatprep.subr.mxu0 0.0
  %3337 = vmatpush2.msra.mxu0 0.0
  %3338 = vmatprep.subr.mxu0 0.0
  %3339 = vmatpush2.msra.mxu0 0.0
  %3340 = vmatprep.subr.mxu0 0.0
  %3341 = vmatpush2.msra.mxu0 0.0
  %3342 = vmatprep.subr.mxu0 0.0
  %3343 = vmatpush2.msra.mxu0 0.0
  %3344 = vmatprep.subr.mxu0 0.0
  %3345 = vmatpush2.msra.mxu0 0.0
  %3346 = vmatprep.subr.mxu0 0.0
  %3347 = vmatpush2.msra.mxu0 0.0
  %3348 = vmatprep.subr.mxu0 0.0
  %3349 = vmatpush2.msra.mxu0 0.0
  %3350 = vmatprep.subr.mxu0 0.0
  %3351 = vmatpush2.msra.mxu0 0.0
  %3352 = vmatprep.subr.mxu0 0.0
  %3353 = vmatpush2.msra.mxu0 0.0
  %3354 = vmatprep.subr.mxu0 0.0
  %3355 = vmatpush2.msra.mxu0 0.0
  %3356 = vmatprep.subr.mxu0 0.0
  %3357 = vmatpush2.msra.mxu0 0.0
  %3358 = vmatprep.subr.mxu0 0.0
  %3359 = vmatpush2.msra.mxu0 0.0
  %3360 = vmatprep.mubr.f32.mxu0 0.0
  %3361 = vmatmul.mubr.f32.gmra.mxu0 %v3215
  %v3362 = vpop.f32.mrf.mxu0
  %v3363 = vadd.f32 %v3286, %v3362
  %v3364 = vpop.f32.mrf.mxu0
  %v3365 = vadd.f32 %v3288, %v3364
  %3366 = vmatprep.mubr.f32.mxu0 0.0
  %3367 = vmatmul.mubr.f32.gmra.mxu0 %v3217
  %v3368 = vpop.f32.mrf.mxu0
  %v3369 = vadd.f32 %v3292, %v3368
  %v3370 = vpop.f32.mrf.mxu0
  %v3371 = vadd.f32 %v3294, %v3370
  %3372 = vdwg.mxu0
  %v3373 = vadd.f32 %v3092, %v3363
  %v3374 = vadd.f32 %v3093, %v3365
  %v3375 = vadd.f32 %v3094, %v3369
  %v3376 = vadd.f32 %v3095, %v3371
  %v3377 = vld [vmem:[%s2000] sm:$0xe0]
  %v3378 = vld [vmem:[%s2000 + $0x8] sm:$0xe0]
  %v3379 = vld [vmem:[%s2000 + $0x10] sm:$0xe0]
  %v3380 = vld [vmem:[%s2000 + $0x30] sm:$0x1f]
  %v3381 = vld [vmem:[%s2000 + $0x38] sm:$0x1f]
  %v3382 = vld [vmem:[%s2000 + $0x40] sm:$0x1f]
  %v3383 = vld [vmem:[%s1409] sm:$0xff]
  %v3384 = vld [vmem:[%s1409 + $0x8] sm:$0xff]
  %v3385 = vld [vmem:[%s1409 + $0x10] sm:$0xff]
  %v3386 = vld [vmem:[%s1409 + $0x18] sm:$0xff]
  %v3387 = vld [vmem:[%s1409 + $0x20] sm:$0xff]
  %v3388 = vld [vmem:[%s1409 + $0x28] sm:$0xff]
  %v3389 = vld [vmem:[%s1409 + $0x30] sm:$0xff]
  %v3390 = vld [vmem:[%s1409 + $0x38] sm:$0xff]
  %v3391 = vld [vmem:[%s1409 + $0x40] sm:$0xff]
  %v3392 = vld [vmem:[%s1409 + $0x48] sm:$0xff]
  %v3393 = vld [vmem:[%s1409 + $0x50] sm:$0xff]
  %v3394 = vld [vmem:[%s1409 + $0x58] sm:$0xff]
  %v3395 = vld [vmem:[%s1409 + $0x60] sm:$0xff]
  %v3396 = vld [vmem:[%s1409 + $0x68] sm:$0xff]
  %v3397 = vld [vmem:[%s1409 + $0x70] sm:$0xff]
  %v3398 = vld [vmem:[%s1409 + $0x78] sm:$0xff]
  %v3399 = vld [vmem:[%s1409 + $0x80] sm:$0xff]
  %v3400 = vld [vmem:[%s1409 + $0x88] sm:$0xff]
  %v3401 = vld [vmem:[%s1409 + $0x90] sm:$0xff]
  %v3402 = vld [vmem:[%s1409 + $0x98] sm:$0xff]
  %v3403 = vld [vmem:[%s1409 + $0xa0] sm:$0xff]
  %v3404 = vld [vmem:[%s1409 + $0xa8] sm:$0xff]
  %v3405 = vld [vmem:[%s1409 + $0xb0] sm:$0xff]
  %v3406 = vld [vmem:[%s1409 + $0xb8] sm:$0xff]
  %v3407 = vld [vmem:[%s1409 + $0xc0] sm:$0xff]
  %v3408 = vld [vmem:[%s1409 + $0xc8] sm:$0xff]
  %v3409 = vld [vmem:[%s1409 + $0xd0] sm:$0xff]
  %v3410 = vld [vmem:[%s1409 + $0xd8] sm:$0xff]
  %v3411 = vld [vmem:[%s1409 + $0xe0] sm:$0xff]
  %v3412 = vld [vmem:[%s1409 + $0xe8] sm:$0xff]
  %v3413 = vld [vmem:[%s1409 + $0xf0] sm:$0xff]
  %v3414 = vld [vmem:[%s1409 + $0xf8] sm:$0xff]
  %v3415 = vld [vmem:[%s1409 + $0x100] sm:$0xff]
  %v3416 = vld [vmem:[%s1409 + $0x108] sm:$0xff]
  %v3417 = vld [vmem:[%s1409 + $0x110] sm:$0xff]
  %v3418 = vld [vmem:[%s1409 + $0x118] sm:$0xff]
  %v3419 = vld [vmem:[%s1409 + $0x120] sm:$0xff]
  %v3420 = vld [vmem:[%s1409 + $0x128] sm:$0xff]
  %v3421 = vld [vmem:[%s1409 + $0x130] sm:$0xff]
  %v3422 = vld [vmem:[%s1409 + $0x138] sm:$0xff]
  %v3423 = vld [vmem:[%s1409 + $0x140] sm:$0xff]
  %v3424 = vld [vmem:[%s1409 + $0x148] sm:$0xff]
  %v3425 = vld [vmem:[%s1409 + $0x150] sm:$0xff]
  %v3426 = vld [vmem:[%s1409 + $0x158] sm:$0xff]
  %v3427 = vld [vmem:[%s1409 + $0x160] sm:$0xff]
  %v3428 = vld [vmem:[%s1409 + $0x168] sm:$0xff]
  %v3429 = vld [vmem:[%s1409 + $0x170] sm:$0xff]
  %v3430 = vld [vmem:[%s1409 + $0x178] sm:$0xff]
  %v3431 = vld [vmem:[%s1409 + $0x180] sm:$0xff]
  %v3432 = vld [vmem:[%s1409 + $0x188] sm:$0xff]
  %v3433 = vld [vmem:[%s1409 + $0x190] sm:$0xff]
  %v3434 = vld [vmem:[%s1409 + $0x198] sm:$0xff]
  %v3435 = vld [vmem:[%s1409 + $0x1a0] sm:$0xff]
  %v3436 = vld [vmem:[%s1409 + $0x1a8] sm:$0xff]
  %v3437 = vld [vmem:[%s1409 + $0x1b0] sm:$0xff]
  %v3438 = vld [vmem:[%s1409 + $0x1b8] sm:$0xff]
  %v3439 = vld [vmem:[%s1409 + $0x1c0] sm:$0xff]
  %v3440 = vld [vmem:[%s1409 + $0x1c8] sm:$0xff]
  %v3441 = vld [vmem:[%s1409 + $0x1d0] sm:$0xff]
  %v3442 = vld [vmem:[%s1409 + $0x1d8] sm:$0xff]
  %v3443 = vld [vmem:[%s1409 + $0x1e0] sm:$0xff]
  %v3444 = vld [vmem:[%s1409 + $0x1e8] sm:$0xff]
  %v3445 = vld [vmem:[%s1409 + $0x1f0] sm:$0xff]
  %v3446 = vld [vmem:[%s1409 + $0x1f8] sm:$0xff]
  %v3447 = vld [vmem:[%s1409 + $0x200] sm:$0xff]
  %v3448 = vld [vmem:[%s1409 + $0x208] sm:$0xff]
  %v3449 = vld [vmem:[%s1409 + $0x210] sm:$0xff]
  %v3450 = vld [vmem:[%s1409 + $0x218] sm:$0xff]
  %v3451 = vld [vmem:[%s1409 + $0x220] sm:$0xff]
  %v3452 = vld [vmem:[%s1409 + $0x228] sm:$0xff]
  %v3453 = vld [vmem:[%s1409 + $0x230] sm:$0xff]
  %v3454 = vld [vmem:[%s1409 + $0x238] sm:$0xff]
  %v3455 = vld [vmem:[%s1409 + $0x240] sm:$0xff]
  %v3456 = vld [vmem:[%s1409 + $0x248] sm:$0xff]
  %v3457 = vld [vmem:[%s1409 + $0x250] sm:$0xff]
  %v3458 = vld [vmem:[%s1409 + $0x258] sm:$0xff]
  %v3459 = vld [vmem:[%s1409 + $0x260] sm:$0xff]
  %v3460 = vld [vmem:[%s1409 + $0x268] sm:$0xff]
  %v3461 = vld [vmem:[%s1409 + $0x270] sm:$0xff]
  %v3462 = vld [vmem:[%s1409 + $0x278] sm:$0xff]
  %v3463 = vld [vmem:[%s1409 + $0x280] sm:$0xff]
  %v3464 = vld [vmem:[%s1409 + $0x288] sm:$0xff]
  %v3465 = vld [vmem:[%s1409 + $0x290] sm:$0xff]
  %v3466 = vld [vmem:[%s1409 + $0x298] sm:$0xff]
  %v3467 = vld [vmem:[%s1409 + $0x2a0] sm:$0xff]
  %v3468 = vld [vmem:[%s1409 + $0x2a8] sm:$0xff]
  %v3469 = vld [vmem:[%s1409 + $0x2b0] sm:$0xff]
  %v3470 = vld [vmem:[%s1409 + $0x2b8] sm:$0xff]
  %v3477 = vrot.slane %v3377, 5
  %v3478 = vrot.slane %v2004, 5
  %v3479 = vsel %vm1504, %v3477, %v3478
  %v3480 = vrot.slane %v3378, 5
  %v3481 = vrot.slane %v2005, 5
  %v3482 = vsel %vm1504, %v3480, %v3481
  %v3483 = vrot.slane %v3379, 5
  %v3484 = vrot.slane %v2006, 5
  %v3485 = vsel %vm1504, %v3483, %v3484
  %v3486 = vrot.slane %v3380, 5
  %v3487 = vsel %vm1504, %v3478, %v3486
  %v3488 = vrot.slane %v3381, 5
  %v3489 = vsel %vm1504, %v3481, %v3488
  %v3490 = vrot.slane %v3382, 5
  %v3491 = vsel %vm1504, %v3484, %v3490
  %v3496 = vsel %vm236, %v3485, 0
  %v3498 = vsel %vm236, %v3491, 0
  %3500 = vmatprep.subr.mxu0 %v3414
  %3501 = vmatpush1.msra.mxu0 %v3413
  %3502 = vmatprep.subr.mxu0 %v3412
  %3503 = vmatpush1.msra.mxu0 %v3411
  %3504 = vmatprep.subr.mxu0 %v3410
  %3505 = vmatpush1.msra.mxu0 %v3409
  %3506 = vmatprep.subr.mxu0 %v3408
  %3507 = vmatpush1.msra.mxu0 %v3407
  %3508 = vmatprep.subr.mxu0 %v3406
  %3509 = vmatpush1.msra.mxu0 %v3405
  %3510 = vmatprep.subr.mxu0 %v3404
  %3511 = vmatpush1.msra.mxu0 %v3403
  %3512 = vmatprep.subr.mxu0 %v3402
  %3513 = vmatpush1.msra.mxu0 %v3401
  %3514 = vmatprep.subr.mxu0 %v3400
  %3515 = vmatpush1.msra.mxu0 %v3399
  %3516 = vmatprep.subr.mxu0 %v3398
  %3517 = vmatpush1.msra.mxu0 %v3397
  %3518 = vmatprep.subr.mxu0 %v3396
  %3519 = vmatpush1.msra.mxu0 %v3395
  %3520 = vmatprep.subr.mxu0 %v3394
  %3521 = vmatpush1.msra.mxu0 %v3393
  %3522 = vmatprep.subr.mxu0 %v3392
  %3523 = vmatpush1.msra.mxu0 %v3391
  %3524 = vmatprep.subr.mxu0 %v3390
  %3525 = vmatpush1.msra.mxu0 %v3389
  %3526 = vmatprep.subr.mxu0 %v3388
  %3527 = vmatpush1.msra.mxu0 %v3387
  %3528 = vmatprep.subr.mxu0 %v3386
  %3529 = vmatpush1.msra.mxu0 %v3385
  %3530 = vmatprep.subr.mxu0 %v3384
  %3531 = vmatpush1.msra.mxu0 %v3383
  %3532 = vmatprep.subr.mxu0 %v3446
  %3533 = vmatpush2.msra.mxu0 %v3445
  %3534 = vmatprep.subr.mxu0 %v3444
  %3535 = vmatpush2.msra.mxu0 %v3443
  %3536 = vmatprep.subr.mxu0 %v3442
  %3537 = vmatpush2.msra.mxu0 %v3441
  %3538 = vmatprep.subr.mxu0 %v3440
  %3539 = vmatpush2.msra.mxu0 %v3439
  %3540 = vmatprep.subr.mxu0 %v3438
  %3541 = vmatpush2.msra.mxu0 %v3437
  %3542 = vmatprep.subr.mxu0 %v3436
  %3543 = vmatpush2.msra.mxu0 %v3435
  %3544 = vmatprep.subr.mxu0 %v3434
  %3545 = vmatpush2.msra.mxu0 %v3433
  %3546 = vmatprep.subr.mxu0 %v3432
  %3547 = vmatpush2.msra.mxu0 %v3431
  %3548 = vmatprep.subr.mxu0 %v3430
  %3549 = vmatpush2.msra.mxu0 %v3429
  %3550 = vmatprep.subr.mxu0 %v3428
  %3551 = vmatpush2.msra.mxu0 %v3427
  %3552 = vmatprep.subr.mxu0 %v3426
  %3553 = vmatpush2.msra.mxu0 %v3425
  %3554 = vmatprep.subr.mxu0 %v3424
  %3555 = vmatpush2.msra.mxu0 %v3423
  %3556 = vmatprep.subr.mxu0 %v3422
  %3557 = vmatpush2.msra.mxu0 %v3421
  %3558 = vmatprep.subr.mxu0 %v3420
  %3559 = vmatpush2.msra.mxu0 %v3419
  %3560 = vmatprep.subr.mxu0 %v3418
  %3561 = vmatpush2.msra.mxu0 %v3417
  %3562 = vmatprep.subr.mxu0 %v3416
  %3563 = vmatpush2.msra.mxu0 %v3415
  %3564 = vmatprep.mubr.f32.mxu0 %v3482
  %3565 = vmatmul.mubr.f32.gmra.mxu0 %v3479
  %v3566 = vpop.f32.mrf.mxu0
  %v3567 = vadd.f32 0.0, %v3566
  %v3568 = vpop.f32.mrf.mxu0
  %v3569 = vadd.f32 0.0, %v3568
  %3570 = vmatprep.mubr.f32.mxu0 %v3489
  %3571 = vmatmul.mubr.f32.gmra.mxu0 %v3487
  %v3572 = vpop.f32.mrf.mxu0
  %v3573 = vadd.f32 0.0, %v3572
  %v3574 = vpop.f32.mrf.mxu0
  %v3575 = vadd.f32 0.0, %v3574
  %3576 = vdwg.mxu0
  %3577 = vmatprep.subr.mxu0 0.0
  %3578 = vmatpush1.msra.mxu0 0.0
  %3579 = vmatprep.subr.mxu0 0.0
  %3580 = vmatpush1.msra.mxu0 0.0
  %3581 = vmatprep.subr.mxu0 0.0
  %3582 = vmatpush1.msra.mxu0 0.0
  %3583 = vmatprep.subr.mxu0 0.0
  %3584 = vmatpush1.msra.mxu0 0.0
  %3585 = vmatprep.subr.mxu0 %v3470
  %3586 = vmatpush1.msra.mxu0 %v3469
  %3587 = vmatprep.subr.mxu0 %v3468
  %3588 = vmatpush1.msra.mxu0 %v3467
  %3589 = vmatprep.subr.mxu0 %v3466
  %3590 = vmatpush1.msra.mxu0 %v3465
  %3591 = vmatprep.subr.mxu0 %v3464
  %3592 = vmatpush1.msra.mxu0 %v3463
  %3593 = vmatprep.subr.mxu0 %v3462
  %3594 = vmatpush1.msra.mxu0 %v3461
  %3595 = vmatprep.subr.mxu0 %v3460
  %3596 = vmatpush1.msra.mxu0 %v3459
  %3597 = vmatprep.subr.mxu0 %v3458
  %3598 = vmatpush1.msra.mxu0 %v3457
  %3599 = vmatprep.subr.mxu0 %v3456
  %3600 = vmatpush1.msra.mxu0 %v3455
  %3601 = vmatprep.subr.mxu0 %v3454
  %3602 = vmatpush1.msra.mxu0 %v3453
  %3603 = vmatprep.subr.mxu0 %v3452
  %3604 = vmatpush1.msra.mxu0 %v3451
  %3605 = vmatprep.subr.mxu0 %v3450
  %3606 = vmatpush1.msra.mxu0 %v3449
  %3607 = vmatprep.subr.mxu0 %v3448
  %3608 = vmatpush1.msra.mxu0 %v3447
  %3609 = vmatprep.subr.mxu0 0.0
  %3610 = vmatpush2.msra.mxu0 0.0
  %3611 = vmatprep.subr.mxu0 0.0
  %3612 = vmatpush2.msra.mxu0 0.0
  %3613 = vmatprep.subr.mxu0 0.0
  %3614 = vmatpush2.msra.mxu0 0.0
  %3615 = vmatprep.subr.mxu0 0.0
  %3616 = vmatpush2.msra.mxu0 0.0
  %3617 = vmatprep.subr.mxu0 0.0
  %3618 = vmatpush2.msra.mxu0 0.0
  %3619 = vmatprep.subr.mxu0 0.0
  %3620 = vmatpush2.msra.mxu0 0.0
  %3621 = vmatprep.subr.mxu0 0.0
  %3622 = vmatpush2.msra.mxu0 0.0
  %3623 = vmatprep.subr.mxu0 0.0
  %3624 = vmatpush2.msra.mxu0 0.0
  %3625 = vmatprep.subr.mxu0 0.0
  %3626 = vmatpush2.msra.mxu0 0.0
  %3627 = vmatprep.subr.mxu0 0.0
  %3628 = vmatpush2.msra.mxu0 0.0
  %3629 = vmatprep.subr.mxu0 0.0
  %3630 = vmatpush2.msra.mxu0 0.0
  %3631 = vmatprep.subr.mxu0 0.0
  %3632 = vmatpush2.msra.mxu0 0.0
  %3633 = vmatprep.subr.mxu0 0.0
  %3634 = vmatpush2.msra.mxu0 0.0
  %3635 = vmatprep.subr.mxu0 0.0
  %3636 = vmatpush2.msra.mxu0 0.0
  %3637 = vmatprep.subr.mxu0 0.0
  %3638 = vmatpush2.msra.mxu0 0.0
  %3639 = vmatprep.subr.mxu0 0.0
  %3640 = vmatpush2.msra.mxu0 0.0
  %3641 = vmatprep.mubr.f32.mxu0 0.0
  %3642 = vmatmul.mubr.f32.gmra.mxu0 %v3496
  %v3643 = vpop.f32.mrf.mxu0
  %v3644 = vadd.f32 %v3567, %v3643
  %v3645 = vpop.f32.mrf.mxu0
  %v3646 = vadd.f32 %v3569, %v3645
  %3647 = vmatprep.mubr.f32.mxu0 0.0
  %3648 = vmatmul.mubr.f32.gmra.mxu0 %v3498
  %v3649 = vpop.f32.mrf.mxu0
  %v3650 = vadd.f32 %v3573, %v3649
  %v3651 = vpop.f32.mrf.mxu0
  %v3652 = vadd.f32 %v3575, %v3651
  %3653 = vdwg.mxu0
  %v3654 = vadd.f32 %v3373, %v3644
  %v3655 = vadd.f32 %v3374, %v3646
  %v3656 = vadd.f32 %v3375, %v3650
  %v3657 = vadd.f32 %v3376, %v3652
  %v3658 = vld [vmem:[%s2000] sm:$0xc0]
  %v3659 = vld [vmem:[%s2000 + $0x8] sm:$0xc0]
  %v3660 = vld [vmem:[%s2000 + $0x10] sm:$0xc0]
  %v3661 = vld [vmem:[%s2000 + $0x30] sm:$0x3f]
  %v3662 = vld [vmem:[%s2000 + $0x38] sm:$0x3f]
  %v3663 = vld [vmem:[%s2000 + $0x40] sm:$0x3f]
  %v3664 = vld [vmem:[%s1692] sm:$0xff]
  %v3665 = vld [vmem:[%s1692 + $0x8] sm:$0xff]
  %v3666 = vld [vmem:[%s1692 + $0x10] sm:$0xff]
  %v3667 = vld [vmem:[%s1692 + $0x18] sm:$0xff]
  %v3668 = vld [vmem:[%s1692 + $0x20] sm:$0xff]
  %v3669 = vld [vmem:[%s1692 + $0x28] sm:$0xff]
  %v3670 = vld [vmem:[%s1692 + $0x30] sm:$0xff]
  %v3671 = vld [vmem:[%s1692 + $0x38] sm:$0xff]
  %v3672 = vld [vmem:[%s1692 + $0x40] sm:$0xff]
  %v3673 = vld [vmem:[%s1692 + $0x48] sm:$0xff]
  %v3674 = vld [vmem:[%s1692 + $0x50] sm:$0xff]
  %v3675 = vld [vmem:[%s1692 + $0x58] sm:$0xff]
  %v3676 = vld [vmem:[%s1692 + $0x60] sm:$0xff]
  %v3677 = vld [vmem:[%s1692 + $0x68] sm:$0xff]
  %v3678 = vld [vmem:[%s1692 + $0x70] sm:$0xff]
  %v3679 = vld [vmem:[%s1692 + $0x78] sm:$0xff]
  %v3680 = vld [vmem:[%s1692 + $0x80] sm:$0xff]
  %v3681 = vld [vmem:[%s1692 + $0x88] sm:$0xff]
  %v3682 = vld [vmem:[%s1692 + $0x90] sm:$0xff]
  %v3683 = vld [vmem:[%s1692 + $0x98] sm:$0xff]
  %v3684 = vld [vmem:[%s1692 + $0xa0] sm:$0xff]
  %v3685 = vld [vmem:[%s1692 + $0xa8] sm:$0xff]
  %v3686 = vld [vmem:[%s1692 + $0xb0] sm:$0xff]
  %v3687 = vld [vmem:[%s1692 + $0xb8] sm:$0xff]
  %v3688 = vld [vmem:[%s1692 + $0xc0] sm:$0xff]
  %v3689 = vld [vmem:[%s1692 + $0xc8] sm:$0xff]
  %v3690 = vld [vmem:[%s1692 + $0xd0] sm:$0xff]
  %v3691 = vld [vmem:[%s1692 + $0xd8] sm:$0xff]
  %v3692 = vld [vmem:[%s1692 + $0xe0] sm:$0xff]
  %v3693 = vld [vmem:[%s1692 + $0xe8] sm:$0xff]
  %v3694 = vld [vmem:[%s1692 + $0xf0] sm:$0xff]
  %v3695 = vld [vmem:[%s1692 + $0xf8] sm:$0xff]
  %v3696 = vld [vmem:[%s1692 + $0x100] sm:$0xff]
  %v3697 = vld [vmem:[%s1692 + $0x108] sm:$0xff]
  %v3698 = vld [vmem:[%s1692 + $0x110] sm:$0xff]
  %v3699 = vld [vmem:[%s1692 + $0x118] sm:$0xff]
  %v3700 = vld [vmem:[%s1692 + $0x120] sm:$0xff]
  %v3701 = vld [vmem:[%s1692 + $0x128] sm:$0xff]
  %v3702 = vld [vmem:[%s1692 + $0x130] sm:$0xff]
  %v3703 = vld [vmem:[%s1692 + $0x138] sm:$0xff]
  %v3704 = vld [vmem:[%s1692 + $0x140] sm:$0xff]
  %v3705 = vld [vmem:[%s1692 + $0x148] sm:$0xff]
  %v3706 = vld [vmem:[%s1692 + $0x150] sm:$0xff]
  %v3707 = vld [vmem:[%s1692 + $0x158] sm:$0xff]
  %v3708 = vld [vmem:[%s1692 + $0x160] sm:$0xff]
  %v3709 = vld [vmem:[%s1692 + $0x168] sm:$0xff]
  %v3710 = vld [vmem:[%s1692 + $0x170] sm:$0xff]
  %v3711 = vld [vmem:[%s1692 + $0x178] sm:$0xff]
  %v3712 = vld [vmem:[%s1692 + $0x180] sm:$0xff]
  %v3713 = vld [vmem:[%s1692 + $0x188] sm:$0xff]
  %v3714 = vld [vmem:[%s1692 + $0x190] sm:$0xff]
  %v3715 = vld [vmem:[%s1692 + $0x198] sm:$0xff]
  %v3716 = vld [vmem:[%s1692 + $0x1a0] sm:$0xff]
  %v3717 = vld [vmem:[%s1692 + $0x1a8] sm:$0xff]
  %v3718 = vld [vmem:[%s1692 + $0x1b0] sm:$0xff]
  %v3719 = vld [vmem:[%s1692 + $0x1b8] sm:$0xff]
  %v3720 = vld [vmem:[%s1692 + $0x1c0] sm:$0xff]
  %v3721 = vld [vmem:[%s1692 + $0x1c8] sm:$0xff]
  %v3722 = vld [vmem:[%s1692 + $0x1d0] sm:$0xff]
  %v3723 = vld [vmem:[%s1692 + $0x1d8] sm:$0xff]
  %v3724 = vld [vmem:[%s1692 + $0x1e0] sm:$0xff]
  %v3725 = vld [vmem:[%s1692 + $0x1e8] sm:$0xff]
  %v3726 = vld [vmem:[%s1692 + $0x1f0] sm:$0xff]
  %v3727 = vld [vmem:[%s1692 + $0x1f8] sm:$0xff]
  %v3728 = vld [vmem:[%s1692 + $0x200] sm:$0xff]
  %v3729 = vld [vmem:[%s1692 + $0x208] sm:$0xff]
  %v3730 = vld [vmem:[%s1692 + $0x210] sm:$0xff]
  %v3731 = vld [vmem:[%s1692 + $0x218] sm:$0xff]
  %v3732 = vld [vmem:[%s1692 + $0x220] sm:$0xff]
  %v3733 = vld [vmem:[%s1692 + $0x228] sm:$0xff]
  %v3734 = vld [vmem:[%s1692 + $0x230] sm:$0xff]
  %v3735 = vld [vmem:[%s1692 + $0x238] sm:$0xff]
  %v3736 = vld [vmem:[%s1692 + $0x240] sm:$0xff]
  %v3737 = vld [vmem:[%s1692 + $0x248] sm:$0xff]
  %v3738 = vld [vmem:[%s1692 + $0x250] sm:$0xff]
  %v3739 = vld [vmem:[%s1692 + $0x258] sm:$0xff]
  %v3740 = vld [vmem:[%s1692 + $0x260] sm:$0xff]
  %v3741 = vld [vmem:[%s1692 + $0x268] sm:$0xff]
  %v3742 = vld [vmem:[%s1692 + $0x270] sm:$0xff]
  %v3743 = vld [vmem:[%s1692 + $0x278] sm:$0xff]
  %v3744 = vld [vmem:[%s1692 + $0x280] sm:$0xff]
  %v3745 = vld [vmem:[%s1692 + $0x288] sm:$0xff]
  %v3746 = vld [vmem:[%s1692 + $0x290] sm:$0xff]
  %v3747 = vld [vmem:[%s1692 + $0x298] sm:$0xff]
  %v3748 = vld [vmem:[%s1692 + $0x2a0] sm:$0xff]
  %v3749 = vld [vmem:[%s1692 + $0x2a8] sm:$0xff]
  %v3750 = vld [vmem:[%s1692 + $0x2b0] sm:$0xff]
  %v3751 = vld [vmem:[%s1692 + $0x2b8] sm:$0xff]
  %v3758 = vrot.slane %v3658, 6
  %v3759 = vrot.slane %v2004, 6
  %v3760 = vsel %vm1787, %v3758, %v3759
  %v3761 = vrot.slane %v3659, 6
  %v3762 = vrot.slane %v2005, 6
  %v3763 = vsel %vm1787, %v3761, %v3762
  %v3764 = vrot.slane %v3660, 6
  %v3765 = vrot.slane %v2006, 6
  %v3766 = vsel %vm1787, %v3764, %v3765
  %v3767 = vrot.slane %v3661, 6
  %v3768 = vsel %vm1787, %v3759, %v3767
  %v3769 = vrot.slane %v3662, 6
  %v3770 = vsel %vm1787, %v3762, %v3769
  %v3771 = vrot.slane %v3663, 6
  %v3772 = vsel %vm1787, %v3765, %v3771
  %v3777 = vsel %vm236, %v3766, 0
  %v3779 = vsel %vm236, %v3772, 0
  %3781 = vmatprep.subr.mxu0 %v3695
  %3782 = vmatpush1.msra.mxu0 %v3694
  %3783 = vmatprep.subr.mxu0 %v3693
  %3784 = vmatpush1.msra.mxu0 %v3692
  %3785 = vmatprep.subr.mxu0 %v3691
  %3786 = vmatpush1.msra.mxu0 %v3690
  %3787 = vmatprep.subr.mxu0 %v3689
  %3788 = vmatpush1.msra.mxu0 %v3688
  %3789 = vmatprep.subr.mxu0 %v3687
  %3790 = vmatpush1.msra.mxu0 %v3686
  %3791 = vmatprep.subr.mxu0 %v3685
  %3792 = vmatpush1.msra.mxu0 %v3684
  %3793 = vmatprep.subr.mxu0 %v3683
  %3794 = vmatpush1.msra.mxu0 %v3682
  %3795 = vmatprep.subr.mxu0 %v3681
  %3796 = vmatpush1.msra.mxu0 %v3680
  %3797 = vmatprep.subr.mxu0 %v3679
  %3798 = vmatpush1.msra.mxu0 %v3678
  %3799 = vmatprep.subr.mxu0 %v3677
  %3800 = vmatpush1.msra.mxu0 %v3676
  %3801 = vmatprep.subr.mxu0 %v3675
  %3802 = vmatpush1.msra.mxu0 %v3674
  %3803 = vmatprep.subr.mxu0 %v3673
  %3804 = vmatpush1.msra.mxu0 %v3672
  %3805 = vmatprep.subr.mxu0 %v3671
  %3806 = vmatpush1.msra.mxu0 %v3670
  %3807 = vmatprep.subr.mxu0 %v3669
  %3808 = vmatpush1.msra.mxu0 %v3668
  %3809 = vmatprep.subr.mxu0 %v3667
  %3810 = vmatpush1.msra.mxu0 %v3666
  %3811 = vmatprep.subr.mxu0 %v3665
  %3812 = vmatpush1.msra.mxu0 %v3664
  %3813 = vmatprep.subr.mxu0 %v3727
  %3814 = vmatpush2.msra.mxu0 %v3726
  %3815 = vmatprep.subr.mxu0 %v3725
  %3816 = vmatpush2.msra.mxu0 %v3724
  %3817 = vmatprep.subr.mxu0 %v3723
  %3818 = vmatpush2.msra.mxu0 %v3722
  %3819 = vmatprep.subr.mxu0 %v3721
  %3820 = vmatpush2.msra.mxu0 %v3720
  %3821 = vmatprep.subr.mxu0 %v3719
  %3822 = vmatpush2.msra.mxu0 %v3718
  %3823 = vmatprep.subr.mxu0 %v3717
  %3824 = vmatpush2.msra.mxu0 %v3716
  %3825 = vmatprep.subr.mxu0 %v3715
  %3826 = vmatpush2.msra.mxu0 %v3714
  %3827 = vmatprep.subr.mxu0 %v3713
  %3828 = vmatpush2.msra.mxu0 %v3712
  %3829 = vmatprep.subr.mxu0 %v3711
  %3830 = vmatpush2.msra.mxu0 %v3710
  %3831 = vmatprep.subr.mxu0 %v3709
  %3832 = vmatpush2.msra.mxu0 %v3708
  %3833 = vmatprep.subr.mxu0 %v3707
  %3834 = vmatpush2.msra.mxu0 %v3706
  %3835 = vmatprep.subr.mxu0 %v3705
  %3836 = vmatpush2.msra.mxu0 %v3704
  %3837 = vmatprep.subr.mxu0 %v3703
  %3838 = vmatpush2.msra.mxu0 %v3702
  %3839 = vmatprep.subr.mxu0 %v3701
  %3840 = vmatpush2.msra.mxu0 %v3700
  %3841 = vmatprep.subr.mxu0 %v3699
  %3842 = vmatpush2.msra.mxu0 %v3698
  %3843 = vmatprep.subr.mxu0 %v3697
  %3844 = vmatpush2.msra.mxu0 %v3696
  %3845 = vmatprep.mubr.f32.mxu0 %v3763
  %3846 = vmatmul.mubr.f32.gmra.mxu0 %v3760
  %v3847 = vpop.f32.mrf.mxu0
  %v3848 = vadd.f32 0.0, %v3847
  %v3849 = vpop.f32.mrf.mxu0
  %v3850 = vadd.f32 0.0, %v3849
  %3851 = vmatprep.mubr.f32.mxu0 %v3770
  %3852 = vmatmul.mubr.f32.gmra.mxu0 %v3768
  %v3853 = vpop.f32.mrf.mxu0
  %v3854 = vadd.f32 0.0, %v3853
  %v3855 = vpop.f32.mrf.mxu0
  %v3856 = vadd.f32 0.0, %v3855
  %3857 = vdwg.mxu0
  %3858 = vmatprep.subr.mxu0 0.0
  %3859 = vmatpush1.msra.mxu0 0.0
  %3860 = vmatprep.subr.mxu0 0.0
  %3861 = vmatpush1.msra.mxu0 0.0
  %3862 = vmatprep.subr.mxu0 0.0
  %3863 = vmatpush1.msra.mxu0 0.0
  %3864 = vmatprep.subr.mxu0 0.0
  %3865 = vmatpush1.msra.mxu0 0.0
  %3866 = vmatprep.subr.mxu0 %v3751
  %3867 = vmatpush1.msra.mxu0 %v3750
  %3868 = vmatprep.subr.mxu0 %v3749
  %3869 = vmatpush1.msra.mxu0 %v3748
  %3870 = vmatprep.subr.mxu0 %v3747
  %3871 = vmatpush1.msra.mxu0 %v3746
  %3872 = vmatprep.subr.mxu0 %v3745
  %3873 = vmatpush1.msra.mxu0 %v3744
  %3874 = vmatprep.subr.mxu0 %v3743
  %3875 = vmatpush1.msra.mxu0 %v3742
  %3876 = vmatprep.subr.mxu0 %v3741
  %3877 = vmatpush1.msra.mxu0 %v3740
  %3878 = vmatprep.subr.mxu0 %v3739
  %3879 = vmatpush1.msra.mxu0 %v3738
  %3880 = vmatprep.subr.mxu0 %v3737
  %3881 = vmatpush1.msra.mxu0 %v3736
  %3882 = vmatprep.subr.mxu0 %v3735
  %3883 = vmatpush1.msra.mxu0 %v3734
  %3884 = vmatprep.subr.mxu0 %v3733
  %3885 = vmatpush1.msra.mxu0 %v3732
  %3886 = vmatprep.subr.mxu0 %v3731
  %3887 = vmatpush1.msra.mxu0 %v3730
  %3888 = vmatprep.subr.mxu0 %v3729
  %3889 = vmatpush1.msra.mxu0 %v3728
  %3890 = vmatprep.subr.mxu0 0.0
  %3891 = vmatpush2.msra.mxu0 0.0
  %3892 = vmatprep.subr.mxu0 0.0
  %3893 = vmatpush2.msra.mxu0 0.0
  %3894 = vmatprep.subr.mxu0 0.0
  %3895 = vmatpush2.msra.mxu0 0.0
  %3896 = vmatprep.subr.mxu0 0.0
  %3897 = vmatpush2.msra.mxu0 0.0
  %3898 = vmatprep.subr.mxu0 0.0
  %3899 = vmatpush2.msra.mxu0 0.0
  %3900 = vmatprep.subr.mxu0 0.0
  %3901 = vmatpush2.msra.mxu0 0.0
  %3902 = vmatprep.subr.mxu0 0.0
  %3903 = vmatpush2.msra.mxu0 0.0
  %3904 = vmatprep.subr.mxu0 0.0
  %3905 = vmatpush2.msra.mxu0 0.0
  %3906 = vmatprep.subr.mxu0 0.0
  %3907 = vmatpush2.msra.mxu0 0.0
  %3908 = vmatprep.subr.mxu0 0.0
  %3909 = vmatpush2.msra.mxu0 0.0
  %3910 = vmatprep.subr.mxu0 0.0
  %3911 = vmatpush2.msra.mxu0 0.0
  %3912 = vmatprep.subr.mxu0 0.0
  %3913 = vmatpush2.msra.mxu0 0.0
  %3914 = vmatprep.subr.mxu0 0.0
  %3915 = vmatpush2.msra.mxu0 0.0
  %3916 = vmatprep.subr.mxu0 0.0
  %3917 = vmatpush2.msra.mxu0 0.0
  %3918 = vmatprep.subr.mxu0 0.0
  %3919 = vmatpush2.msra.mxu0 0.0
  %3920 = vmatprep.subr.mxu0 0.0
  %3921 = vmatpush2.msra.mxu0 0.0
  %3922 = vmatprep.mubr.f32.mxu0 0.0
  %3923 = vmatmul.mubr.f32.gmra.mxu0 %v3777
  %v3924 = vpop.f32.mrf.mxu0
  %v3925 = vadd.f32 %v3848, %v3924
  %v3926 = vpop.f32.mrf.mxu0
  %v3927 = vadd.f32 %v3850, %v3926
  %3928 = vmatprep.mubr.f32.mxu0 0.0
  %3929 = vmatmul.mubr.f32.gmra.mxu0 %v3779
  %v3930 = vpop.f32.mrf.mxu0
  %v3931 = vadd.f32 %v3854, %v3930
  %v3932 = vpop.f32.mrf.mxu0
  %v3933 = vadd.f32 %v3856, %v3932
  %3934 = vdwg.mxu0
  %v3935 = vadd.f32 %v3654, %v3925
  %v3936 = vadd.f32 %v3655, %v3927
  %v3937 = vadd.f32 %v3656, %v3931
  %v3938 = vadd.f32 %v3657, %v3933
  %v3939 = vadd.f32 %v3935, %v1973
  %v3940 = vadd.f32 %v3936, %v1977
  %v3941 = vadd.f32 %v3937, %v1973
  %v3942 = vadd.f32 %v3938, %v1977
  %s3943 = scalar_lea.vmem %s3, 32
  %v3944 = vld [vmem:[%s3943] sm:$0xff]
  %v3945 = vld [vmem:[%s3943 + $0x8] sm:$0xff]
  %v3946 = vld [vmem:[%s3943 + $0x10] sm:$0xff]
  %v3947 = vld [vmem:[%s3943 + $0x18] sm:$0xff]
  %v3948 = vadd.f32 %v3939, %v3944
  %v3949 = vadd.f32 %v3940, %v3945
  %v3950 = vadd.f32 %v3941, %v3946
  %v3951 = vadd.f32 %v3942, %v3947
  %v3952 = vmax.f32 %v3948, 0.0
  %v3953 = vmax.f32 %v3949, 0.0
  %v3954 = vmax.f32 %v3950, 0.0
  %v3955 = vmax.f32 %v3951, 0.0
  %s3956 = scalar_lea.vmem %s4, 32
  %3957 = vst [vmem:[%s3956] sm:$0xff] %v3952
  %3958 = vst [vmem:[%s3956 + $0x8] sm:$0xff] %v3953
  %3959 = vst [vmem:[%s3956 + $0x10] sm:$0xff] %v3954
  %3960 = vst [vmem:[%s3956 + $0x18] sm:$0xff] %v3955
  // Predicated region
  $region18: #{model_forward.1} parent=0 // pred_check
    _
  $region19: #{model_forward.1} parent=0 // pred_check_branch
    %3962 = sbr.rel (0) target = $region21
  $region20: #{model_forward.1} parent=0 // pred_region
    _
  $region21: #{model_forward.1} parent=0 // pred_fallthru
    _
  // Predicated region
  $region22: #{model_forward.1} parent=0 // pred_check
    _
  $region23: #{model_forward.1} parent=0 // pred_check_branch
    %3964 = sbr.rel (0) target = $region25
  $region24: #{model_forward.1} parent=0 // pred_region
    _
  $region25: #{model_forward.1} parent=0 // pred_fallthru
    _

</llo_original>
